<compile_context>
chip_gen: v7x
topology: tpu7x:2x2x1
jax: 0.10.0
libtpu: 0.0.40
codegen_flags: <defaults>
</compile_context>

<pallas_src>
import jax
import jax.numpy as jnp
from jax.experimental import pallas as pl
from jax.experimental.pallas import tpu as pltpu

# ------------------ configuration (mirrors HeteroGraphSAGE.__init__) ------------------
NODE_TYPES = ["show", "actor", "genre", "network", "creator"]
TYPE_ID = {nt: i for i, nt in enumerate(NODE_TYPES)}
NUM_TYPES = len(NODE_TYPES)

# Relations ordered so that (a) relations sharing a destination type are consecutive (the in-place
# HeteroConv 'sum' accumulation) and (b) within each destination group the source type is also
# consecutive, so the whole-type source block is only re-fetched when it actually changes.
EDGE_ORDER = [
    ("actor", "acted_with", "actor"),
    ("show",  "has_actor",  "actor"),
    ("show",  "has_genre",  "genre"),
    ("show",  "on_network", "network"),
    ("show",  "created_by", "creator"),
    ("show",  "similar_to", "show"),
]
NUM_REL = len(EDGE_ORDER)

HIDDEN = 128                      # lane-dense hidden size (module default 512; any multiple of 128)
NUM_LAYERS = 3
HEADS = 8
HEAD_DIM = HIDDEN // HEADS
VOCAB = 10000
LN_EPS = 1e-5

N_PAD = 16                        # all node types padded to this many rows
BLK_D = 8                         # destination-node block; N_PAD/BLK_D = 2 -> parallel axis extent 2
NB = N_PAD // BLK_D
AW = 128                          # attention lane width: lanes 0..HEADS*BLK_D-1 = (head, dst-slot)
ACT = HEADS * BLK_D               # active attention lanes (the rest are masked pad lanes)
W_SRC_COLS = HIDDEN + AW          # [ lin | lane-expanded src attention logits ] augmented weight
GELU_C = 0.7978845608028654


# ----------------------------------- Pallas kernels -----------------------------------
def make_layer_kernel(final):
    """One grid step = one (dst-node block, relation) pair.

    Logit layout is (n_src, AW): the 128-wide (head, dst-slot) axis is on lanes, the source axis on
    sublanes, so the LeakyReLU/mask/exp/normalize chain is lane-dense and softmax reduces over
    sublanes.  `final=True` additionally applies the per-type output Linear inside the epilogue.
    """

    def kernel(srcid_ref, dstid_ref, first_ref, last_ref,
               xsrc_ref, xdst_ref, adjm_ref, wsrc_ref, wdst_ref,
               bias_ref, gamma_ref, beta_ref, dm_ref, hm_ref, *rest):
        if final:
            ow_ref, ob_ref, out_ref = rest
        else:
            (out_ref,) = rest

        r = pl.program_id(1)

        @pl.when(first_ref[r] == 1)
        def _init():
            out_ref[...] = jnp.zeros_like(out_ref)

        # ------------- GATConv(HIDDEN -> HIDDEN//HEADS, heads=HEADS, concat=True) -------------
        xsrc = xsrc_ref[...]                                   # (ns, H) bf16 (cast once on host)
        xdst = xdst_ref[...]                                   # (bd, H) f32  (residual / LN path)

        # One augmented src projection against the resident per-relation weight:
        #   cols [0:H]    = lin(x_src)
        #   cols [H:H+AW] = per-(head, dst-slot) source attention logit, already lane-expanded.
        proj = jnp.dot(xsrc, wsrc_ref[r], preferred_element_type=jnp.float32)      # (ns, H+AW)
        xs_p = proj[:, :HIDDEN]                                                     # (ns, H)
        e_src = proj[:, HIDDEN:]                                                    # (ns, AW)

        # dst logits: t[d, h*BLK_D+d'] = <x_dst[d], att_dst[h]>; select the diagonal d'==d with a
        # constant mask and fold to one (1, AW) row with a sublane reduction.
        t = jnp.dot(xdst.astype(jnp.bfloat16), wdst_ref[r],
                    preferred_element_type=jnp.float32)                             # (bd, AW)
        e_dst = jnp.sum(t * dm_ref[...], axis=0, keepdims=True)                     # (1, AW)

        e = e_src + e_dst
        e = jnp.where(e > 0.0, e, 0.2 * e)                     # LeakyReLU(0.2)
        mask = adjm_ref[...]                                   # (ns, AW): 1 on edges, 0 elsewhere/pad
        e = e + (mask - 1.0) * 1e30                            # additive non-edge mask
        m = jnp.max(e, axis=0, keepdims=True)
        p = jnp.exp(e - m) * mask                              # zero non-edges / empty columns
        den = jnp.sum(p, axis=0, keepdims=True)
        attn = p * pl.reciprocal(jnp.where(den > 0.0, den, 1.0), approx=True)       # softmax over in-edges
        # (attention dropout is identity in eval mode)

        # All-head aggregation: contract the source (sublane) axis on the MXU, then fold each
        # (head, dst-slot) row onto its head's column slice with one mask-mul + reshape-sum.
        z = jax.lax.dot_general(attn[:, :ACT].astype(jnp.bfloat16),
                                xs_p.astype(jnp.bfloat16),
                                dimension_numbers=(((0,), (0,)), ((), ())),
                                preferred_element_type=jnp.float32)                 # (ACT, H)
        conv = (z * hm_ref[...]).reshape(HEADS, BLK_D, HIDDEN).sum(axis=0)          # (bd, H)
        out_ref[...] += conv                                   # HeteroConv(aggr='sum')

        # ----- residual + LayerNorm + Dropout(id, eval) + GELU epilogue (+ output Linear) -----
        @pl.when(last_ref[r] == 1)
        def _finalize():
            x = out_ref[...] + bias_ref[...] + xdst            # summed GATConv biases + residual
            mu = jnp.mean(x, axis=1, keepdims=True)
            var = jnp.mean(jnp.square(x - mu), axis=1, keepdims=True)
            y = (x - mu) * jax.lax.rsqrt(var + LN_EPS) * gamma_ref[...] + beta_ref[...]
            # TODO(synk): tanh-approx GELU; PyTorch F.gelu defaults to the exact erf form (~1e-3 abs dev).
            g = 0.5 * y * (1.0 + jnp.tanh(GELU_C * (y + 0.044715 * y * y * y)))
            if final:  # per-node-type output Linear folded into the last layer's epilogue
                g = jnp.dot(g.astype(jnp.bfloat16), ow_ref[...],
                            preferred_element_type=jnp.float32) + ob_ref[...]
            out_ref[...] = g

    return kernel


# -------------------------------- pallas_call wrapper ----------------------------------
def hetero_layer(x_all, adjm, meta, lp, consts, *, final=False, out_w=None, out_b=None):
    t, n, h = x_all.shape
    nb = n // BLK_D
    x_bf = x_all.astype(jnp.bfloat16)      # bf16 matmul operand; f32 copy feeds residual/LayerNorm

    def xsrc_map(i, r, srcid, dstid, first, last):
        return (srcid[r], 0, 0)

    def xdst_map(i, r, srcid, dstid, first, last):
        return (dstid[r], i, 0)

    def dstp_map(i, r, srcid, dstid, first, last):
        return (dstid[r], 0, 0)

    def adj_map(i, r, *_):
        return (r, i, 0, 0)

    def res3(i, r, *_):                    # resident: index never changes -> fetched once per call
        return (0, 0, 0)

    def res2(i, r, *_):
        return (0, 0)

    in_specs = [
        pl.BlockSpec((None, n, h), xsrc_map),                 # source features, bf16, whole type
        pl.BlockSpec((None, BLK_D, h), xdst_map),             # destination features, f32
        pl.BlockSpec((None, None, n, AW), adj_map),           # transposed + head-replicated adjacency
        pl.BlockSpec((NUM_REL, h, W_SRC_COLS), res3),         # resident augmented src weight stack (bf16)
        pl.BlockSpec((NUM_REL, h, AW), res3),                 # resident dst-attention weight stack (bf16)
        pl.BlockSpec((None, 1, h), dstp_map),                 # summed GATConv biases per dst type
        pl.BlockSpec((None, 1, h), dstp_map),                 # LayerNorm gamma per dst type
        pl.BlockSpec((None, 1, h), dstp_map),                 # LayerNorm beta per dst type
        pl.BlockSpec((BLK_D, AW), res2),                      # diagonal dst-slot selector (const)
        pl.BlockSpec((ACT, h), res2),                         # head-column fold mask (const)
    ]
    args = [x_bf, x_all, adjm, lp["w_src"], lp["w_dst"],
            lp["bias_sum"], lp["gamma"], lp["beta"], consts["dm"], consts["hm"]]
    if final:
        in_specs += [pl.BlockSpec((None, h, h), dstp_map),    # per-type output Linear weight (bf16)
                     pl.BlockSpec((None, 1, h), dstp_map)]    # per-type output Linear bias (f32)
        args += [out_w, out_b]

    return pl.pallas_call(
        make_layer_kernel(final),
        out_shape=jax.ShapeDtypeStruct((t, n, h), jnp.float32),
        grid_spec=pltpu.PrefetchScalarGridSpec(
            num_scalar_prefetch=4,
            grid=(nb, NUM_REL),
            in_specs=in_specs,
            out_specs=pl.BlockSpec((None, BLK_D, h), xdst_map),
        ),
        compiler_params=pltpu.CompilerParams(
            dimension_semantics=("parallel", "arbitrary")),
    )(meta["srcid"], meta["dstid"], meta["first"], meta["last"], *args)


# ------------------------------------ parameters ---------------------------------------
def init_params(key):
    keys = iter(jax.random.split(key, 512))

    def nrm(shape, scale=0.05):
        return scale * jax.random.normal(next(keys), shape, jnp.float32)

    def lane_expand(wm):
        # (H, HEADS) -> (H, AW): column h*BLK_D+d' carries head h's logit weight; pad lanes zero.
        return jnp.pad(jnp.repeat(wm, BLK_D, axis=1), ((0, 0), (0, AW - ACT)))

    # nn.Embedding(10000, hidden) per node type (lookup is plain-JAX glue)
    params = {"emb": {nt: nrm((VOCAB, HIDDEN), 0.02) for nt in NODE_TYPES}}

    layers = []
    for _ in range(NUM_LAYERS):
        w_src, w_dst = [], []
        bias_sum = jnp.zeros((NUM_TYPES, 1, HIDDEN), jnp.float32)
        for (_, _, d) in EDGE_ORDER:
            w = nrm((HIDDEN, HIDDEN))                          # shared GATConv.lin (bias=False), x @ W
            att_src = nrm((HEADS, HEAD_DIM))
            att_dst = nrm((HEADS, HEAD_DIM))
            w3 = w.reshape(HIDDEN, HEADS, HEAD_DIM)
            wm_src = jnp.einsum("khc,hc->kh", w3, att_src)     # fold attention vectors into the proj
            wm_dst = jnp.einsum("khc,hc->kh", w3, att_dst)
            w_src.append(jnp.concatenate([w, lane_expand(wm_src)], axis=1))   # (H, H+AW)
            w_dst.append(lane_expand(wm_dst))                                  # (H, AW)
            # HeteroConv(aggr='sum') sums per-relation outputs, so per-dst-type biases add up
            bias_sum = bias_sum.at[TYPE_ID[d], 0].add(nrm((HIDDEN,), 0.01))
        layers.append(dict(
            w_src=jnp.stack(w_src, 0).astype(jnp.bfloat16),     # (R, H, H+AW)  VMEM-resident
            w_dst=jnp.stack(w_dst, 0).astype(jnp.bfloat16),     # (R, H, AW)    VMEM-resident
            bias_sum=bias_sum,                                  # (T, 1, H)
            gamma=jnp.ones((NUM_TYPES, 1, HIDDEN), jnp.float32),
            beta=jnp.zeros((NUM_TYPES, 1, HIDDEN), jnp.float32),
        ))
    params["layers"] = layers

    # output projections (Linear hidden -> hidden) per node type
    params["out_w"] = jnp.stack([nrm((HIDDEN, HIDDEN)) for _ in NODE_TYPES], 0).astype(jnp.bfloat16)
    params["out_b"] = jnp.stack([nrm((1, HIDDEN), 0.01) for _ in NODE_TYPES], 0)

    # constants shared by every fused layer call
    lane = jnp.arange(AW)
    dm = (((lane[None, :] % BLK_D) == jnp.arange(BLK_D)[:, None])
          & (lane[None, :] < ACT)).astype(jnp.float32)                           # (BLK_D, AW)
    hm = ((jnp.arange(ACT)[:, None] // BLK_D)
          == (jnp.arange(HIDDEN)[None, :] // HEAD_DIM)).astype(jnp.float32)      # (ACT, HIDDEN)
    return params, dict(dm=dm, hm=hm)


def make_meta():
    srcid = [TYPE_ID[s] for (s, _, _) in EDGE_ORDER]
    dstid = [TYPE_ID[d] for (_, _, d) in EDGE_ORDER]
    first = [int(j == 0 or dstid[j] != dstid[j - 1]) for j in range(NUM_REL)]
    last = [int(j == NUM_REL - 1 or dstid[j] != dstid[j + 1]) for j in range(NUM_REL)]
    return dict(srcid=jnp.array(srcid, jnp.int32), dstid=jnp.array(dstid, jnp.int32),
                first=jnp.array(first, jnp.int32), last=jnp.array(last, jnp.int32))


# ---------------------------------- graph utilities ------------------------------------
def make_adj(key, n_src, n_dst, n_edges, n_pad):
    """edge_index -> dense (dst, src) 0/1 adjacency (glue), padded, with GATConv
    add_self_loops semantics: self loop (i, i) for i < min(N_src, N_dst)."""
    ks, kd = jax.random.split(key)
    src = jax.random.randint(ks, (n_edges,), 0, n_src)
    dst = jax.random.randint(kd, (n_edges,), 0, n_dst)
    adj = jnp.zeros((n_pad, n_pad), jnp.float32).at[dst, src].set(1.0)
    diag = jnp.arange(min(n_src, n_dst))
    return adj.at[diag, diag].set(1.0)


def expand_adj(adj):
    """(N_PAD dst, N_PAD src) -> (NB, N_PAD src, AW) kernel-layout mask with
    [i, s, h*BLK_D + d] = adj[i*BLK_D + d, s] (heads replicated on lanes, pad lanes zero).
    Precomputed on the host so the kernel never performs replication copies."""
    a = adj.reshape(NB, BLK_D, N_PAD)
    a = jnp.transpose(a, (0, 2, 1))
    a = jnp.tile(a, (1, 1, HEADS))
    return jnp.pad(a, ((0, 0), (0, 0), (0, AW - ACT)))


# ------------------------------------- forward -----------------------------------------
def forward(params, consts, x_idx_dict, adjm, meta):
    # integer node ids -> embeddings (nn.Embedding lookup; plain-JAX glue), padded + stacked
    feats = []
    for nt in NODE_TYPES:
        e = params["emb"][nt][x_idx_dict[nt]]
        feats.append(jnp.pad(e, ((0, N_PAD - e.shape[0]), (0, 0))))
    x_all = jnp.stack(feats, axis=0)                     # (T, N_PAD, HIDDEN) f32

    n_layers = len(params["layers"])
    for li, lp in enumerate(params["layers"]):
        final = li == n_layers - 1
        x_all = hetero_layer(x_all, adjm, meta, lp, consts, final=final,
                             out_w=params["out_w"] if final else None,
                             out_b=params["out_b"] if final else None)
    # final layer epilogue already applied the per-type output Linear
    return x_all                                          # (T, N_PAD, HIDDEN)


# --------------------------------------- main ------------------------------------------
if __name__ == "__main__":
    key = jax.random.PRNGKey(0)
    kp, kg = jax.random.split(key)
    params, consts = init_params(kp)

    num_nodes = {"show": 16, "actor": 16, "genre": 8, "network": 8, "creator": 8}
    # integer node ids -> triggers the embedding path of the reference forward
    x_idx_dict = {nt: jnp.arange(n, dtype=jnp.int32) for nt, n in num_nodes.items()}

    gkeys = jax.random.split(kg, NUM_REL)
    adjs = [make_adj(k, num_nodes[s], num_nodes[d], 3 * max(num_nodes[s], num_nodes[d]), N_PAD)
            for k, (s, _, d) in zip(gkeys, EDGE_ORDER)]
    adjm = jnp.stack([expand_adj(a) for a in adjs], axis=0)      # (R, NB, N_PAD, AW) f32
    meta = make_meta()

    out_all = jax.block_until_ready(jax.jit(forward)(params, consts, x_idx_dict, adjm, meta))

    out = {nt: out_all[TYPE_ID[nt], :num_nodes[nt]] for nt in NODE_TYPES}
    assert set(out.keys()) == set(NODE_TYPES)
    for nt, v in out.items():
        assert v.shape == (num_nodes[nt], HIDDEN), (nt, v.shape)
        assert bool(jnp.all(jnp.isfinite(v)))
    print("KERNEL_OK")
</pallas_src>

<mosaic_0001>
module attributes {stable_mosaic.version = 11 : i64} {
  func.func @kernel(%arg0: i32, %arg1: i32, %arg2: memref<6xi32, #tpu.memory_space<smem>>, %arg3: memref<6xi32, #tpu.memory_space<smem>>, %arg4: memref<6xi32, #tpu.memory_space<smem>>, %arg5: memref<6xi32, #tpu.memory_space<smem>>, %arg6: memref<1x16x128xbf16, #tpu.memory_space<vmem>>, %arg7: memref<1x8x128xf32, #tpu.memory_space<vmem>>, %arg8: memref<1x1x16x128xf32, #tpu.memory_space<vmem>>, %arg9: memref<6x128x256xbf16, #tpu.memory_space<vmem>>, %arg10: memref<6x128x128xbf16, #tpu.memory_space<vmem>>, %arg11: memref<1x1x128xf32, #tpu.memory_space<vmem>>, %arg12: memref<1x1x128xf32, #tpu.memory_space<vmem>>, %arg13: memref<1x1x128xf32, #tpu.memory_space<vmem>>, %arg14: memref<8x128xf32, #tpu.memory_space<vmem>>, %arg15: memref<64x128xf32, #tpu.memory_space<vmem>>, %arg16: memref<1x8x128xf32, #tpu.memory_space<vmem>>) attributes {dimension_semantics = [#tpu.dimension_semantics<parallel>, #tpu.dimension_semantics<arbitrary>], iteration_bounds = array<i64: 2, 6>, scalar_prefetch = 4 : i64, scratch_operands = 0 : i64, tpu.core_type = #tpu.core_type<tc>, window_params = [{transform_indices = @transform_0, window_bounds = array<i64: 1, 16, 128>}, {transform_indices = @transform_1, window_bounds = array<i64: 1, 8, 128>}, {transform_indices = @transform_2, window_bounds = array<i64: 1, 1, 16, 128>}, {pipeline_mode = #tpu.pipeline_mode<synchronous>, transform_indices = @transform_3, window_bounds = array<i64: 6, 128, 256>}, {pipeline_mode = #tpu.pipeline_mode<synchronous>, transform_indices = @transform_4, window_bounds = array<i64: 6, 128, 128>}, {transform_indices = @transform_5, window_bounds = array<i64: 1, 1, 128>}, {transform_indices = @transform_6, window_bounds = array<i64: 1, 1, 128>}, {transform_indices = @transform_7, window_bounds = array<i64: 1, 1, 128>}, {pipeline_mode = #tpu.pipeline_mode<synchronous>, transform_indices = @transform_8, window_bounds = array<i64: 8, 128>}, {pipeline_mode = #tpu.pipeline_mode<synchronous>, transform_indices = @transform_9, window_bounds = array<i64: 64, 128>}, {transform_indices = @transform_10, window_bounds = array<i64: 1, 8, 128>}]} {
    %0 = arith.index_cast %arg1 : i32 to index
    %1 = memref.load %arg4[%0] : memref<6xi32, #tpu.memory_space<smem>>
    %c1_i32 = arith.constant 1 : i32
    %2 = arith.cmpi eq, %1, %c1_i32 : i32
    %3 = arith.extui %2 : i1 to i32
    %c0_i32 = arith.constant 0 : i32
    %4 = arith.cmpi ne, %3, %c0_i32 : i32
    scf.if %4 {
      %cst_37 = arith.constant 0.000000e+00 : f32
      %72 = vector.broadcast %cst_37 : f32 to vector<8x128xf32>
      %c0_38 = arith.constant 0 : index
      %c0_39 = arith.constant 0 : index
      %c0_40 = arith.constant 0 : index
      %73 = vector.load %arg16[%c0_38, %c0_39, %c0_40] : memref<1x8x128xf32, #tpu.memory_space<vmem>>, vector<1x8x128xf32>
      %74 = vector.shape_cast %73 : vector<1x8x128xf32> to vector<8x128xf32>
      %75 = vector.shape_cast %72 : vector<8x128xf32> to vector<1x8x128xf32>
      tpu.vector_store %arg16[%c0_38, %c0_39, %c0_40], %75 {strides = array<i32>} : memref<1x8x128xf32, #tpu.memory_space<vmem>>, vector<1x8x128xf32>,
    } else {
    }
    %c0 = arith.constant 0 : index
    %c0_0 = arith.constant 0 : index
    %c0_1 = arith.constant 0 : index
    %5 = vector.load %arg6[%c0, %c0_0, %c0_1] : memref<1x16x128xbf16, #tpu.memory_space<vmem>>, vector<1x16x128xbf16>
    %6 = vector.shape_cast %5 : vector<1x16x128xbf16> to vector<16x128xbf16>
    %c0_2 = arith.constant 0 : index
    %c0_3 = arith.constant 0 : index
    %c0_4 = arith.constant 0 : index
    %7 = vector.load %arg7[%c0_2, %c0_3, %c0_4] : memref<1x8x128xf32, #tpu.memory_space<vmem>>, vector<1x8x128xf32>
    %8 = vector.shape_cast %7 : vector<1x8x128xf32> to vector<8x128xf32>
    %9 = arith.index_cast %arg1 : i32 to index
    %c0_5 = arith.constant 0 : index
    %c0_6 = arith.constant 0 : index
    %10 = vector.load %arg9[%9, %c0_5, %c0_6] : memref<6x128x256xbf16, #tpu.memory_space<vmem>>, vector<1x128x256xbf16>
    %11 = vector.shape_cast %10 : vector<1x128x256xbf16> to vector<128x256xbf16>
    %cst = arith.constant dense<0.000000e+00> : vector<16x256xf32>
    %12 = tpu.matmul %6, %11, %cst {dimension_numbers = #tpu.dot_dimension_numbers<[1], [0], [0], [1], [0, 0, 1, 1], [], []>} : vector<16x128xbf16>, vector<128x256xbf16>, vector<16x256xf32> -> vector<16x256xf32>
    %13 = vector.extract_strided_slice %12 {offsets = [0, 0], sizes = [16, 128], strides = [1, 1]} : vector<16x256xf32> to vector<16x128xf32>
    %14 = vector.extract_strided_slice %12 {offsets = [0, 128], sizes = [16, 128], strides = [1, 1]} : vector<16x256xf32> to vector<16x128xf32>
    %15 = arith.truncf %8 : vector<8x128xf32> to vector<8x128xbf16>
    %16 = arith.index_cast %arg1 : i32 to index
    %c0_7 = arith.constant 0 : index
    %c0_8 = arith.constant 0 : index
    %17 = vector.load %arg10[%16, %c0_7, %c0_8] : memref<6x128x128xbf16, #tpu.memory_space<vmem>>, vector<1x128x128xbf16>
    %18 = vector.shape_cast %17 : vector<1x128x128xbf16> to vector<128x128xbf16>
    %cst_9 = arith.constant dense<0.000000e+00> : vector<8x128xf32>
    %19 = tpu.matmul %15, %18, %cst_9 {dimension_numbers = #tpu.dot_dimension_numbers<[1], [0], [0], [1], [0, 0, 1, 1], [], []>} : vector<8x128xbf16>, vector<128x128xbf16>, vector<8x128xf32> -> vector<8x128xf32>
    %c0_10 = arith.constant 0 : index
    %c0_11 = arith.constant 0 : index
    %20 = vector.load %arg14[%c0_10, %c0_11] : memref<8x128xf32, #tpu.memory_space<vmem>>, vector<8x128xf32>
    %21 = arith.mulf %19, %20 : vector<8x128xf32>
    %cst_12 = arith.constant dense<0.000000e+00> : vector<128xf32>
    %22 = vector.multi_reduction <add>, %21, %cst_12 [0] : vector<8x128xf32> to vector<128xf32>
    %23 = vector.shape_cast %22 : vector<128xf32> to vector<1x128xf32>
    %24 = vector.broadcast %23 : vector<1x128xf32> to vector<16x128xf32>
    %25 = arith.addf %14, %24 : vector<16x128xf32>
    %cst_13 = arith.constant 0.000000e+00 : f32
    %26 = vector.broadcast %cst_13 : f32 to vector<16x128xf32>
    %27 = arith.cmpf ogt, %25, %26 : vector<16x128xf32>
    %cst_14 = arith.constant 2.000000e-01 : f32
    %28 = vector.broadcast %cst_14 : f32 to vector<16x128xf32>
    %29 = arith.mulf %28, %25 : vector<16x128xf32>
    %30 = arith.select %27, %25, %29 : vector<16x128xi1>, vector<16x128xf32>
    %c0_15 = arith.constant 0 : index
    %c0_16 = arith.constant 0 : index
    %c0_17 = arith.constant 0 : index
    %c0_18 = arith.constant 0 : index
    %31 = vector.load %arg8[%c0_15, %c0_16, %c0_17, %c0_18] : memref<1x1x16x128xf32, #tpu.memory_space<vmem>>, vector<1x1x16x128xf32>
    %32 = vector.shape_cast %31 : vector<1x1x16x128xf32> to vector<16x128xf32>
    %cst_19 = arith.constant 1.000000e+00 : f32
    %33 = vector.broadcast %cst_19 : f32 to vector<16x128xf32>
    %34 = arith.subf %32, %33 : vector<16x128xf32>
    %cst_20 = arith.constant 1.000000e+30 : f32
    %35 = vector.broadcast %cst_20 : f32 to vector<16x128xf32>
    %36 = arith.mulf %34, %35 : vector<16x128xf32>
    %37 = arith.addf %30, %36 : vector<16x128xf32>
    %cst_21 = arith.constant dense<0xFF800000> : vector<128xf32>
    %38 = vector.multi_reduction <maximumf>, %37, %cst_21 [0] : vector<16x128xf32> to vector<128xf32>
    %39 = vector.shape_cast %38 : vector<128xf32> to vector<1x128xf32>
    %40 = vector.broadcast %39 : vector<1x128xf32> to vector<16x128xf32>
    %41 = arith.subf %37, %40 : vector<16x128xf32>
    %42 = math.exp %41 : vector<16x128xf32>
    %43 = arith.mulf %42, %32 : vector<16x128xf32>
    %cst_22 = arith.constant dense<0.000000e+00> : vector<128xf32>
    %44 = vector.multi_reduction <add>, %43, %cst_22 [0] : vector<16x128xf32> to vector<128xf32>
    %45 = vector.shape_cast %44 : vector<128xf32> to vector<1x128xf32>
    %cst_23 = arith.constant 0.000000e+00 : f32
    %46 = vector.broadcast %cst_23 : f32 to vector<1x128xf32>
    %47 = arith.cmpf ogt, %45, %46 : vector<1x128xf32>
    %cst_24 = arith.constant 1.000000e+00 : f32
    %48 = vector.broadcast %cst_24 : f32 to vector<1x128xf32>
    %49 = arith.select %47, %45, %48 : vector<1x128xi1>, vector<1x128xf32>
    %50 = tpu.reciprocal %49 {approx = true} : vector<1x128xf32> -> vector<1x128xf32>
    %51 = vector.broadcast %50 : vector<1x128xf32> to vector<16x128xf32>
    %52 = arith.mulf %43, %51 : vector<16x128xf32>
    %53 = vector.extract_strided_slice %52 {offsets = [0, 0], sizes = [16, 64], strides = [1, 1]} : vector<16x128xf32> to vector<16x64xf32>
    %54 = arith.truncf %53 : vector<16x64xf32> to vector<16x64xbf16>
    %55 = arith.truncf %13 : vector<16x128xf32> to vector<16x128xbf16>
    %cst_25 = arith.constant dense<0.000000e+00> : vector<64x128xf32>
    %56 = tpu.matmul %54, %55, %cst_25 {dimension_numbers = #tpu.dot_dimension_numbers<[0], [0], [1], [1], [0, 1, 1, 1], [], []>} : vector<16x64xbf16>, vector<16x128xbf16>, vector<64x128xf32> -> vector<64x128xf32>
    %c0_26 = arith.constant 0 : index
    %c0_27 = arith.constant 0 : index
    %57 = vector.load %arg15[%c0_26, %c0_27] : memref<64x128xf32, #tpu.memory_space<vmem>>, vector<64x128xf32>
    %58 = arith.mulf %56, %57 : vector<64x128xf32>
    %59 = vector.shape_cast %58 : vector<64x128xf32> to vector<8x8x128xf32>
    %cst_28 = arith.constant dense<0.000000e+00> : vector<8x128xf32>
    %60 = vector.multi_reduction <add>, %59, %cst_28 [0] : vector<8x8x128xf32> to vector<8x128xf32>
    %c0_29 = arith.constant 0 : index
    %c0_30 = arith.constant 0 : index
    %c0_31 = arith.constant 0 : index
    %61 = vector.load %arg16[%c0_29, %c0_30, %c0_31] : memref<1x8x128xf32, #tpu.memory_space<vmem>>, vector<1x8x128xf32>
    %62 = vector.shape_cast %61 : vector<1x8x128xf32> to vector<8x128xf32>
    %63 = arith.addf %62, %60 : vector<8x128xf32>
    %c0_32 = arith.constant 0 : index
    %c0_33 = arith.constant 0 : index
    %c0_34 = arith.constant 0 : index
    %64 = vector.load %arg16[%c0_32, %c0_33, %c0_34] : memref<1x8x128xf32, #tpu.memory_space<vmem>>, vector<1x8x128xf32>
    %65 = vector.shape_cast %64 : vector<1x8x128xf32> to vector<8x128xf32>
    %66 = vector.shape_cast %63 : vector<8x128xf32> to vector<1x8x128xf32>
    tpu.vector_store %arg16[%c0_32, %c0_33, %c0_34], %66 {strides = array<i32>} : memref<1x8x128xf32, #tpu.memory_space<vmem>>, vector<1x8x128xf32>,
    %67 = arith.index_cast %arg1 : i32 to index
    %68 = memref.load %arg5[%67] : memref<6xi32, #tpu.memory_space<smem>>
    %c1_i32_35 = arith.constant 1 : i32
    %69 = arith.cmpi eq, %68, %c1_i32_35 : i32
    %70 = arith.extui %69 : i1 to i32
    %c0_i32_36 = arith.constant 0 : i32
    %71 = arith.cmpi ne, %70, %c0_i32_36 : i32
    scf.if %71 {
      %c0_37 = arith.constant 0 : index
      %c0_38 = arith.constant 0 : index
      %c0_39 = arith.constant 0 : index
      %72 = vector.load %arg16[%c0_37, %c0_38, %c0_39] : memref<1x8x128xf32, #tpu.memory_space<vmem>>, vector<1x8x128xf32>
      %73 = vector.shape_cast %72 : vector<1x8x128xf32> to vector<8x128xf32>
      %c0_40 = arith.constant 0 : index
      %c0_41 = arith.constant 0 : index
      %c0_42 = arith.constant 0 : index
      %74 = vector.load %arg11[%c0_40, %c0_41, %c0_42] : memref<1x1x128xf32, #tpu.memory_space<vmem>>, vector<1x1x128xf32>
      %75 = vector.shape_cast %74 : vector<1x1x128xf32> to vector<1x128xf32>
      %76 = vector.broadcast %75 : vector<1x128xf32> to vector<8x128xf32>
      %77 = arith.addf %73, %76 : vector<8x128xf32>
      %78 = arith.addf %77, %8 : vector<8x128xf32>
      %cst_43 = arith.constant dense<0.000000e+00> : vector<8xf32>
      %79 = vector.multi_reduction <add>, %78, %cst_43 [1] : vector<8x128xf32> to vector<8xf32>
      %80 = vector.shape_cast %79 : vector<8xf32> to vector<8x1xf32>
      %cst_44 = arith.constant 1.280000e+02 : f32
      %81 = vector.broadcast %cst_44 : f32 to vector<8x1xf32>
      %82 = arith.divf %80, %81 : vector<8x1xf32>
      %83 = vector.broadcast %82 : vector<8x1xf32> to vector<8x128xf32>
      %84 = arith.subf %78, %83 : vector<8x128xf32>
      %85 = arith.mulf %84, %84 : vector<8x128xf32>
      %cst_45 = arith.constant dense<0.000000e+00> : vector<8xf32>
      %86 = vector.multi_reduction <add>, %85, %cst_45 [1] : vector<8x128xf32> to vector<8xf32>
      %87 = vector.shape_cast %86 : vector<8xf32> to vector<8x1xf32>
      %cst_46 = arith.constant 1.280000e+02 : f32
      %88 = vector.broadcast %cst_46 : f32 to vector<8x1xf32>
      %89 = arith.divf %87, %88 : vector<8x1xf32>
      %90 = vector.broadcast %82 : vector<8x1xf32> to vector<8x128xf32>
      %91 = arith.subf %78, %90 : vector<8x128xf32>
      %cst_47 = arith.constant 9.99999974E-6 : f32
      %92 = vector.broadcast %cst_47 : f32 to vector<8x1xf32>
      %93 = arith.addf %89, %92 : vector<8x1xf32>
      %94 = math.rsqrt %93 : vector<8x1xf32>
      %95 = vector.broadcast %94 : vector<8x1xf32> to vector<8x128xf32>
      %96 = arith.mulf %91, %95 : vector<8x128xf32>
      %c0_48 = arith.constant 0 : index
      %c0_49 = arith.constant 0 : index
      %c0_50 = arith.constant 0 : index
      %97 = vector.load %arg12[%c0_48, %c0_49, %c0_50] : memref<1x1x128xf32, #tpu.memory_space<vmem>>, vector<1x1x128xf32>
      %98 = vector.shape_cast %97 : vector<1x1x128xf32> to vector<1x128xf32>
      %99 = vector.broadcast %98 : vector<1x128xf32> to vector<8x128xf32>
      %100 = arith.mulf %96, %99 : vector<8x128xf32>
      %c0_51 = arith.constant 0 : index
      %c0_52 = arith.constant 0 : index
      %c0_53 = arith.constant 0 : index
      %101 = vector.load %arg13[%c0_51, %c0_52, %c0_53] : memref<1x1x128xf32, #tpu.memory_space<vmem>>, vector<1x1x128xf32>
      %102 = vector.shape_cast %101 : vector<1x1x128xf32> to vector<1x128xf32>
      %103 = vector.broadcast %102 : vector<1x128xf32> to vector<8x128xf32>
      %104 = arith.addf %100, %103 : vector<8x128xf32>
      %cst_54 = arith.constant 5.000000e-01 : f32
      %105 = vector.broadcast %cst_54 : f32 to vector<8x128xf32>
      %106 = arith.mulf %105, %104 : vector<8x128xf32>
      %cst_55 = arith.constant 4.471500e-02 : f32
      %107 = vector.broadcast %cst_55 : f32 to vector<8x128xf32>
      %108 = arith.mulf %107, %104 : vector<8x128xf32>
      %109 = arith.mulf %108, %104 : vector<8x128xf32>
      %110 = arith.mulf %109, %104 : vector<8x128xf32>
      %111 = arith.addf %104, %110 : vector<8x128xf32>
      %cst_56 = arith.constant 0.797884583 : f32
      %112 = vector.broadcast %cst_56 : f32 to vector<8x128xf32>
      %113 = arith.mulf %112, %111 : vector<8x128xf32>
      %114 = math.tanh %113 : vector<8x128xf32>
      %cst_57 = arith.constant 1.000000e+00 : f32
      %115 = vector.broadcast %cst_57 : f32 to vector<8x128xf32>
      %116 = arith.addf %115, %114 : vector<8x128xf32>
      %117 = arith.mulf %106, %116 : vector<8x128xf32>
      %c0_58 = arith.constant 0 : index
      %c0_59 = arith.constant 0 : index
      %c0_60 = arith.constant 0 : index
      %118 = vector.load %arg16[%c0_58, %c0_59, %c0_60] : memref<1x8x128xf32, #tpu.memory_space<vmem>>, vector<1x8x128xf32>
      %119 = vector.shape_cast %118 : vector<1x8x128xf32> to vector<8x128xf32>
      %120 = vector.shape_cast %117 : vector<8x128xf32> to vector<1x8x128xf32>
      tpu.vector_store %arg16[%c0_58, %c0_59, %c0_60], %120 {strides = array<i32>} : memref<1x8x128xf32, #tpu.memory_space<vmem>>, vector<1x8x128xf32>,
    } else {
    }
    return
  }
  func.func @transform_0(%arg0: i32, %arg1: i32, %arg2: memref<6xi32, #tpu.memory_space<smem>>, %arg3: memref<6xi32, #tpu.memory_space<smem>>, %arg4: memref<6xi32, #tpu.memory_space<smem>>, %arg5: memref<6xi32, #tpu.memory_space<smem>>) -> (i32, i32, i32) {
    %0 = arith.index_cast %arg1 : i32 to index
    %1 = memref.load %arg2[%0] : memref<6xi32, #tpu.memory_space<smem>>
    %c0_i32 = arith.constant 0 : i32
    %c0_i32_0 = arith.constant 0 : i32
    %c0_i32_1 = arith.constant 0 : i32
    return %1, %c0_i32, %c0_i32_0 : i32, i32, i32
  }
  func.func @transform_1(%arg0: i32, %arg1: i32, %arg2: memref<6xi32, #tpu.memory_space<smem>>, %arg3: memref<6xi32, #tpu.memory_space<smem>>, %arg4: memref<6xi32, #tpu.memory_space<smem>>, %arg5: memref<6xi32, #tpu.memory_space<smem>>) -> (i32, i32, i32) {
    %0 = arith.index_cast %arg1 : i32 to index
    %1 = memref.load %arg3[%0] : memref<6xi32, #tpu.memory_space<smem>>
    %c0_i32 = arith.constant 0 : i32
    %c0_i32_0 = arith.constant 0 : i32
    return %1, %arg0, %c0_i32 : i32, i32, i32
  }
  func.func @transform_2(%arg0: i32, %arg1: i32, %arg2: memref<6xi32, #tpu.memory_space<smem>>, %arg3: memref<6xi32, #tpu.memory_space<smem>>, %arg4: memref<6xi32, #tpu.memory_space<smem>>, %arg5: memref<6xi32, #tpu.memory_space<smem>>) -> (i32, i32, i32, i32) {
    %c0_i32 = arith.constant 0 : i32
    %c0_i32_0 = arith.constant 0 : i32
    %c0_i32_1 = arith.constant 0 : i32
    return %arg1, %arg0, %c0_i32, %c0_i32_0 : i32, i32, i32, i32
  }
  func.func @transform_3(%arg0: i32, %arg1: i32, %arg2: memref<6xi32, #tpu.memory_space<smem>>, %arg3: memref<6xi32, #tpu.memory_space<smem>>, %arg4: memref<6xi32, #tpu.memory_space<smem>>, %arg5: memref<6xi32, #tpu.memory_space<smem>>) -> (i32, i32, i32) {
    %c0_i32 = arith.constant 0 : i32
    %c0_i32_0 = arith.constant 0 : i32
    %c0_i32_1 = arith.constant 0 : i32
    %c0_i32_2 = arith.constant 0 : i32
    return %c0_i32, %c0_i32_0, %c0_i32_1 : i32, i32, i32
  }
  func.func @transform_4(%arg0: i32, %arg1: i32, %arg2: memref<6xi32, #tpu.memory_space<smem>>, %arg3: memref<6xi32, #tpu.memory_space<smem>>, %arg4: memref<6xi32, #tpu.memory_space<smem>>, %arg5: memref<6xi32, #tpu.memory_space<smem>>) -> (i32, i32, i32) {
    %c0_i32 = arith.constant 0 : i32
    %c0_i32_0 = arith.constant 0 : i32
    %c0_i32_1 = arith.constant 0 : i32
    %c0_i32_2 = arith.constant 0 : i32
    return %c0_i32, %c0_i32_0, %c0_i32_1 : i32, i32, i32
  }
  func.func @transform_5(%arg0: i32, %arg1: i32, %arg2: memref<6xi32, #tpu.memory_space<smem>>, %arg3: memref<6xi32, #tpu.memory_space<smem>>, %arg4: memref<6xi32, #tpu.memory_space<smem>>, %arg5: memref<6xi32, #tpu.memory_space<smem>>) -> (i32, i32, i32) {
    %0 = arith.index_cast %arg1 : i32 to index
    %1 = memref.load %arg3[%0] : memref<6xi32, #tpu.memory_space<smem>>
    %c0_i32 = arith.constant 0 : i32
    %c0_i32_0 = arith.constant 0 : i32
    %c0_i32_1 = arith.constant 0 : i32
    return %1, %c0_i32, %c0_i32_0 : i32, i32, i32
  }
  func.func @transform_6(%arg0: i32, %arg1: i32, %arg2: memref<6xi32, #tpu.memory_space<smem>>, %arg3: memref<6xi32, #tpu.memory_space<smem>>, %arg4: memref<6xi32, #tpu.memory_space<smem>>, %arg5: memref<6xi32, #tpu.memory_space<smem>>) -> (i32, i32, i32) {
    %0 = arith.index_cast %arg1 : i32 to index
    %1 = memref.load %arg3[%0] : memref<6xi32, #tpu.memory_space<smem>>
    %c0_i32 = arith.constant 0 : i32
    %c0_i32_0 = arith.constant 0 : i32
    %c0_i32_1 = arith.constant 0 : i32
    return %1, %c0_i32, %c0_i32_0 : i32, i32, i32
  }
  func.func @transform_7(%arg0: i32, %arg1: i32, %arg2: memref<6xi32, #tpu.memory_space<smem>>, %arg3: memref<6xi32, #tpu.memory_space<smem>>, %arg4: memref<6xi32, #tpu.memory_space<smem>>, %arg5: memref<6xi32, #tpu.memory_space<smem>>) -> (i32, i32, i32) {
    %0 = arith.index_cast %arg1 : i32 to index
    %1 = memref.load %arg3[%0] : memref<6xi32, #tpu.memory_space<smem>>
    %c0_i32 = arith.constant 0 : i32
    %c0_i32_0 = arith.constant 0 : i32
    %c0_i32_1 = arith.constant 0 : i32
    return %1, %c0_i32, %c0_i32_0 : i32, i32, i32
  }
  func.func @transform_8(%arg0: i32, %arg1: i32, %arg2: memref<6xi32, #tpu.memory_space<smem>>, %arg3: memref<6xi32, #tpu.memory_space<smem>>, %arg4: memref<6xi32, #tpu.memory_space<smem>>, %arg5: memref<6xi32, #tpu.memory_space<smem>>) -> (i32, i32) {
    %c0_i32 = arith.constant 0 : i32
    %c0_i32_0 = arith.constant 0 : i32
    %c0_i32_1 = arith.constant 0 : i32
    return %c0_i32, %c0_i32_0 : i32, i32
  }
  func.func @transform_9(%arg0: i32, %arg1: i32, %arg2: memref<6xi32, #tpu.memory_space<smem>>, %arg3: memref<6xi32, #tpu.memory_space<smem>>, %arg4: memref<6xi32, #tpu.memory_space<smem>>, %arg5: memref<6xi32, #tpu.memory_space<smem>>) -> (i32, i32) {
    %c0_i32 = arith.constant 0 : i32
    %c0_i32_0 = arith.constant 0 : i32
    %c0_i32_1 = arith.constant 0 : i32
    return %c0_i32, %c0_i32_0 : i32, i32
  }
  func.func @transform_10(%arg0: i32, %arg1: i32, %arg2: memref<6xi32, #tpu.memory_space<smem>>, %arg3: memref<6xi32, #tpu.memory_space<smem>>, %arg4: memref<6xi32, #tpu.memory_space<smem>>, %arg5: memref<6xi32, #tpu.memory_space<smem>>) -> (i32, i32, i32) {
    %0 = arith.index_cast %arg1 : i32 to index
    %1 = memref.load %arg3[%0] : memref<6xi32, #tpu.memory_space<smem>>
    %c0_i32 = arith.constant 0 : i32
    %c0_i32_0 = arith.constant 0 : i32
    return %1, %arg0, %c0_i32 : i32, i32, i32
  }
}

module attributes {stable_mosaic.version = 11 : i64} {
  func.func @kernel(%arg0: i32, %arg1: i32, %arg2: memref<6xi32, #tpu.memory_space<smem>>, %arg3: memref<6xi32, #tpu.memory_space<smem>>, %arg4: memref<6xi32, #tpu.memory_space<smem>>, %arg5: memref<6xi32, #tpu.memory_space<smem>>, %arg6: memref<1x16x128xbf16, #tpu.memory_space<vmem>>, %arg7: memref<1x8x128xf32, #tpu.memory_space<vmem>>, %arg8: memref<1x1x16x128xf32, #tpu.memory_space<vmem>>, %arg9: memref<6x128x256xbf16, #tpu.memory_space<vmem>>, %arg10: memref<6x128x128xbf16, #tpu.memory_space<vmem>>, %arg11: memref<1x1x128xf32, #tpu.memory_space<vmem>>, %arg12: memref<1x1x128xf32, #tpu.memory_space<vmem>>, %arg13: memref<1x1x128xf32, #tpu.memory_space<vmem>>, %arg14: memref<8x128xf32, #tpu.memory_space<vmem>>, %arg15: memref<64x128xf32, #tpu.memory_space<vmem>>, %arg16: memref<1x128x128xbf16, #tpu.memory_space<vmem>>, %arg17: memref<1x1x128xf32, #tpu.memory_space<vmem>>, %arg18: memref<1x8x128xf32, #tpu.memory_space<vmem>>) attributes {dimension_semantics = [#tpu.dimension_semantics<parallel>, #tpu.dimension_semantics<arbitrary>], iteration_bounds = array<i64: 2, 6>, scalar_prefetch = 4 : i64, scratch_operands = 0 : i64, tpu.core_type = #tpu.core_type<tc>, window_params = [{transform_indices = @transform_0, window_bounds = array<i64: 1, 16, 128>}, {transform_indices = @transform_1, window_bounds = array<i64: 1, 8, 128>}, {transform_indices = @transform_2, window_bounds = array<i64: 1, 1, 16, 128>}, {pipeline_mode = #tpu.pipeline_mode<synchronous>, transform_indices = @transform_3, window_bounds = array<i64: 6, 128, 256>}, {pipeline_mode = #tpu.pipeline_mode<synchronous>, transform_indices = @transform_4, window_bounds = array<i64: 6, 128, 128>}, {transform_indices = @transform_5, window_bounds = array<i64: 1, 1, 128>}, {transform_indices = @transform_6, window_bounds = array<i64: 1, 1, 128>}, {transform_indices = @transform_7, window_bounds = array<i64: 1, 1, 128>}, {pipeline_mode = #tpu.pipeline_mode<synchronous>, transform_indices = @transform_8, window_bounds = array<i64: 8, 128>}, {pipeline_mode = #tpu.pipeline_mode<synchronous>, transform_indices = @transform_9, window_bounds = array<i64: 64, 128>}, {transform_indices = @transform_10, window_bounds = array<i64: 1, 128, 128>}, {transform_indices = @transform_11, window_bounds = array<i64: 1, 1, 128>}, {transform_indices = @transform_12, window_bounds = array<i64: 1, 8, 128>}]} {
    %0 = arith.index_cast %arg1 : i32 to index
    %1 = memref.load %arg4[%0] : memref<6xi32, #tpu.memory_space<smem>>
    %c1_i32 = arith.constant 1 : i32
    %2 = arith.cmpi eq, %1, %c1_i32 : i32
    %3 = arith.extui %2 : i1 to i32
    %c0_i32 = arith.constant 0 : i32
    %4 = arith.cmpi ne, %3, %c0_i32 : i32
    scf.if %4 {
      %cst_37 = arith.constant 0.000000e+00 : f32
      %72 = vector.broadcast %cst_37 : f32 to vector<8x128xf32>
      %c0_38 = arith.constant 0 : index
      %c0_39 = arith.constant 0 : index
      %c0_40 = arith.constant 0 : index
      %73 = vector.load %arg18[%c0_38, %c0_39, %c0_40] : memref<1x8x128xf32, #tpu.memory_space<vmem>>, vector<1x8x128xf32>
      %74 = vector.shape_cast %73 : vector<1x8x128xf32> to vector<8x128xf32>
      %75 = vector.shape_cast %72 : vector<8x128xf32> to vector<1x8x128xf32>
      tpu.vector_store %arg18[%c0_38, %c0_39, %c0_40], %75 {strides = array<i32>} : memref<1x8x128xf32, #tpu.memory_space<vmem>>, vector<1x8x128xf32>,
    } else {
    }
    %c0 = arith.constant 0 : index
    %c0_0 = arith.constant 0 : index
    %c0_1 = arith.constant 0 : index
    %5 = vector.load %arg6[%c0, %c0_0, %c0_1] : memref<1x16x128xbf16, #tpu.memory_space<vmem>>, vector<1x16x128xbf16>
    %6 = vector.shape_cast %5 : vector<1x16x128xbf16> to vector<16x128xbf16>
    %c0_2 = arith.constant 0 : index
    %c0_3 = arith.constant 0 : index
    %c0_4 = arith.constant 0 : index
    %7 = vector.load %arg7[%c0_2, %c0_3, %c0_4] : memref<1x8x128xf32, #tpu.memory_space<vmem>>, vector<1x8x128xf32>
    %8 = vector.shape_cast %7 : vector<1x8x128xf32> to vector<8x128xf32>
    %9 = arith.index_cast %arg1 : i32 to index
    %c0_5 = arith.constant 0 : index
    %c0_6 = arith.constant 0 : index
    %10 = vector.load %arg9[%9, %c0_5, %c0_6] : memref<6x128x256xbf16, #tpu.memory_space<vmem>>, vector<1x128x256xbf16>
    %11 = vector.shape_cast %10 : vector<1x128x256xbf16> to vector<128x256xbf16>
    %cst = arith.constant dense<0.000000e+00> : vector<16x256xf32>
    %12 = tpu.matmul %6, %11, %cst {dimension_numbers = #tpu.dot_dimension_numbers<[1], [0], [0], [1], [0, 0, 1, 1], [], []>} : vector<16x128xbf16>, vector<128x256xbf16>, vector<16x256xf32> -> vector<16x256xf32>
    %13 = vector.extract_strided_slice %12 {offsets = [0, 0], sizes = [16, 128], strides = [1, 1]} : vector<16x256xf32> to vector<16x128xf32>
    %14 = vector.extract_strided_slice %12 {offsets = [0, 128], sizes = [16, 128], strides = [1, 1]} : vector<16x256xf32> to vector<16x128xf32>
    %15 = arith.truncf %8 : vector<8x128xf32> to vector<8x128xbf16>
    %16 = arith.index_cast %arg1 : i32 to index
    %c0_7 = arith.constant 0 : index
    %c0_8 = arith.constant 0 : index
    %17 = vector.load %arg10[%16, %c0_7, %c0_8] : memref<6x128x128xbf16, #tpu.memory_space<vmem>>, vector<1x128x128xbf16>
    %18 = vector.shape_cast %17 : vector<1x128x128xbf16> to vector<128x128xbf16>
    %cst_9 = arith.constant dense<0.000000e+00> : vector<8x128xf32>
    %19 = tpu.matmul %15, %18, %cst_9 {dimension_numbers = #tpu.dot_dimension_numbers<[1], [0], [0], [1], [0, 0, 1, 1], [], []>} : vector<8x128xbf16>, vector<128x128xbf16>, vector<8x128xf32> -> vector<8x128xf32>
    %c0_10 = arith.constant 0 : index
    %c0_11 = arith.constant 0 : index
    %20 = vector.load %arg14[%c0_10, %c0_11] : memref<8x128xf32, #tpu.memory_space<vmem>>, vector<8x128xf32>
    %21 = arith.mulf %19, %20 : vector<8x128xf32>
    %cst_12 = arith.constant dense<0.000000e+00> : vector<128xf32>
    %22 = vector.multi_reduction <add>, %21, %cst_12 [0] : vector<8x128xf32> to vector<128xf32>
    %23 = vector.shape_cast %22 : vector<128xf32> to vector<1x128xf32>
    %24 = vector.broadcast %23 : vector<1x128xf32> to vector<16x128xf32>
    %25 = arith.addf %14, %24 : vector<16x128xf32>
    %cst_13 = arith.constant 0.000000e+00 : f32
    %26 = vector.broadcast %cst_13 : f32 to vector<16x128xf32>
    %27 = arith.cmpf ogt, %25, %26 : vector<16x128xf32>
    %cst_14 = arith.constant 2.000000e-01 : f32
    %28 = vector.broadcast %cst_14 : f32 to vector<16x128xf32>
    %29 = arith.mulf %28, %25 : vector<16x128xf32>
    %30 = arith.select %27, %25, %29 : vector<16x128xi1>, vector<16x128xf32>
    %c0_15 = arith.constant 0 : index
    %c0_16 = arith.constant 0 : index
    %c0_17 = arith.constant 0 : index
    %c0_18 = arith.constant 0 : index
    %31 = vector.load %arg8[%c0_15, %c0_16, %c0_17, %c0_18] : memref<1x1x16x128xf32, #tpu.memory_space<vmem>>, vector<1x1x16x128xf32>
    %32 = vector.shape_cast %31 : vector<1x1x16x128xf32> to vector<16x128xf32>
    %cst_19 = arith.constant 1.000000e+00 : f32
    %33 = vector.broadcast %cst_19 : f32 to vector<16x128xf32>
    %34 = arith.subf %32, %33 : vector<16x128xf32>
    %cst_20 = arith.constant 1.000000e+30 : f32
    %35 = vector.broadcast %cst_20 : f32 to vector<16x128xf32>
    %36 = arith.mulf %34, %35 : vector<16x128xf32>
    %37 = arith.addf %30, %36 : vector<16x128xf32>
    %cst_21 = arith.constant dense<0xFF800000> : vector<128xf32>
    %38 = vector.multi_reduction <maximumf>, %37, %cst_21 [0] : vector<16x128xf32> to vector<128xf32>
    %39 = vector.shape_cast %38 : vector<128xf32> to vector<1x128xf32>
    %40 = vector.broadcast %39 : vector<1x128xf32> to vector<16x128xf32>
    %41 = arith.subf %37, %40 : vector<16x128xf32>
    %42 = math.exp %41 : vector<16x128xf32>
    %43 = arith.mulf %42, %32 : vector<16x128xf32>
    %cst_22 = arith.constant dense<0.000000e+00> : vector<128xf32>
    %44 = vector.multi_reduction <add>, %43, %cst_22 [0] : vector<16x128xf32> to vector<128xf32>
    %45 = vector.shape_cast %44 : vector<128xf32> to vector<1x128xf32>
    %cst_23 = arith.constant 0.000000e+00 : f32
    %46 = vector.broadcast %cst_23 : f32 to vector<1x128xf32>
    %47 = arith.cmpf ogt, %45, %46 : vector<1x128xf32>
    %cst_24 = arith.constant 1.000000e+00 : f32
    %48 = vector.broadcast %cst_24 : f32 to vector<1x128xf32>
    %49 = arith.select %47, %45, %48 : vector<1x128xi1>, vector<1x128xf32>
    %50 = tpu.reciprocal %49 {approx = true} : vector<1x128xf32> -> vector<1x128xf32>
    %51 = vector.broadcast %50 : vector<1x128xf32> to vector<16x128xf32>
    %52 = arith.mulf %43, %51 : vector<16x128xf32>
    %53 = vector.extract_strided_slice %52 {offsets = [0, 0], sizes = [16, 64], strides = [1, 1]} : vector<16x128xf32> to vector<16x64xf32>
    %54 = arith.truncf %53 : vector<16x64xf32> to vector<16x64xbf16>
    %55 = arith.truncf %13 : vector<16x128xf32> to vector<16x128xbf16>
    %cst_25 = arith.constant dense<0.000000e+00> : vector<64x128xf32>
    %56 = tpu.matmul %54, %55, %cst_25 {dimension_numbers = #tpu.dot_dimension_numbers<[0], [0], [1], [1], [0, 1, 1, 1], [], []>} : vector<16x64xbf16>, vector<16x128xbf16>, vector<64x128xf32> -> vector<64x128xf32>
    %c0_26 = arith.constant 0 : index
    %c0_27 = arith.constant 0 : index
    %57 = vector.load %arg15[%c0_26, %c0_27] : memref<64x128xf32, #tpu.memory_space<vmem>>, vector<64x128xf32>
    %58 = arith.mulf %56, %57 : vector<64x128xf32>
    %59 = vector.shape_cast %58 : vector<64x128xf32> to vector<8x8x128xf32>
    %cst_28 = arith.constant dense<0.000000e+00> : vector<8x128xf32>
    %60 = vector.multi_reduction <add>, %59, %cst_28 [0] : vector<8x8x128xf32> to vector<8x128xf32>
    %c0_29 = arith.constant 0 : index
    %c0_30 = arith.constant 0 : index
    %c0_31 = arith.constant 0 : index
    %61 = vector.load %arg18[%c0_29, %c0_30, %c0_31] : memref<1x8x128xf32, #tpu.memory_space<vmem>>, vector<1x8x128xf32>
    %62 = vector.shape_cast %61 : vector<1x8x128xf32> to vector<8x128xf32>
    %63 = arith.addf %62, %60 : vector<8x128xf32>
    %c0_32 = arith.constant 0 : index
    %c0_33 = arith.constant 0 : index
    %c0_34 = arith.constant 0 : index
    %64 = vector.load %arg18[%c0_32, %c0_33, %c0_34] : memref<1x8x128xf32, #tpu.memory_space<vmem>>, vector<1x8x128xf32>
    %65 = vector.shape_cast %64 : vector<1x8x128xf32> to vector<8x128xf32>
    %66 = vector.shape_cast %63 : vector<8x128xf32> to vector<1x8x128xf32>
    tpu.vector_store %arg18[%c0_32, %c0_33, %c0_34], %66 {strides = array<i32>} : memref<1x8x128xf32, #tpu.memory_space<vmem>>, vector<1x8x128xf32>,
    %67 = arith.index_cast %arg1 : i32 to index
    %68 = memref.load %arg5[%67] : memref<6xi32, #tpu.memory_space<smem>>
    %c1_i32_35 = arith.constant 1 : i32
    %69 = arith.cmpi eq, %68, %c1_i32_35 : i32
    %70 = arith.extui %69 : i1 to i32
    %c0_i32_36 = arith.constant 0 : i32
    %71 = arith.cmpi ne, %70, %c0_i32_36 : i32
    scf.if %71 {
      %c0_37 = arith.constant 0 : index
      %c0_38 = arith.constant 0 : index
      %c0_39 = arith.constant 0 : index
      %72 = vector.load %arg18[%c0_37, %c0_38, %c0_39] : memref<1x8x128xf32, #tpu.memory_space<vmem>>, vector<1x8x128xf32>
      %73 = vector.shape_cast %72 : vector<1x8x128xf32> to vector<8x128xf32>
      %c0_40 = arith.constant 0 : index
      %c0_41 = arith.constant 0 : index
      %c0_42 = arith.constant 0 : index
      %74 = vector.load %arg11[%c0_40, %c0_41, %c0_42] : memref<1x1x128xf32, #tpu.memory_space<vmem>>, vector<1x1x128xf32>
      %75 = vector.shape_cast %74 : vector<1x1x128xf32> to vector<1x128xf32>
      %76 = vector.broadcast %75 : vector<1x128xf32> to vector<8x128xf32>
      %77 = arith.addf %73, %76 : vector<8x128xf32>
      %78 = arith.addf %77, %8 : vector<8x128xf32>
      %cst_43 = arith.constant dense<0.000000e+00> : vector<8xf32>
      %79 = vector.multi_reduction <add>, %78, %cst_43 [1] : vector<8x128xf32> to vector<8xf32>
      %80 = vector.shape_cast %79 : vector<8xf32> to vector<8x1xf32>
      %cst_44 = arith.constant 1.280000e+02 : f32
      %81 = vector.broadcast %cst_44 : f32 to vector<8x1xf32>
      %82 = arith.divf %80, %81 : vector<8x1xf32>
      %83 = vector.broadcast %82 : vector<8x1xf32> to vector<8x128xf32>
      %84 = arith.subf %78, %83 : vector<8x128xf32>
      %85 = arith.mulf %84, %84 : vector<8x128xf32>
      %cst_45 = arith.constant dense<0.000000e+00> : vector<8xf32>
      %86 = vector.multi_reduction <add>, %85, %cst_45 [1] : vector<8x128xf32> to vector<8xf32>
      %87 = vector.shape_cast %86 : vector<8xf32> to vector<8x1xf32>
      %cst_46 = arith.constant 1.280000e+02 : f32
      %88 = vector.broadcast %cst_46 : f32 to vector<8x1xf32>
      %89 = arith.divf %87, %88 : vector<8x1xf32>
      %90 = vector.broadcast %82 : vector<8x1xf32> to vector<8x128xf32>
      %91 = arith.subf %78, %90 : vector<8x128xf32>
      %cst_47 = arith.constant 9.99999974E-6 : f32
      %92 = vector.broadcast %cst_47 : f32 to vector<8x1xf32>
      %93 = arith.addf %89, %92 : vector<8x1xf32>
      %94 = math.rsqrt %93 : vector<8x1xf32>
      %95 = vector.broadcast %94 : vector<8x1xf32> to vector<8x128xf32>
      %96 = arith.mulf %91, %95 : vector<8x128xf32>
      %c0_48 = arith.constant 0 : index
      %c0_49 = arith.constant 0 : index
      %c0_50 = arith.constant 0 : index
      %97 = vector.load %arg12[%c0_48, %c0_49, %c0_50] : memref<1x1x128xf32, #tpu.memory_space<vmem>>, vector<1x1x128xf32>
      %98 = vector.shape_cast %97 : vector<1x1x128xf32> to vector<1x128xf32>
      %99 = vector.broadcast %98 : vector<1x128xf32> to vector<8x128xf32>
      %100 = arith.mulf %96, %99 : vector<8x128xf32>
      %c0_51 = arith.constant 0 : index
      %c0_52 = arith.constant 0 : index
      %c0_53 = arith.constant 0 : index
      %101 = vector.load %arg13[%c0_51, %c0_52, %c0_53] : memref<1x1x128xf32, #tpu.memory_space<vmem>>, vector<1x1x128xf32>
      %102 = vector.shape_cast %101 : vector<1x1x128xf32> to vector<1x128xf32>
      %103 = vector.broadcast %102 : vector<1x128xf32> to vector<8x128xf32>
      %104 = arith.addf %100, %103 : vector<8x128xf32>
      %cst_54 = arith.constant 5.000000e-01 : f32
      %105 = vector.broadcast %cst_54 : f32 to vector<8x128xf32>
      %106 = arith.mulf %105, %104 : vector<8x128xf32>
      %cst_55 = arith.constant 4.471500e-02 : f32
      %107 = vector.broadcast %cst_55 : f32 to vector<8x128xf32>
      %108 = arith.mulf %107, %104 : vector<8x128xf32>
      %109 = arith.mulf %108, %104 : vector<8x128xf32>
      %110 = arith.mulf %109, %104 : vector<8x128xf32>
      %111 = arith.addf %104, %110 : vector<8x128xf32>
      %cst_56 = arith.constant 0.797884583 : f32
      %112 = vector.broadcast %cst_56 : f32 to vector<8x128xf32>
      %113 = arith.mulf %112, %111 : vector<8x128xf32>
      %114 = math.tanh %113 : vector<8x128xf32>
      %cst_57 = arith.constant 1.000000e+00 : f32
      %115 = vector.broadcast %cst_57 : f32 to vector<8x128xf32>
      %116 = arith.addf %115, %114 : vector<8x128xf32>
      %117 = arith.mulf %106, %116 : vector<8x128xf32>
      %118 = arith.truncf %117 : vector<8x128xf32> to vector<8x128xbf16>
      %c0_58 = arith.constant 0 : index
      %c0_59 = arith.constant 0 : index
      %c0_60 = arith.constant 0 : index
      %119 = vector.load %arg16[%c0_58, %c0_59, %c0_60] : memref<1x128x128xbf16, #tpu.memory_space<vmem>>, vector<1x128x128xbf16>
      %120 = vector.shape_cast %119 : vector<1x128x128xbf16> to vector<128x128xbf16>
      %cst_61 = arith.constant dense<0.000000e+00> : vector<8x128xf32>
      %121 = tpu.matmul %118, %120, %cst_61 {dimension_numbers = #tpu.dot_dimension_numbers<[1], [0], [0], [1], [0, 0, 1, 1], [], []>} : vector<8x128xbf16>, vector<128x128xbf16>, vector<8x128xf32> -> vector<8x128xf32>
      %c0_62 = arith.constant 0 : index
      %c0_63 = arith.constant 0 : index
      %c0_64 = arith.constant 0 : index
      %122 = vector.load %arg17[%c0_62, %c0_63, %c0_64] : memref<1x1x128xf32, #tpu.memory_space<vmem>>, vector<1x1x128xf32>
      %123 = vector.shape_cast %122 : vector<1x1x128xf32> to vector<1x128xf32>
      %124 = vector.broadcast %123 : vector<1x128xf32> to vector<8x128xf32>
      %125 = arith.addf %121, %124 : vector<8x128xf32>
      %c0_65 = arith.constant 0 : index
      %c0_66 = arith.constant 0 : index
      %c0_67 = arith.constant 0 : index
      %126 = vector.load %arg18[%c0_65, %c0_66, %c0_67] : memref<1x8x128xf32, #tpu.memory_space<vmem>>, vector<1x8x128xf32>
      %127 = vector.shape_cast %126 : vector<1x8x128xf32> to vector<8x128xf32>
      %128 = vector.shape_cast %125 : vector<8x128xf32> to vector<1x8x128xf32>
      tpu.vector_store %arg18[%c0_65, %c0_66, %c0_67], %128 {strides = array<i32>} : memref<1x8x128xf32, #tpu.memory_space<vmem>>, vector<1x8x128xf32>,
    } else {
    }
    return
  }
  func.func @transform_0(%arg0: i32, %arg1: i32, %arg2: memref<6xi32, #tpu.memory_space<smem>>, %arg3: memref<6xi32, #tpu.memory_space<smem>>, %arg4: memref<6xi32, #tpu.memory_space<smem>>, %arg5: memref<6xi32, #tpu.memory_space<smem>>) -> (i32, i32, i32) {
    %0 = arith.index_cast %arg1 : i32 to index
    %1 = memref.load %arg2[%0] : memref<6xi32, #tpu.memory_space<smem>>
    %c0_i32 = arith.constant 0 : i32
    %c0_i32_0 = arith.constant 0 : i32
    %c0_i32_1 = arith.constant 0 : i32
    return %1, %c0_i32, %c0_i32_0 : i32, i32, i32
  }
  func.func @transform_1(%arg0: i32, %arg1: i32, %arg2: memref<6xi32, #tpu.memory_space<smem>>, %arg3: memref<6xi32, #tpu.memory_space<smem>>, %arg4: memref<6xi32, #tpu.memory_space<smem>>, %arg5: memref<6xi32, #tpu.memory_space<smem>>) -> (i32, i32, i32) {
    %0 = arith.index_cast %arg1 : i32 to index
    %1 = memref.load %arg3[%0] : memref<6xi32, #tpu.memory_space<smem>>
    %c0_i32 = arith.constant 0 : i32
    %c0_i32_0 = arith.constant 0 : i32
    return %1, %arg0, %c0_i32 : i32, i32, i32
  }
  func.func @transform_2(%arg0: i32, %arg1: i32, %arg2: memref<6xi32, #tpu.memory_space<smem>>, %arg3: memref<6xi32, #tpu.memory_space<smem>>, %arg4: memref<6xi32, #tpu.memory_space<smem>>, %arg5: memref<6xi32, #tpu.memory_space<smem>>) -> (i32, i32, i32, i32) {
    %c0_i32 = arith.constant 0 : i32
    %c0_i32_0 = arith.constant 0 : i32
    %c0_i32_1 = arith.constant 0 : i32
    return %arg1, %arg0, %c0_i32, %c0_i32_0 : i32, i32, i32, i32
  }
  func.func @transform_3(%arg0: i32, %arg1: i32, %arg2: memref<6xi32, #tpu.memory_space<smem>>, %arg3: memref<6xi32, #tpu.memory_space<smem>>, %arg4: memref<6xi32, #tpu.memory_space<smem>>, %arg5: memref<6xi32, #tpu.memory_space<smem>>) -> (i32, i32, i32) {
    %c0_i32 = arith.constant 0 : i32
    %c0_i32_0 = arith.constant 0 : i32
    %c0_i32_1 = arith.constant 0 : i32
    %c0_i32_2 = arith.constant 0 : i32
    return %c0_i32, %c0_i32_0, %c0_i32_1 : i32, i32, i32
  }
  func.func @transform_4(%arg0: i32, %arg1: i32, %arg2: memref<6xi32, #tpu.memory_space<smem>>, %arg3: memref<6xi32, #tpu.memory_space<smem>>, %arg4: memref<6xi32, #tpu.memory_space<smem>>, %arg5: memref<6xi32, #tpu.memory_space<smem>>) -> (i32, i32, i32) {
    %c0_i32 = arith.constant 0 : i32
    %c0_i32_0 = arith.constant 0 : i32
    %c0_i32_1 = arith.constant 0 : i32
    %c0_i32_2 = arith.constant 0 : i32
    return %c0_i32, %c0_i32_0, %c0_i32_1 : i32, i32, i32
  }
  func.func @transform_5(%arg0: i32, %arg1: i32, %arg2: memref<6xi32, #tpu.memory_space<smem>>, %arg3: memref<6xi32, #tpu.memory_space<smem>>, %arg4: memref<6xi32, #tpu.memory_space<smem>>, %arg5: memref<6xi32, #tpu.memory_space<smem>>) -> (i32, i32, i32) {
    %0 = arith.index_cast %arg1 : i32 to index
    %1 = memref.load %arg3[%0] : memref<6xi32, #tpu.memory_space<smem>>
    %c0_i32 = arith.constant 0 : i32
    %c0_i32_0 = arith.constant 0 : i32
    %c0_i32_1 = arith.constant 0 : i32
    return %1, %c0_i32, %c0_i32_0 : i32, i32, i32
  }
  func.func @transform_6(%arg0: i32, %arg1: i32, %arg2: memref<6xi32, #tpu.memory_space<smem>>, %arg3: memref<6xi32, #tpu.memory_space<smem>>, %arg4: memref<6xi32, #tpu.memory_space<smem>>, %arg5: memref<6xi32, #tpu.memory_space<smem>>) -> (i32, i32, i32) {
    %0 = arith.index_cast %arg1 : i32 to index
    %1 = memref.load %arg3[%0] : memref<6xi32, #tpu.memory_space<smem>>
    %c0_i32 = arith.constant 0 : i32
    %c0_i32_0 = arith.constant 0 : i32
    %c0_i32_1 = arith.constant 0 : i32
    return %1, %c0_i32, %c0_i32_0 : i32, i32, i32
  }
  func.func @transform_7(%arg0: i32, %arg1: i32, %arg2: memref<6xi32, #tpu.memory_space<smem>>, %arg3: memref<6xi32, #tpu.memory_space<smem>>, %arg4: memref<6xi32, #tpu.memory_space<smem>>, %arg5: memref<6xi32, #tpu.memory_space<smem>>) -> (i32, i32, i32) {
    %0 = arith.index_cast %arg1 : i32 to index
    %1 = memref.load %arg3[%0] : memref<6xi32, #tpu.memory_space<smem>>
    %c0_i32 = arith.constant 0 : i32
    %c0_i32_0 = arith.constant 0 : i32
    %c0_i32_1 = arith.constant 0 : i32
    return %1, %c0_i32, %c0_i32_0 : i32, i32, i32
  }
  func.func @transform_8(%arg0: i32, %arg1: i32, %arg2: memref<6xi32, #tpu.memory_space<smem>>, %arg3: memref<6xi32, #tpu.memory_space<smem>>, %arg4: memref<6xi32, #tpu.memory_space<smem>>, %arg5: memref<6xi32, #tpu.memory_space<smem>>) -> (i32, i32) {
    %c0_i32 = arith.constant 0 : i32
    %c0_i32_0 = arith.constant 0 : i32
    %c0_i32_1 = arith.constant 0 : i32
    return %c0_i32, %c0_i32_0 : i32, i32
  }
  func.func @transform_9(%arg0: i32, %arg1: i32, %arg2: memref<6xi32, #tpu.memory_space<smem>>, %arg3: memref<6xi32, #tpu.memory_space<smem>>, %arg4: memref<6xi32, #tpu.memory_space<smem>>, %arg5: memref<6xi32, #tpu.memory_space<smem>>) -> (i32, i32) {
    %c0_i32 = arith.constant 0 : i32
    %c0_i32_0 = arith.constant 0 : i32
    %c0_i32_1 = arith.constant 0 : i32
    return %c0_i32, %c0_i32_0 : i32, i32
  }
  func.func @transform_10(%arg0: i32, %arg1: i32, %arg2: memref<6xi32, #tpu.memory_space<smem>>, %arg3: memref<6xi32, #tpu.memory_space<smem>>, %arg4: memref<6xi32, #tpu.memory_space<smem>>, %arg5: memref<6xi32, #tpu.memory_space<smem>>) -> (i32, i32, i32) {
    %0 = arith.index_cast %arg1 : i32 to index
    %1 = memref.load %arg3[%0] : memref<6xi32, #tpu.memory_space<smem>>
    %c0_i32 = arith.constant 0 : i32
    %c0_i32_0 = arith.constant 0 : i32
    %c0_i32_1 = arith.constant 0 : i32
    return %1, %c0_i32, %c0_i32_0 : i32, i32, i32
  }
  func.func @transform_11(%arg0: i32, %arg1: i32, %arg2: memref<6xi32, #tpu.memory_space<smem>>, %arg3: memref<6xi32, #tpu.memory_space<smem>>, %arg4: memref<6xi32, #tpu.memory_space<smem>>, %arg5: memref<6xi32, #tpu.memory_space<smem>>) -> (i32, i32, i32) {
    %0 = arith.index_cast %arg1 : i32 to index
    %1 = memref.load %arg3[%0] : memref<6xi32, #tpu.memory_space<smem>>
    %c0_i32 = arith.constant 0 : i32
    %c0_i32_0 = arith.constant 0 : i32
    %c0_i32_1 = arith.constant 0 : i32
    return %1, %c0_i32, %c0_i32_0 : i32, i32, i32
  }
  func.func @transform_12(%arg0: i32, %arg1: i32, %arg2: memref<6xi32, #tpu.memory_space<smem>>, %arg3: memref<6xi32, #tpu.memory_space<smem>>, %arg4: memref<6xi32, #tpu.memory_space<smem>>, %arg5: memref<6xi32, #tpu.memory_space<smem>>) -> (i32, i32, i32) {
    %0 = arith.index_cast %arg1 : i32 to index
    %1 = memref.load %arg3[%0] : memref<6xi32, #tpu.memory_space<smem>>
    %c0_i32 = arith.constant 0 : i32
    %c0_i32_0 = arith.constant 0 : i32
    return %1, %arg0, %c0_i32 : i32, i32, i32
  }
}

</mosaic_0001>

<llo_original>
// kernel: forward.3
$region0: #{forward.3}
  #allocation0 [shape = 'u32[]', space=smem, size = 0x4, offset = 0x4, fixed_abs, tag = 'smem constant byte address 0x4 - core index']
  #allocation1 [shape = 'u32[144,128]{1,0:T(1,128)}', space=vmem, size = 0x12000, scoped, tag = 'internal scratch']
  #allocation2 [shape = 's32[1]{0}', space=sflag, size = 0x4, scoped, tag = 'scoped memory for forward.3']
  #allocation3 [shape = 'u8[512]{0}', space=smem, size = 0x200, scoped, tag = 'prefetched SMEM operand 0']
  #allocation4 [shape = 'u8[512]{0}', space=smem, size = 0x200, scoped, tag = 'prefetched SMEM operand 1']
  #allocation5 [shape = 'u8[512]{0}', space=smem, size = 0x200, scoped, tag = 'prefetched SMEM operand 2']
  #allocation6 [shape = 'u8[512]{0}', space=smem, size = 0x200, scoped, tag = 'prefetched SMEM operand 3']
  %s0 = inlined_call_operand.hbm [shape: s32[6], index: 0, kind: input, shape index: {}]
  %s1 = inlined_call_operand.hbm [shape: s32[6], index: 1, kind: input, shape index: {}]
  %s2 = inlined_call_operand.hbm [shape: s32[6], index: 2, kind: input, shape index: {}]
  %s3 = inlined_call_operand.hbm [shape: s32[6], index: 3, kind: input, shape index: {}]
  %s4 = inlined_call_operand.vmem [shape: bf16[5,16,128], index: 4, kind: input, shape index: {}]
  %s5 = inlined_call_operand.vmem [shape: f32[5,16,128], index: 5, kind: input, shape index: {}]
  %s6 = inlined_call_operand.hbm [shape: f32[6,2,16,128], index: 6, kind: input, shape index: {}]
  %s7 = inlined_call_operand.hbm [shape: bf16[6,128,256], index: 7, kind: input, shape index: {}]
  %s8 = inlined_call_operand.hbm [shape: bf16[6,128,128], index: 8, kind: input, shape index: {}]
  %s9 = inlined_call_operand.hbm [shape: f32[5,1,128], index: 9, kind: input, shape index: {}]
  %s10 = inlined_call_operand.hbm [shape: f32[5,1,128], index: 10, kind: input, shape index: {}]
  %s11 = inlined_call_operand.hbm [shape: f32[5,1,128], index: 11, kind: input, shape index: {}]
  %s12 = inlined_call_operand.hbm [shape: f32[8,128], index: 12, kind: input, shape index: {}]
  %s13 = inlined_call_operand.hbm [shape: f32[64,128], index: 13, kind: input, shape index: {}]
  %s14 = inlined_call_operand.vmem [shape: f32[5,16,128], index: 14, kind: output, shape index: {}]
  %s15 = sld [smem:[#allocation0]]
  $region113: #{forward.3} parent=0
    _
  %s17 = ssub.s32 1, %s15
  %s18 = scalar_select 0, %s17, %s15
  %20 = dma.hbm_to_smem %s0, 16, [#allocation3], [#allocation2]
  %22 = dma.hbm_to_smem %s1, 16, [#allocation4], [#allocation2]
  %24 = dma.hbm_to_smem %s2, 16, [#allocation5], [#allocation2]
  %26 = dma.hbm_to_smem %s3, 16, [#allocation6], [#allocation2]
  %27 = dma.done [#allocation2], 64
  %28 = sfence
  $region1: #{forward.3} parent=0
    #allocation7 [shape = 'u8[16384]{0}', space=vmem, size = 0x4000, scoped, tag = 'input window, operand 6']
    #allocation8 [shape = 's32[2]{0}', space=sflag, size = 0x8, scoped, tag = 'scoped memory for forward.3']
    #allocation9 [shape = 'u8[393216]{0}', space=vmem, size = 0x60000, scoped, tag = 'input window, operand 7, single buffered']
    #allocation10 [shape = 's32[1]{0}', space=sflag, size = 0x4, scoped, tag = 'scoped memory for forward.3']
    #allocation11 [shape = 'u8[196608]{0}', space=vmem, size = 0x30000, scoped, tag = 'input window, operand 8, single buffered']
    #allocation12 [shape = 'u8[1024]{0}', space=vmem, size = 0x400, scoped, tag = 'input window, operand 9']
    #allocation13 [shape = 's32[2]{0}', space=sflag, size = 0x8, scoped, tag = 'scoped memory for forward.3']
    #allocation14 [shape = 'u8[1024]{0}', space=vmem, size = 0x400, scoped, tag = 'input window, operand 10']
    #allocation15 [shape = 'u8[1024]{0}', space=vmem, size = 0x400, scoped, tag = 'input window, operand 11']
    #allocation16 [shape = 's32[2]{0}', space=sflag, size = 0x8, scoped, tag = 'scoped memory for forward.3']
    #allocation17 [shape = 'u8[4096]{0}', space=vmem, size = 0x1000, scoped, tag = 'input window, operand 12, single buffered']
    #allocation18 [shape = 'u8[32768]{0}', space=vmem, size = 0x8000, scoped, tag = 'input window, operand 13, single buffered']
    #allocation19 [shape = 's32[1]{0}', space=sflag, size = 0x4, scoped, tag = 'scoped memory for forward.3']
    %29 = vsyncpa [#allocation8], 0
    %s30 = scalar_lea.sflag [#allocation8], 1
    %31 = vsyncpa %s30, 0
    %32 = vsyncpa [#allocation10], 0
    %33 = vsyncpa [#allocation13], 0
    %s34 = scalar_lea.sflag [#allocation13], 1
    %35 = vsyncpa %s34, 0
    %36 = vsyncpa [#allocation16], 0
    %s37 = scalar_lea.sflag [#allocation16], 1
    %38 = vsyncpa %s37, 0
    %39 = vsyncpa [#allocation19], 0
    loop: start=0, step=1, limit=14
    $region2: #{forward.3} parent=1 // loop_pre_header
      _
    $region3: #{forward.3} parent=1 // loop_header
      %s41 = sphi 0, %s45
      %p42 = scmp.ge.s32.totalorder %s41, 14
      %s48 = sphi 0, %s60
      %s49 = sphi 0, %s56
      %s50 = sphi 0, %s48
      %s51 = sphi 0, %s49
      %s52 = sphi 0, %s50
      %s53 = sphi 0, %s51
      %s65 = sphi 0, %s67
      %s68 = sphi 0, %s65
      %s69 = sphi 0, %s68
      %s85 = sphi 0, %s69
      %s95 = sphi 0, %s97
      %s98 = sphi 0, %s95
      %s99 = sphi 0, %s98
      %s115 = sphi 0, %s99
      %s123 = sphi 0, %s125
      %s126 = sphi 0, %s123
      %s127 = sphi 0, %s126
      %s143 = sphi 0, %s127
      %s147 = sphi 0, %s147
      %s149 = sphi 0, %s147
      %s150 = sphi 0, %s149
      %s164 = sphi 0, %s150
      %s168 = sphi 0, %s168
      %s170 = sphi 0, %s168
      %s171 = sphi 0, %s170
      %s185 = sphi 0, %s171
      %s193 = sphi 0, %s195
      %s196 = sphi 0, %s193
      %s197 = sphi 0, %s196
      %s213 = sphi 0, %s197
      %s221 = sphi 0, %s223
      %s224 = sphi 0, %s221
      %s225 = sphi 0, %s224
      %s241 = sphi 0, %s225
      %s249 = sphi 0, %s251
      %s252 = sphi 0, %s249
      %s253 = sphi 0, %s252
      %s269 = sphi 0, %s253
      %s273 = sphi 0, %s273
      %s275 = sphi 0, %s273
      %s276 = sphi 0, %s275
      %s290 = sphi 0, %s276
      %s294 = sphi 0, %s294
      %s296 = sphi 0, %s294
      %s297 = sphi 0, %s296
      %s311 = sphi 0, %s297
      %s321 = sphi 0, %s323
      %s324 = sphi 0, %s321
      %s325 = sphi 0, %s324
      %s341 = sphi 0, %s325
    $region4: #{forward.3} parent=1 // loop_header_branch
      %44 = sbr.rel (%p42) target = $region8
    $region5: #{forward.3} parent=1 // loop_body
      %s46 = ssub.s32 %s41, 1
      %s47 = ssub.s32 %s41, 2
      %s54 = sadd.s32 1, %s49
      %p55 = scmp.ge.s32.totalorder %s54, 6
      %s56 = scalar_select %p55, 0, %s54
      %s57 = sadd.s32 1, %s48
      %s58 = scalar_select %p55, %s57, %s48
      %p59 = scmp.ge.s32.totalorder %s58, 2
      %s60 = scalar_select %p59, 0, %s58
      %s61 = sld [smem:[#allocation3 + %s49]]
      %s62 = sld [smem:[#allocation3 + %s56]]
      %s63 = ssub.s32 %s61, %s62
      %p64 = scmp.eq.s32.totalorder %s63, 0
      %s66 = sadd.s32 %s65, 1
      %s67 = scalar_select %p64, %s65, %s66
      %p70 = pneg %p64
      %p71 = scmp.eq.s32.totalorder %s41, 11
      %p72 = por %p70, %p71
      %p73 = scmp.ne.s32.totalorder %s65, %s68
      %p74 = scmp.eq.s32.totalorder %s41, 0
      %p75 = por %p73, %p74
      %p76 = scmp.ne.s32.totalorder %s65, %s68
      %p77 = scmp.eq.s32.totalorder %s46, 11
      %p78 = por %p76, %p77
      %p79 = scmp.ne.s32.totalorder %s68, %s69
      %p80 = scmp.eq.s32.totalorder %s46, 0
      %p81 = por %p79, %p80
      %p82 = scmp.ne.s32.totalorder %s68, %s69
      %p83 = scmp.eq.s32.totalorder %s47, 11
      %p84 = por %p82, %p83
      %p86 = scmp.ne.s32.totalorder %s69, %s85
      %p87 = scmp.eq.s32.totalorder %s47, 0
      %p88 = por %p86, %p87
      %s89 = sld [smem:[#allocation4 + %s49]]
      %s90 = sld [smem:[#allocation4 + %s56]]
      %s91 = ssub.s32 %s89, %s90
      %s92 = ssub.s32 %s48, %s60
      %s93 = sor.u32 %s91, %s92
      %p94 = scmp.eq.s32.totalorder %s93, 0
      %s96 = sadd.s32 %s95, 1
      %s97 = scalar_select %p94, %s95, %s96
      %p100 = pneg %p94
      %p101 = scmp.eq.s32.totalorder %s41, 11
      %p102 = por %p100, %p101
      %p103 = scmp.ne.s32.totalorder %s95, %s98
      %p104 = scmp.eq.s32.totalorder %s41, 0
      %p105 = por %p103, %p104
      %p106 = scmp.ne.s32.totalorder %s95, %s98
      %p107 = scmp.eq.s32.totalorder %s46, 11
      %p108 = por %p106, %p107
      %p109 = scmp.ne.s32.totalorder %s98, %s99
      %p110 = scmp.eq.s32.totalorder %s46, 0
      %p111 = por %p109, %p110
      %p112 = scmp.ne.s32.totalorder %s98, %s99
      %p113 = scmp.eq.s32.totalorder %s47, 11
      %p114 = por %p112, %p113
      %p116 = scmp.ne.s32.totalorder %s99, %s115
      %p117 = scmp.eq.s32.totalorder %s47, 0
      %p118 = por %p116, %p117
      %s119 = ssub.s32 %s49, %s56
      %s120 = ssub.s32 %s48, %s60
      %s121 = sor.u32 %s119, %s120
      %p122 = scmp.eq.s32.totalorder %s121, 0
      %s124 = sadd.s32 %s123, 1
      %s125 = scalar_select %p122, %s123, %s124
      %p128 = pneg %p122
      %p129 = scmp.eq.s32.totalorder %s41, 11
      %p130 = por %p128, %p129
      %p131 = scmp.ne.s32.totalorder %s123, %s126
      %p132 = scmp.eq.s32.totalorder %s41, 0
      %p133 = por %p131, %p132
      %p134 = scmp.ne.s32.totalorder %s123, %s126
      %p135 = scmp.eq.s32.totalorder %s46, 11
      %p136 = por %p134, %p135
      %p137 = scmp.ne.s32.totalorder %s126, %s127
      %p138 = scmp.eq.s32.totalorder %s46, 0
      %p139 = por %p137, %p138
      %p140 = scmp.ne.s32.totalorder %s126, %s127
      %p141 = scmp.eq.s32.totalorder %s47, 11
      %p142 = por %p140, %p141
      %p144 = scmp.ne.s32.totalorder %s127, %s143
      %p145 = scmp.eq.s32.totalorder %s47, 0
      %p146 = por %p144, %p145
      %s148 = sadd.s32 %s147, 1
      %p151 = scmp.eq.s32.totalorder %s41, 11
      %p152 = scmp.ne.s32.totalorder %s147, %s149
      %p153 = scmp.eq.s32.totalorder %s41, 0
      %p154 = por %p152, %p153
      %p155 = scmp.ne.s32.totalorder %s147, %s149
      %p156 = scmp.eq.s32.totalorder %s46, 11
      %p157 = por %p155, %p156
      %p158 = scmp.ne.s32.totalorder %s149, %s150
      %p159 = scmp.eq.s32.totalorder %s46, 0
      %p160 = por %p158, %p159
      %p161 = scmp.ne.s32.totalorder %s149, %s150
      %p162 = scmp.eq.s32.totalorder %s47, 11
      %p163 = por %p161, %p162
      %p165 = scmp.ne.s32.totalorder %s150, %s164
      %p166 = scmp.eq.s32.totalorder %s47, 0
      %p167 = por %p165, %p166
      %s169 = sadd.s32 %s168, 1
      %p172 = scmp.eq.s32.totalorder %s41, 11
      %p173 = scmp.ne.s32.totalorder %s168, %s170
      %p174 = scmp.eq.s32.totalorder %s41, 0
      %p175 = por %p173, %p174
      %p176 = scmp.ne.s32.totalorder %s168, %s170
      %p177 = scmp.eq.s32.totalorder %s46, 11
      %p178 = por %p176, %p177
      %p179 = scmp.ne.s32.totalorder %s170, %s171
      %p180 = scmp.eq.s32.totalorder %s46, 0
      %p181 = por %p179, %p180
      %p182 = scmp.ne.s32.totalorder %s170, %s171
      %p183 = scmp.eq.s32.totalorder %s47, 11
      %p184 = por %p182, %p183
      %p186 = scmp.ne.s32.totalorder %s171, %s185
      %p187 = scmp.eq.s32.totalorder %s47, 0
      %p188 = por %p186, %p187
      %s189 = sld [smem:[#allocation4 + %s49]]
      %s190 = sld [smem:[#allocation4 + %s56]]
      %s191 = ssub.s32 %s189, %s190
      %p192 = scmp.eq.s32.totalorder %s191, 0
      %s194 = sadd.s32 %s193, 1
      %s195 = scalar_select %p192, %s193, %s194
      %p198 = pneg %p192
      %p199 = scmp.eq.s32.totalorder %s41, 11
      %p200 = por %p198, %p199
      %p201 = scmp.ne.s32.totalorder %s193, %s196
      %p202 = scmp.eq.s32.totalorder %s41, 0
      %p203 = por %p201, %p202
      %p204 = scmp.ne.s32.totalorder %s193, %s196
      %p205 = scmp.eq.s32.totalorder %s46, 11
      %p206 = por %p204, %p205
      %p207 = scmp.ne.s32.totalorder %s196, %s197
      %p208 = scmp.eq.s32.totalorder %s46, 0
      %p209 = por %p207, %p208
      %p210 = scmp.ne.s32.totalorder %s196, %s197
      %p211 = scmp.eq.s32.totalorder %s47, 11
      %p212 = por %p210, %p211
      %p214 = scmp.ne.s32.totalorder %s197, %s213
      %p215 = scmp.eq.s32.totalorder %s47, 0
      %p216 = por %p214, %p215
      %s217 = sld [smem:[#allocation4 + %s49]]
      %s218 = sld [smem:[#allocation4 + %s56]]
      %s219 = ssub.s32 %s217, %s218
      %p220 = scmp.eq.s32.totalorder %s219, 0
      %s222 = sadd.s32 %s221, 1
      %s223 = scalar_select %p220, %s221, %s222
      %p226 = pneg %p220
      %p227 = scmp.eq.s32.totalorder %s41, 11
      %p228 = por %p226, %p227
      %p229 = scmp.ne.s32.totalorder %s221, %s224
      %p230 = scmp.eq.s32.totalorder %s41, 0
      %p231 = por %p229, %p230
      %p232 = scmp.ne.s32.totalorder %s221, %s224
      %p233 = scmp.eq.s32.totalorder %s46, 11
      %p234 = por %p232, %p233
      %p235 = scmp.ne.s32.totalorder %s224, %s225
      %p236 = scmp.eq.s32.totalorder %s46, 0
      %p237 = por %p235, %p236
      %p238 = scmp.ne.s32.totalorder %s224, %s225
      %p239 = scmp.eq.s32.totalorder %s47, 11
      %p240 = por %p238, %p239
      %p242 = scmp.ne.s32.totalorder %s225, %s241
      %p243 = scmp.eq.s32.totalorder %s47, 0
      %p244 = por %p242, %p243
      %s245 = sld [smem:[#allocation4 + %s49]]
      %s246 = sld [smem:[#allocation4 + %s56]]
      %s247 = ssub.s32 %s245, %s246
      %p248 = scmp.eq.s32.totalorder %s247, 0
      %s250 = sadd.s32 %s249, 1
      %s251 = scalar_select %p248, %s249, %s250
      %p254 = pneg %p248
      %p255 = scmp.eq.s32.totalorder %s41, 11
      %p256 = por %p254, %p255
      %p257 = scmp.ne.s32.totalorder %s249, %s252
      %p258 = scmp.eq.s32.totalorder %s41, 0
      %p259 = por %p257, %p258
      %p260 = scmp.ne.s32.totalorder %s249, %s252
      %p261 = scmp.eq.s32.totalorder %s46, 11
      %p262 = por %p260, %p261
      %p263 = scmp.ne.s32.totalorder %s252, %s253
      %p264 = scmp.eq.s32.totalorder %s46, 0
      %p265 = por %p263, %p264
      %p266 = scmp.ne.s32.totalorder %s252, %s253
      %p267 = scmp.eq.s32.totalorder %s47, 11
      %p268 = por %p266, %p267
      %p270 = scmp.ne.s32.totalorder %s253, %s269
      %p271 = scmp.eq.s32.totalorder %s47, 0
      %p272 = por %p270, %p271
      %s274 = sadd.s32 %s273, 1
      %p277 = scmp.eq.s32.totalorder %s41, 11
      %p278 = scmp.ne.s32.totalorder %s273, %s275
      %p279 = scmp.eq.s32.totalorder %s41, 0
      %p280 = por %p278, %p279
      %p281 = scmp.ne.s32.totalorder %s273, %s275
      %p282 = scmp.eq.s32.totalorder %s46, 11
      %p283 = por %p281, %p282
      %p284 = scmp.ne.s32.totalorder %s275, %s276
      %p285 = scmp.eq.s32.totalorder %s46, 0
      %p286 = por %p284, %p285
      %p287 = scmp.ne.s32.totalorder %s275, %s276
      %p288 = scmp.eq.s32.totalorder %s47, 11
      %p289 = por %p287, %p288
      %p291 = scmp.ne.s32.totalorder %s276, %s290
      %p292 = scmp.eq.s32.totalorder %s47, 0
      %p293 = por %p291, %p292
      %s295 = sadd.s32 %s294, 1
      %p298 = scmp.eq.s32.totalorder %s41, 11
      %p299 = scmp.ne.s32.totalorder %s294, %s296
      %p300 = scmp.eq.s32.totalorder %s41, 0
      %p301 = por %p299, %p300
      %p302 = scmp.ne.s32.totalorder %s294, %s296
      %p303 = scmp.eq.s32.totalorder %s46, 11
      %p304 = por %p302, %p303
      %p305 = scmp.ne.s32.totalorder %s296, %s297
      %p306 = scmp.eq.s32.totalorder %s46, 0
      %p307 = por %p305, %p306
      %p308 = scmp.ne.s32.totalorder %s296, %s297
      %p309 = scmp.eq.s32.totalorder %s47, 11
      %p310 = por %p308, %p309
      %p312 = scmp.ne.s32.totalorder %s297, %s311
      %p313 = scmp.eq.s32.totalorder %s47, 0
      %p314 = por %p312, %p313
      %s315 = sld [smem:[#allocation4 + %s49]]
      %s316 = sld [smem:[#allocation4 + %s56]]
      %s317 = ssub.s32 %s315, %s316
      %s318 = ssub.s32 %s48, %s60
      %s319 = sor.u32 %s317, %s318
      %p320 = scmp.eq.s32.totalorder %s319, 0
      %s322 = sadd.s32 %s321, 1
      %s323 = scalar_select %p320, %s321, %s322
      %p326 = pneg %p320
      %p327 = scmp.eq.s32.totalorder %s41, 11
      %p328 = por %p326, %p327
      %p329 = scmp.ne.s32.totalorder %s321, %s324
      %p330 = scmp.eq.s32.totalorder %s41, 0
      %p331 = por %p329, %p330
      %p332 = scmp.ne.s32.totalorder %s321, %s324
      %p333 = scmp.eq.s32.totalorder %s46, 11
      %p334 = por %p332, %p333
      %p335 = scmp.ne.s32.totalorder %s324, %s325
      %p336 = scmp.eq.s32.totalorder %s46, 0
      %p337 = por %p335, %p336
      %p338 = scmp.ne.s32.totalorder %s324, %s325
      %p339 = scmp.eq.s32.totalorder %s47, 11
      %p340 = por %p338, %p339
      %p342 = scmp.ne.s32.totalorder %s325, %s341
      %p343 = scmp.eq.s32.totalorder %s47, 0
      %p344 = por %p342, %p343
      %p345 = scmp.le.s32.totalorder 1, %s41
      %p346 = scmp.lt.s32.totalorder %s41, 13
      %p347 = pnand %p345, %p346
      %p348 = pneg %p347
      // Predicated region
      $region9: #{forward.3} parent=5 // pred_check
        _
      $region10: #{forward.3} parent=5 // pred_check_branch
        %350 = sbr.rel (%p347) target = $region12
      $region11: #{forward.3} parent=5 // pred_region
        %s351 = ssub.s32 %s41, 1
        // Predicated region
        $region13: #{forward.3} parent=11 // pred_check
          %p352 = pneg %p160
        $region14: #{forward.3} parent=11 // pred_check_branch
          %354 = sbr.rel (%p352) target = $region16
        $region15: #{forward.3} parent=11 // pred_region
          %s356 = ssub.s32 12288, 12288
          %357 = vsyncadd [#allocation10], %s356
          %s358 = sshll.u32 [#allocation9], 4
          %s359 = int_to_ptr.vmem [resolvable:$true] %s358
          %364 = dma.hbm_to_vmem [thread:$0]  %s7, 12288, %s359, [#allocation10], 128, 128, 8
        $region16: #{forward.3} parent=11 // pred_fallthru
          _
        // Predicated region
        $region17: #{forward.3} parent=11 // pred_check
          %p365 = pneg %p181
        $region18: #{forward.3} parent=11 // pred_check_branch
          %367 = sbr.rel (%p365) target = $region20
        $region19: #{forward.3} parent=11 // pred_region
          %s369 = ssub.s32 6144, 6144
          %370 = vsyncadd [#allocation10], %s369
          %s371 = sshll.u32 [#allocation11], 4
          %s372 = int_to_ptr.vmem [resolvable:$true] %s371
          %377 = dma.hbm_to_vmem [thread:$0]  %s8, 6144, %s372, [#allocation10], 64, 64, 4
        $region20: #{forward.3} parent=11 // pred_fallthru
          _
        // Predicated region
        $region21: #{forward.3} parent=11 // pred_check
          %p378 = pneg %p286
        $region22: #{forward.3} parent=11 // pred_check_branch
          %380 = sbr.rel (%p378) target = $region24
        $region23: #{forward.3} parent=11 // pred_region
          %s382 = ssub.s32 128, 128
          %383 = vsyncadd [#allocation16], %s382
          %s385 = sshll.u32 [#allocation17], 4
          %s386 = int_to_ptr.vmem [resolvable:$true] %s385
          %388 = dma.hbm_to_vmem [thread:$0]  %s12, 128, %s386, [#allocation16]
        $region24: #{forward.3} parent=11 // pred_fallthru
          _
        // Predicated region
        $region25: #{forward.3} parent=11 // pred_check
          %p389 = pneg %p307
        $region26: #{forward.3} parent=11 // pred_check_branch
          %391 = sbr.rel (%p389) target = $region28
        $region27: #{forward.3} parent=11 // pred_region
          %s393 = ssub.s32 1024, 1024
          %394 = vsyncadd [#allocation19], %s393
          %s395 = sshll.u32 [#allocation18], 4
          %s396 = int_to_ptr.vmem [resolvable:$true] %s395
          %401 = dma.hbm_to_vmem [thread:$0]  %s13, 1024, %s396, [#allocation19], 128, 128, 8
        $region28: #{forward.3} parent=11 // pred_fallthru
          _
      $region12: #{forward.3} parent=5 // pred_fallthru
        _
      %p402 = scmp.lt.s32.totalorder %s41, 12
      // Predicated region
      $region29: #{forward.3} parent=5 // pred_check
        %p403 = pneg %p402
      $region30: #{forward.3} parent=5 // pred_check_branch
        %405 = sbr.rel (%p403) target = $region32
      $region31: #{forward.3} parent=5 // pred_region
        // Predicated region
        $region33: #{forward.3} parent=31 // pred_check
          %p406 = pneg %p75
        $region34: #{forward.3} parent=31 // pred_check_branch
          %408 = sbr.rel (%p406) target = $region36
        $region35: #{forward.3} parent=31 // pred_region
          %s409 = sld [smem:[#allocation3 + %s49]]
          %p410 = scmp.lt.s32.totalorder %s409, 4
          %s411 = scalar_select %p410, %s409, 4
          %s412 = smul.addr %s411, 2
          %s413 = smul.addr %s412, 4
          %s414 = scalar_lea.vmem %s4, %s413
          %s415 = sld [smem:[#allocation3 + %s49]]
        $region36: #{forward.3} parent=31 // pred_fallthru
          _
        // Predicated region
        $region37: #{forward.3} parent=31 // pred_check
          %p416 = pneg %p105
        $region38: #{forward.3} parent=31 // pred_check_branch
          %418 = sbr.rel (%p416) target = $region40
        $region39: #{forward.3} parent=31 // pred_region
          %s419 = sld [smem:[#allocation4 + %s49]]
          %p420 = scmp.lt.s32.totalorder %s419, 4
          %s421 = scalar_select %p420, %s419, 4
          %p422 = scmp.lt.s32.totalorder %s48, 1
          %s423 = scalar_select %p422, %s48, 1
          %s424 = smul.addr %s421, 2
          %s425 = sadd.s32 %s423, %s424
          %s426 = smul.addr %s425, 8
          %s427 = scalar_lea.vmem %s5, %s426
          %s428 = sld [smem:[#allocation4 + %s49]]
        $region40: #{forward.3} parent=31 // pred_fallthru
          _
        // Predicated region
        $region41: #{forward.3} parent=31 // pred_check
          %p429 = pneg %p133
        $region42: #{forward.3} parent=31 // pred_check_branch
          %431 = sbr.rel (%p429) target = $region44
        $region43: #{forward.3} parent=31 // pred_region
          %s432 = sand.u32 %s123, 1
          %s433 = scalar_lea.sflag [#allocation8], %s432
          %s434 = sand.u32 %s123, 1
          %s435 = smul.addr %s434, 16
          %s436 = scalar_lea.vmem [#allocation7], %s435
          %s438 = ssub.s32 256, 256
          %439 = vsyncadd %s433, %s438
          %s440 = smul.addr %s48, 2
          %s441 = smul.addr %s49, 4
          %s442 = sadd.s32 %s440, %s441
          %s443 = smul.addr %s442, 128
          %s444 = scalar_lea.hbm %s6, %s443
          %s445 = sshll.u32 %s436, 4
          %s446 = int_to_ptr.vmem [resolvable:$true] %s445
          %451 = dma.hbm_to_vmem [thread:$0]  %s444, 256, %s446, %s433, 128, 128, 8
        $region44: #{forward.3} parent=31 // pred_fallthru
          _
        // Predicated region
        $region45: #{forward.3} parent=31 // pred_check
          %p452 = pneg %p203
        $region46: #{forward.3} parent=31 // pred_check_branch
          %454 = sbr.rel (%p452) target = $region48
        $region47: #{forward.3} parent=31 // pred_region
          %s455 = sand.u32 %s41, 1
          %s456 = scalar_lea.sflag [#allocation13], %s455
          %s457 = sand.u32 %s193, 1
          %s458 = scalar_lea.vmem [#allocation12], %s457
          %s459 = sld [smem:[#allocation4 + %s49]]
          %s461 = ssub.s32 16, 16
          %462 = vsyncadd %s456, %s461
          %s463 = smul.addr %s459, 16
          %s464 = scalar_lea.hbm %s9, %s463
          %s466 = sshll.u32 %s458, 4
          %s467 = int_to_ptr.vmem [resolvable:$true] %s466
          %469 = dma.hbm_to_vmem [thread:$0]  %s464, 16, %s467, %s456
        $region48: #{forward.3} parent=31 // pred_fallthru
          _
        // Predicated region
        $region49: #{forward.3} parent=31 // pred_check
          %p470 = pneg %p231
        $region50: #{forward.3} parent=31 // pred_check_branch
          %472 = sbr.rel (%p470) target = $region52
        $region51: #{forward.3} parent=31 // pred_region
          %s473 = sand.u32 %s41, 1
          %s474 = scalar_lea.sflag [#allocation13], %s473
          %s475 = sand.u32 %s221, 1
          %s476 = scalar_lea.vmem [#allocation14], %s475
          %s477 = sld [smem:[#allocation4 + %s49]]
          %s479 = ssub.s32 16, 16
          %480 = vsyncadd %s474, %s479
          %s481 = smul.addr %s477, 16
          %s482 = scalar_lea.hbm %s10, %s481
          %s484 = sshll.u32 %s476, 4
          %s485 = int_to_ptr.vmem [resolvable:$true] %s484
          %487 = dma.hbm_to_vmem [thread:$0]  %s482, 16, %s485, %s474
        $region52: #{forward.3} parent=31 // pred_fallthru
          _
        // Predicated region
        $region53: #{forward.3} parent=31 // pred_check
          %p488 = pneg %p259
        $region54: #{forward.3} parent=31 // pred_check_branch
          %490 = sbr.rel (%p488) target = $region56
        $region55: #{forward.3} parent=31 // pred_region
          %s491 = sand.u32 %s41, 1
          %s492 = scalar_lea.sflag [#allocation16], %s491
          %s493 = sand.u32 %s249, 1
          %s494 = scalar_lea.vmem [#allocation15], %s493
          %s495 = sld [smem:[#allocation4 + %s49]]
          %s497 = ssub.s32 16, 16
          %498 = vsyncadd %s492, %s497
          %s499 = smul.addr %s495, 16
          %s500 = scalar_lea.hbm %s11, %s499
          %s502 = sshll.u32 %s494, 4
          %s503 = int_to_ptr.vmem [resolvable:$true] %s502
          %505 = dma.hbm_to_vmem [thread:$0]  %s500, 16, %s503, %s492
        $region56: #{forward.3} parent=31 // pred_fallthru
          _
      $region32: #{forward.3} parent=5 // pred_fallthru
        _
      %p506 = scmp.le.s32.totalorder 1, %s41
      %p507 = scmp.lt.s32.totalorder %s41, 13
      %p508 = pnand %p506, %p507
      %p509 = pneg %p508
      // Predicated region
      $region57: #{forward.3} parent=5 // pred_check
        _
      $region58: #{forward.3} parent=5 // pred_check_branch
        %511 = sbr.rel (%p508) target = $region60
      $region59: #{forward.3} parent=5 // pred_region
        %s512 = ssub.s32 %s41, 1
        %s513 = sand.u32 %s126, 1
        %s514 = scalar_lea.sflag [#allocation8], %s513
        %s515 = sand.u32 %s126, 1
        %s516 = smul.addr %s515, 16
        %s517 = scalar_lea.vmem [#allocation7], %s516
        // Predicated region
        $region61: #{forward.3} parent=59 // pred_check
          %p518 = pneg %p139
        $region62: #{forward.3} parent=59 // pred_check_branch
          %520 = sbr.rel (%p518) target = $region64
        $region63: #{forward.3} parent=59 // pred_region
          %521 = dma.done %s514, 256
        $region64: #{forward.3} parent=59 // pred_fallthru
          _
        // Predicated region
        $region65: #{forward.3} parent=59 // pred_check
          %p522 = pneg %p160
        $region66: #{forward.3} parent=59 // pred_check_branch
          %524 = sbr.rel (%p522) target = $region68
        $region67: #{forward.3} parent=59 // pred_region
          %525 = dma.done [#allocation10], 12288
        $region68: #{forward.3} parent=59 // pred_fallthru
          _
        // Predicated region
        $region69: #{forward.3} parent=59 // pred_check
          %p526 = pneg %p181
        $region70: #{forward.3} parent=59 // pred_check_branch
          %528 = sbr.rel (%p526) target = $region72
        $region71: #{forward.3} parent=59 // pred_region
          %529 = dma.done [#allocation10], 6144
        $region72: #{forward.3} parent=59 // pred_fallthru
          _
        %s530 = sand.u32 %s46, 1
        %s531 = scalar_lea.sflag [#allocation13], %s530
        %s532 = sand.u32 %s196, 1
        %s533 = scalar_lea.vmem [#allocation12], %s532
        // Predicated region
        $region73: #{forward.3} parent=59 // pred_check
          %p534 = pneg %p209
        $region74: #{forward.3} parent=59 // pred_check_branch
          %536 = sbr.rel (%p534) target = $region76
        $region75: #{forward.3} parent=59 // pred_region
          %537 = dma.done %s531, 16
        $region76: #{forward.3} parent=59 // pred_fallthru
          _
        %s538 = sand.u32 %s46, 1
        %s539 = scalar_lea.sflag [#allocation13], %s538
        %s540 = sand.u32 %s224, 1
        %s541 = scalar_lea.vmem [#allocation14], %s540
        // Predicated region
        $region77: #{forward.3} parent=59 // pred_check
          %p542 = pneg %p237
        $region78: #{forward.3} parent=59 // pred_check_branch
          %544 = sbr.rel (%p542) target = $region80
        $region79: #{forward.3} parent=59 // pred_region
          %545 = dma.done %s539, 16
        $region80: #{forward.3} parent=59 // pred_fallthru
          _
        %s546 = sand.u32 %s46, 1
        %s547 = scalar_lea.sflag [#allocation16], %s546
        %s548 = sand.u32 %s252, 1
        %s549 = scalar_lea.vmem [#allocation15], %s548
        // Predicated region
        $region81: #{forward.3} parent=59 // pred_check
          %p550 = pneg %p265
        $region82: #{forward.3} parent=59 // pred_check_branch
          %552 = sbr.rel (%p550) target = $region84
        $region83: #{forward.3} parent=59 // pred_region
          %553 = dma.done %s547, 16
        $region84: #{forward.3} parent=59 // pred_fallthru
          _
        // Predicated region
        $region85: #{forward.3} parent=59 // pred_check
          %p554 = pneg %p286
        $region86: #{forward.3} parent=59 // pred_check_branch
          %556 = sbr.rel (%p554) target = $region88
        $region87: #{forward.3} parent=59 // pred_region
          %557 = dma.done [#allocation16], 128
        $region88: #{forward.3} parent=59 // pred_fallthru
          _
        // Predicated region
        $region89: #{forward.3} parent=59 // pred_check
          %p558 = pneg %p307
        $region90: #{forward.3} parent=59 // pred_check_branch
          %560 = sbr.rel (%p558) target = $region92
        $region91: #{forward.3} parent=59 // pred_region
          %561 = dma.done [#allocation19], 1024
        $region92: #{forward.3} parent=59 // pred_fallthru
          _
        %s562 = sld [smem:[#allocation3 + %s51]]
        %p563 = scmp.lt.s32.totalorder %s562, 4
        %s564 = scalar_select %p563, %s562, 4
        %s565 = smul.addr %s564, 2
        %s566 = smul.addr %s565, 4
        %s567 = scalar_lea.vmem %s4, %s566
        %p568 = pneg %p81
        %p569 = pneg %p78
        %s570 = sld [smem:[#allocation4 + %s51]]
        %p571 = scmp.lt.s32.totalorder %s570, 4
        %s572 = scalar_select %p571, %s570, 4
        %p573 = scmp.lt.s32.totalorder %s50, 1
        %s574 = scalar_select %p573, %s50, 1
        %s575 = smul.addr %s572, 2
        %s576 = sadd.s32 %s574, %s575
        %s577 = smul.addr %s576, 8
        %s578 = scalar_lea.vmem %s5, %s577
        %p579 = pneg %p111
        %p580 = pneg %p108
        %s581 = sand.u32 %s126, 1
        %s582 = scalar_lea.sflag [#allocation8], %s581
        %s583 = sand.u32 %s126, 1
        %s584 = smul.addr %s583, 16
        %s585 = scalar_lea.vmem [#allocation7], %s584
        %p586 = pneg %p139
        %p587 = pneg %p136
        %p588 = pneg %p160
        %p589 = pneg %p157
        %p590 = pneg %p181
        %p591 = pneg %p178
        %s592 = sand.u32 %s46, 1
        %s593 = scalar_lea.sflag [#allocation13], %s592
        %s594 = sand.u32 %s196, 1
        %s595 = scalar_lea.vmem [#allocation12], %s594
        %p596 = pneg %p209
        %p597 = pneg %p206
        %s598 = sand.u32 %s46, 1
        %s599 = scalar_lea.sflag [#allocation13], %s598
        %s600 = sand.u32 %s224, 1
        %s601 = scalar_lea.vmem [#allocation14], %s600
        %p602 = pneg %p237
        %p603 = pneg %p234
        %s604 = sand.u32 %s46, 1
        %s605 = scalar_lea.sflag [#allocation16], %s604
        %s606 = sand.u32 %s252, 1
        %s607 = scalar_lea.vmem [#allocation15], %s606
        %p608 = pneg %p265
        %p609 = pneg %p262
        %p610 = pneg %p286
        %p611 = pneg %p283
        %p612 = pneg %p307
        %p613 = pneg %p304
        %p614 = pneg %p337
        %p615 = pneg %p334
        %s616 = sld [smem:[#allocation4 + %s51]]
        %p617 = scmp.lt.s32.totalorder %s616, 4
        %s618 = scalar_select %p617, %s616, 4
        %p619 = scmp.lt.s32.totalorder %s50, 1
        %s620 = scalar_select %p619, %s50, 1
        %s621 = smul.addr %s618, 2
        %s622 = sadd.s32 %s620, %s621
        %s623 = smul.addr %s622, 8
        %s624 = scalar_lea.vmem %s14, %s623
        %s625 = sld [smem:[#allocation3 + %s51]]
        %p626 = scmp.lt.s32.totalorder %s625, 4
        %s627 = scalar_select %p626, %s625, 4
        %s628 = smul.addr %s627, 2
        %s629 = smul.addr %s628, 4
        %s630 = scalar_lea.vmem %s4, %s629
        %s631 = sld [smem:[#allocation3 + %s51]]
        %s632 = sld [smem:[#allocation4 + %s51]]
        %p633 = scmp.lt.s32.totalorder %s632, 4
        %s634 = scalar_select %p633, %s632, 4
        %p635 = scmp.lt.s32.totalorder %s50, 1
        %s636 = scalar_select %p635, %s50, 1
        %s637 = smul.addr %s634, 2
        %s638 = sadd.s32 %s636, %s637
        %s639 = smul.addr %s638, 8
        %s640 = scalar_lea.vmem %s5, %s639
        %s641 = sld [smem:[#allocation4 + %s51]]
        %s642 = sld [smem:[#allocation4 + %s51]]
        %s643 = sld [smem:[#allocation4 + %s51]]
        %s644 = sld [smem:[#allocation4 + %s51]]
        %s645 = sld [smem:[#allocation4 + %s51]]
        %p646 = scmp.lt.s32.totalorder %s645, 4
        %s647 = scalar_select %p646, %s645, 4
        %p648 = scmp.lt.s32.totalorder %s50, 1
        %s649 = scalar_select %p648, %s50, 1
        %s650 = smul.addr %s647, 2
        %s651 = sadd.s32 %s649, %s650
        %s652 = smul.addr %s651, 8
        %s653 = scalar_lea.vmem %s14, %s652
        %s654 = sld [smem:[#allocation4 + %s51]]
        %s656 = sld [smem:[#allocation5 + %s51]]
        %p657 = scmp.eq.s32.totalorder %s656, 1
        // Predicated region
        $region93: #{forward.3} parent=59 // pred_check
          %p658 = pneg %p657
        $region94: #{forward.3} parent=59 // pred_check_branch
          %660 = sbr.rel (%p658) target = $region96
        $region95: #{forward.3} parent=59 // pred_region
          %661 = vst [vmem:[%s653] sm:$0xff] 0.0
        $region96: #{forward.3} parent=59 // pred_fallthru
          _
        %v662 = vld [vmem:[%s630] sm:$0xf]
        %v663 = vld [vmem:[%s630 + $0x4] sm:$0xf]
        %v664 = vld [vmem:[%s640] sm:$0xff]
        %s665 = smul.u32 %s51, 32
        %s666 = smul.addr %s665, 4
        %s667 = scalar_lea.vmem [#allocation9], %s666
        %v668 = vld [vmem:[%s667] sm:$0xff]
        %v669 = vld [vmem:[%s667 + $0x8] sm:$0xff]
        %v670 = vld [vmem:[%s667 + $0x10] sm:$0xff]
        %v671 = vld [vmem:[%s667 + $0x18] sm:$0xff]
        %v672 = vld [vmem:[%s667 + $0x20] sm:$0xff]
        %v673 = vld [vmem:[%s667 + $0x28] sm:$0xff]
        %v674 = vld [vmem:[%s667 + $0x30] sm:$0xff]
        %v675 = vld [vmem:[%s667 + $0x38] sm:$0xff]
        %v676 = vld [vmem:[%s667 + $0x40] sm:$0xff]
        %v677 = vld [vmem:[%s667 + $0x48] sm:$0xff]
        %v678 = vld [vmem:[%s667 + $0x50] sm:$0xff]
        %v679 = vld [vmem:[%s667 + $0x58] sm:$0xff]
        %v680 = vld [vmem:[%s667 + $0x60] sm:$0xff]
        %v681 = vld [vmem:[%s667 + $0x68] sm:$0xff]
        %v682 = vld [vmem:[%s667 + $0x70] sm:$0xff]
        %v683 = vld [vmem:[%s667 + $0x78] sm:$0xff]
        %v686 = vunpack.c.l.b16 %v662
        %v687 = vunpack.c.l.b16 %v663
        %v688 = vpack.c.b16 %v687, %v686
        %v706 = vunpack.c.l.b16 %v668
        %v707 = vunpack.c.h.b16 %v668
        %v708 = vunpack.c.l.b16 %v669
        %v709 = vunpack.c.h.b16 %v669
        %v710 = vunpack.c.l.b16 %v670
        %v711 = vunpack.c.h.b16 %v670
        %v712 = vunpack.c.l.b16 %v671
        %v713 = vunpack.c.h.b16 %v671
        %v714 = vunpack.c.l.b16 %v672
        %v715 = vunpack.c.h.b16 %v672
        %v716 = vunpack.c.l.b16 %v673
        %v717 = vunpack.c.h.b16 %v673
        %v718 = vunpack.c.l.b16 %v674
        %v719 = vunpack.c.h.b16 %v674
        %v720 = vunpack.c.l.b16 %v675
        %v721 = vunpack.c.h.b16 %v675
        %v722 = vunpack.c.l.b16 %v676
        %v723 = vunpack.c.h.b16 %v676
        %v724 = vunpack.c.l.b16 %v677
        %v725 = vunpack.c.h.b16 %v677
        %v726 = vunpack.c.l.b16 %v678
        %v727 = vunpack.c.h.b16 %v678
        %v728 = vunpack.c.l.b16 %v679
        %v729 = vunpack.c.h.b16 %v679
        %v730 = vunpack.c.l.b16 %v680
        %v731 = vunpack.c.h.b16 %v680
        %v732 = vunpack.c.l.b16 %v681
        %v733 = vunpack.c.h.b16 %v681
        %v734 = vunpack.c.l.b16 %v682
        %v735 = vunpack.c.h.b16 %v682
        %v736 = vunpack.c.l.b16 %v683
        %v737 = vunpack.c.h.b16 %v683
        %v738 = vpack.c.b16 %v708, %v706
        %v739 = vpack.c.b16 %v709, %v707
        %v740 = vpack.c.b16 %v712, %v710
        %v741 = vpack.c.b16 %v713, %v711
        %v742 = vpack.c.b16 %v716, %v714
        %v743 = vpack.c.b16 %v717, %v715
        %v744 = vpack.c.b16 %v720, %v718
        %v745 = vpack.c.b16 %v721, %v719
        %v746 = vpack.c.b16 %v724, %v722
        %v747 = vpack.c.b16 %v725, %v723
        %v748 = vpack.c.b16 %v728, %v726
        %v749 = vpack.c.b16 %v729, %v727
        %v750 = vpack.c.b16 %v732, %v730
        %v751 = vpack.c.b16 %v733, %v731
        %v752 = vpack.c.b16 %v736, %v734
        %v753 = vpack.c.b16 %v737, %v735
        %770 = vmatprep.subr.bf16.mxu0 %v739
        %771 = vmatpush1.bf16.msra.mxu0 %v738
        %772 = vmatprep.subr.bf16.mxu0 %v741
        %773 = vmatpush1.bf16.msra.mxu0 %v740
        %774 = vmatprep.subr.bf16.mxu0 %v743
        %775 = vmatpush1.bf16.msra.mxu0 %v742
        %776 = vmatprep.subr.bf16.mxu0 %v745
        %777 = vmatpush1.bf16.msra.mxu0 %v744
        %778 = vmatprep.subr.bf16.mxu0 %v747
        %779 = vmatpush1.bf16.msra.mxu0 %v746
        %780 = vmatprep.subr.bf16.mxu0 %v749
        %781 = vmatpush1.bf16.msra.mxu0 %v748
        %782 = vmatprep.subr.bf16.mxu0 %v751
        %783 = vmatpush1.bf16.msra.mxu0 %v750
        %784 = vmatprep.subr.bf16.mxu0 %v753
        %785 = vmatpush1.bf16.msra.mxu0 %v752
        %786 = vmatprep.subr.bf16.mxu0 0
        %787 = vmatpush1.bf16.msra.mxu0 0
        %788 = vmatprep.subr.bf16.mxu0 0
        %789 = vmatpush1.bf16.msra.mxu0 0
        %790 = vmatprep.subr.bf16.mxu0 0
        %791 = vmatpush1.bf16.msra.mxu0 0
        %792 = vmatprep.subr.bf16.mxu0 0
        %793 = vmatpush1.bf16.msra.mxu0 0
        %794 = vmatprep.subr.bf16.mxu0 0
        %795 = vmatpush1.bf16.msra.mxu0 0
        %796 = vmatprep.subr.bf16.mxu0 0
        %797 = vmatpush1.bf16.msra.mxu0 0
        %798 = vmatprep.subr.bf16.mxu0 0
        %799 = vmatpush1.bf16.msra.mxu0 0
        %800 = vmatprep.subr.bf16.mxu0 0
        %801 = vmatpush1.bf16.msra.mxu0 0
        %802 = vmatprep.mubr.bf16.mxu0 0
        %803 = vmatmul.mubr.bf16.gmra.mrb[0].mxu0 %v688
        %v804 = vpop.f32.mrb[0].mxu0
        %v805 = vadd.f32 0.0, %v804
        %v806 = vpop.f32.mrb[0].mxu0
        %v807 = vadd.f32 0.0, %v806
        %v808 = vpop.f32.mrb[0].mxu0
        %v809 = vadd.f32 0.0, %v808
        %v810 = vpop.f32.mrb[0].mxu0
        %v811 = vadd.f32 0.0, %v810
        %812 = vdwg.mxu0
        %v813 = vpack.c.bf16 %v664, %v664
        %s814 = smul.u32 %s51, 16
        %s815 = smul.addr %s814, 4
        %s816 = scalar_lea.vmem [#allocation11], %s815
        %v817 = vld [vmem:[%s816] sm:$0xf]
        %v818 = vld [vmem:[%s816 + $0x4] sm:$0xf]
        %v819 = vld [vmem:[%s816 + $0x8] sm:$0xf]
        %v820 = vld [vmem:[%s816 + $0xc] sm:$0xf]
        %v821 = vld [vmem:[%s816 + $0x10] sm:$0xf]
        %v822 = vld [vmem:[%s816 + $0x14] sm:$0xf]
        %v823 = vld [vmem:[%s816 + $0x18] sm:$0xf]
        %v824 = vld [vmem:[%s816 + $0x1c] sm:$0xf]
        %v825 = vld [vmem:[%s816 + $0x20] sm:$0xf]
        %v826 = vld [vmem:[%s816 + $0x24] sm:$0xf]
        %v827 = vld [vmem:[%s816 + $0x28] sm:$0xf]
        %v828 = vld [vmem:[%s816 + $0x2c] sm:$0xf]
        %v829 = vld [vmem:[%s816 + $0x30] sm:$0xf]
        %v830 = vld [vmem:[%s816 + $0x34] sm:$0xf]
        %v831 = vld [vmem:[%s816 + $0x38] sm:$0xf]
        %v832 = vld [vmem:[%s816 + $0x3c] sm:$0xf]
        %v849 = vunpack.c.l.b16 %v817
        %v850 = vunpack.c.l.b16 %v818
        %v851 = vunpack.c.l.b16 %v819
        %v852 = vunpack.c.l.b16 %v820
        %v853 = vunpack.c.l.b16 %v821
        %v854 = vunpack.c.l.b16 %v822
        %v855 = vunpack.c.l.b16 %v823
        %v856 = vunpack.c.l.b16 %v824
        %v857 = vunpack.c.l.b16 %v825
        %v858 = vunpack.c.l.b16 %v826
        %v859 = vunpack.c.l.b16 %v827
        %v860 = vunpack.c.l.b16 %v828
        %v861 = vunpack.c.l.b16 %v829
        %v862 = vunpack.c.l.b16 %v830
        %v863 = vunpack.c.l.b16 %v831
        %v864 = vunpack.c.l.b16 %v832
        %v865 = vpack.c.b16 %v850, %v849
        %v866 = vpack.c.b16 %v852, %v851
        %v867 = vpack.c.b16 %v854, %v853
        %v868 = vpack.c.b16 %v856, %v855
        %v869 = vpack.c.b16 %v858, %v857
        %v870 = vpack.c.b16 %v860, %v859
        %v871 = vpack.c.b16 %v862, %v861
        %v872 = vpack.c.b16 %v864, %v863
        %881 = vmatprep.subr.bf16.mxu0 0
        %882 = vmatpush1.bf16.msra.mxu0 %v865
        %883 = vmatprep.subr.bf16.mxu0 0
        %884 = vmatpush1.bf16.msra.mxu0 %v866
        %885 = vmatprep.subr.bf16.mxu0 0
        %886 = vmatpush1.bf16.msra.mxu0 %v867
        %887 = vmatprep.subr.bf16.mxu0 0
        %888 = vmatpush1.bf16.msra.mxu0 %v868
        %889 = vmatprep.subr.bf16.mxu0 0
        %890 = vmatpush1.bf16.msra.mxu0 %v869
        %891 = vmatprep.subr.bf16.mxu0 0
        %892 = vmatpush1.bf16.msra.mxu0 %v870
        %893 = vmatprep.subr.bf16.mxu0 0
        %894 = vmatpush1.bf16.msra.mxu0 %v871
        %895 = vmatprep.subr.bf16.mxu0 0
        %896 = vmatpush1.bf16.msra.mxu0 %v872
        %897 = vmatprep.subr.bf16.mxu0 0
        %898 = vmatpush1.bf16.msra.mxu0 0
        %899 = vmatprep.subr.bf16.mxu0 0
        %900 = vmatpush1.bf16.msra.mxu0 0
        %901 = vmatprep.subr.bf16.mxu0 0
        %902 = vmatpush1.bf16.msra.mxu0 0
        %903 = vmatprep.subr.bf16.mxu0 0
        %904 = vmatpush1.bf16.msra.mxu0 0
        %905 = vmatprep.subr.bf16.mxu0 0
        %906 = vmatpush1.bf16.msra.mxu0 0
        %907 = vmatprep.subr.bf16.mxu0 0
        %908 = vmatpush1.bf16.msra.mxu0 0
        %909 = vmatprep.subr.bf16.mxu0 0
        %910 = vmatpush1.bf16.msra.mxu0 0
        %911 = vmatprep.subr.bf16.mxu0 0
        %912 = vmatpush1.bf16.msra.mxu0 0
        %913 = vmatprep.mubr.bf16.mxu0 0
        %914 = vmatmul.mubr.bf16.gmra.mrb[0].mxu0 %v813
        %v915 = vpop.f32.mrb[0].mxu0
        %v916 = vadd.f32 0.0, %v915
        %v917 = vpop.f32.mrb[0].mxu0
        %v918 = vpop.f32.mrb[0].mxu0
        %v919 = vpop.f32.mrb[0].mxu0
        %920 = vdwg.mxu0
        %v921 = vld [vmem:[#allocation17] sm:$0xff]
        %v922 = vmul.f32 %v916, %v921
        %v923 = vrot.slane %v922, 4
        %v924 = vadd.f32 %v922, %v923
        %v925 = vrot.slane %v924, 2
        %v926 = vadd.f32 %v924, %v925
        %v927 = vrot.slane %v926, 1
        %v928 = vadd.f32 %v926, %v927
        %v929 = vadd.f32 %v807, %v928
        %v930 = vadd.f32 %v811, %v928
        %vm931 = vcmp.gt.f32.partialorder %v929, 0.0
        %vm932 = vcmp.gt.f32.partialorder %v930, 0.0
        %v933 = vmul.f32 %v929, 0.2
        %v934 = vmul.f32 %v930, 0.2
        %v935 = vsel %vm931, %v929, %v933
        %v936 = vsel %vm932, %v930, %v934
        %v937 = vld [vmem:[%s517] sm:$0xff]
        %v938 = vld [vmem:[%s517 + $0x8] sm:$0xff]
        %v939 = vsub.f32 %v937, 1.0
        %v940 = vsub.f32 %v938, 1.0
        %v941 = vmul.f32 %v939, 1e+30
        %v942 = vmul.f32 %v940, 1e+30
        %v943 = vadd.f32 %v935, %v941
        %v944 = vadd.f32 %v936, %v942
        %v945 = vmax.f32 %v943, %v944
        %v946 = vrot.slane %v945, 4
        %v947 = vmax.f32 %v945, %v946
        %v948 = vrot.slane %v947, 2
        %v949 = vmax.f32 %v947, %v948
        %v950 = vrot.slane %v949, 1
        %v951 = vmax.f32 %v949, %v950
        %v952 = vsub.f32 %v943, %v951
        %v953 = vsub.f32 %v944, %v951
        %v954 = vmul.f32 %v952, 1.442695
        %v955 = vpow.pop %v954
        %v956 = vmul.f32 %v953, 1.442695
        %v957 = vpow.pop %v956
        %v958 = vmul.f32 %v955, %v937
        %v959 = vmul.f32 %v957, %v938
        %v960 = vadd.f32 %v958, %v959
        %v961 = vrot.slane %v960, 4
        %v962 = vadd.f32 %v960, %v961
        %v963 = vrot.slane %v962, 2
        %v964 = vadd.f32 %v962, %v963
        %v965 = vrot.slane %v964, 1
        %v966 = vadd.f32 %v964, %v965
        %vm967 = vcmp.gt.f32.partialorder %v966, 0.0
        %v968 = vsel %vm967, %v966, 1.0
        %v969 = vrcp.pop %v968
        %v970 = vmul.f32 %v958, %v969
        %v971 = vmul.f32 %v959, %v969
        %v972 = vpack.c.bf16 %v971, %v970
        %v973 = vpack.c.bf16 %v809, %v805
        %974 = vxpose.xlu0.c.b16.start [1/8] %v972, 128
        %975 = vxpose.xlu0.c.b16.cont [2/8] 0, 128
        %976 = vxpose.xlu0.c.b16.cont [3/8] 0, 128
        %977 = vxpose.xlu0.c.b16.cont [4/8] 0, 128
        %978 = vxpose.xlu0.c.b16.cont [5/8] 0, 128
        %979 = vxpose.xlu0.c.b16.cont [6/8] 0, 128
        %980 = vxpose.xlu0.c.b16.cont [7/8] 0, 128
        %981 = vxpose.xlu0.c.b16.end [8/8] 0, 128
        %v982 = vpop.trf.xlu0
        %v983 = vpop.trf.xlu0
        %v984 = vpop.trf.xlu0
        %v985 = vpop.trf.xlu0
        %v986 = vpop.trf.xlu0
        %v987 = vpop.trf.xlu0
        %v988 = vpop.trf.xlu0
        %v989 = vpop.trf.xlu0
        %vm990 = vcmask 130048
        %v992 = vsel %vm990, %v982, 0
        %v995 = vsel %vm990, %v983, 0
        %v998 = vsel %vm990, %v984, 0
        %v1001 = vsel %vm990, %v985, 0
        %1003 = vmatprep.subr.bf16.mxu0 0
        %1004 = vmatpush1.bf16.msra.mxu0 %v973
        %1005 = vmatprep.subr.bf16.mxu0 0
        %1006 = vmatpush1.bf16.msra.mxu0 0
        %1007 = vmatprep.subr.bf16.mxu0 0
        %1008 = vmatpush1.bf16.msra.mxu0 0
        %1009 = vmatprep.subr.bf16.mxu0 0
        %1010 = vmatpush1.bf16.msra.mxu0 0
        %1011 = vmatprep.subr.bf16.mxu0 0
        %1012 = vmatpush1.bf16.msra.mxu0 0
        %1013 = vmatprep.subr.bf16.mxu0 0
        %1014 = vmatpush1.bf16.msra.mxu0 0
        %1015 = vmatprep.subr.bf16.mxu0 0
        %1016 = vmatpush1.bf16.msra.mxu0 0
        %1017 = vmatprep.subr.bf16.mxu0 0
        %1018 = vmatpush1.bf16.msra.mxu0 0
        %1019 = vmatprep.subr.bf16.mxu0 0
        %1020 = vmatpush1.bf16.msra.mxu0 0
        %1021 = vmatprep.subr.bf16.mxu0 0
        %1022 = vmatpush1.bf16.msra.mxu0 0
        %1023 = vmatprep.subr.bf16.mxu0 0
        %1024 = vmatpush1.bf16.msra.mxu0 0
        %1025 = vmatprep.subr.bf16.mxu0 0
        %1026 = vmatpush1.bf16.msra.mxu0 0
        %1027 = vmatprep.subr.bf16.mxu0 0
        %1028 = vmatpush1.bf16.msra.mxu0 0
        %1029 = vmatprep.subr.bf16.mxu0 0
        %1030 = vmatpush1.bf16.msra.mxu0 0
        %1031 = vmatprep.subr.bf16.mxu0 0
        %1032 = vmatpush1.bf16.msra.mxu0 0
        %1033 = vmatprep.subr.bf16.mxu0 0
        %1034 = vmatpush1.bf16.msra.mxu0 0
        %1035 = vmatprep.mubr.bf16.mxu0 0
        %1036 = vmatmul.mubr.bf16.gmra.mrb[0].mxu0 %v992
        %v1037 = vpop.f32.mrb[0].mxu0
        %v1038 = vadd.f32 0.0, %v1037
        %v1039 = vpop.f32.mrb[0].mxu0
        %v1040 = vpop.f32.mrb[0].mxu0
        %v1041 = vadd.f32 0.0, %v1040
        %v1042 = vpop.f32.mrb[0].mxu0
        %1043 = vmatprep.mubr.bf16.mxu0 0
        %1044 = vmatmul.mubr.bf16.gmra.mrb[0].mxu0 %v995
        %v1045 = vpop.f32.mrb[0].mxu0
        %v1046 = vadd.f32 0.0, %v1045
        %v1047 = vpop.f32.mrb[0].mxu0
        %v1048 = vpop.f32.mrb[0].mxu0
        %v1049 = vadd.f32 0.0, %v1048
        %v1050 = vpop.f32.mrb[0].mxu0
        %1051 = vmatprep.mubr.bf16.mxu0 0
        %1052 = vmatmul.mubr.bf16.gmra.mrb[0].mxu0 %v998
        %v1053 = vpop.f32.mrb[0].mxu0
        %v1054 = vadd.f32 0.0, %v1053
        %v1055 = vpop.f32.mrb[0].mxu0
        %v1056 = vpop.f32.mrb[0].mxu0
        %v1057 = vadd.f32 0.0, %v1056
        %v1058 = vpop.f32.mrb[0].mxu0
        %1059 = vmatprep.mubr.bf16.mxu0 0
        %1060 = vmatmul.mubr.bf16.gmra.mrb[0].mxu0 %v1001
        %v1061 = vpop.f32.mrb[0].mxu0
        %v1062 = vadd.f32 0.0, %v1061
        %v1063 = vpop.f32.mrb[0].mxu0
        %v1064 = vpop.f32.mrb[0].mxu0
        %v1065 = vadd.f32 0.0, %v1064
        %v1066 = vpop.f32.mrb[0].mxu0
        %1067 = vdwg.mxu0
        %v1068 = vld [vmem:[#allocation18] sm:$0xff]
        %v1069 = vld [vmem:[#allocation18 + $0x8] sm:$0xff]
        %v1070 = vld [vmem:[#allocation18 + $0x10] sm:$0xff]
        %v1071 = vld [vmem:[#allocation18 + $0x18] sm:$0xff]
        %v1072 = vld [vmem:[#allocation18 + $0x20] sm:$0xff]
        %v1073 = vld [vmem:[#allocation18 + $0x28] sm:$0xff]
        %v1074 = vld [vmem:[#allocation18 + $0x30] sm:$0xff]
        %v1075 = vld [vmem:[#allocation18 + $0x38] sm:$0xff]
        %v1076 = vmul.f32 %v1038, %v1068
        %v1077 = vmul.f32 %v1041, %v1069
        %v1078 = vmul.f32 %v1046, %v1070
        %v1079 = vmul.f32 %v1049, %v1071
        %v1080 = vmul.f32 %v1054, %v1072
        %v1081 = vmul.f32 %v1057, %v1073
        %v1082 = vmul.f32 %v1062, %v1074
        %v1083 = vmul.f32 %v1065, %v1075
        %v1084 = vadd.f32 %v1076, %v1077
        %v1085 = vadd.f32 %v1084, %v1078
        %v1086 = vadd.f32 %v1085, %v1079
        %v1087 = vadd.f32 %v1086, %v1080
        %v1088 = vadd.f32 %v1087, %v1081
        %v1089 = vadd.f32 %v1088, %v1082
        %v1090 = vadd.f32 %v1089, %v1083
        %v1091 = vld [vmem:[%s653] sm:$0xff]
        %v1092 = vadd.f32 %v1091, %v1090
        %1093 = vst [vmem:[%s653] sm:$0xff] %v1092
        %s1094 = sld [smem:[#allocation6 + %s51]]
        %p1095 = scmp.eq.s32.totalorder %s1094, 1
        // Predicated region
        $region97: #{forward.3} parent=59 // pred_check
          %p1096 = pneg %p1095
        $region98: #{forward.3} parent=59 // pred_check_branch
          %1098 = sbr.rel (%p1096) target = $region100
        $region99: #{forward.3} parent=59 // pred_region
          %v1099 = vld [vmem:[%s653] sm:$0xff]
          %v1100 = vld [vmem:[%s533] sm:$0x1]
          %v1102 = vlaneseq
          %v1103 = vshrl.u32 %v1102, 7
          %v1104 = vsub.s32 0, %v1103
          %v1105 = vrot.slane %v1100, %v1104
          %v1107 = vadd.f32 %v1099, %v1105
          %v1108 = vadd.f32 %v1107, %v664
          %1109 = vadd.xlane.f32.xlu0 %v1108
          %v1110 = vpop.xlane.xlu0 %1109
          %v1111 = vrcp.pop 128.0
          %v1112 = vmul.f32 %v1110, %v1111
          %v1113 = vsub.f32 %v1108, %v1112
          %v1114 = vmul.f32 %v1113, %v1113
          %1115 = vadd.xlane.f32.xlu0 %v1114
          %v1116 = vpop.xlane.xlu0 %1115
          %v1117 = vmul.f32 %v1116, %v1111
          %v1118 = vadd.f32 %v1117, 1e-05
          %v1119 = vrsqrt.pop %v1118
          %v1120 = vmul.f32 %v1113, %v1119
          %v1121 = vld [vmem:[%s541] sm:$0x1]
          %v1123 = vlaneseq
          %v1124 = vshrl.u32 %v1123, 7
          %v1125 = vsub.s32 0, %v1124
          %v1126 = vrot.slane %v1121, %v1125
          %v1128 = vmul.f32 %v1120, %v1126
          %v1129 = vld [vmem:[%s549] sm:$0x1]
          %v1131 = vlaneseq
          %v1132 = vshrl.u32 %v1131, 7
          %v1133 = vsub.s32 0, %v1132
          %v1134 = vrot.slane %v1129, %v1133
          %v1136 = vadd.f32 %v1128, %v1134
          %v1137 = vmul.f32 %v1136, 0.5
          %v1138 = vmul.f32 %v1136, 0.044715
          %v1139 = vmul.f32 %v1138, %v1136
          %v1140 = vmul.f32 %v1139, %v1136
          %v1141 = vadd.f32 %v1136, %v1140
          %v1142 = vmul.f32 %v1141, 0.7978846
          %v1143 = vtanh.pop %v1142
          %v1144 = vadd.f32 %v1143, 1.0
          %v1145 = vmul.f32 %v1137, %v1144
          %1146 = vst [vmem:[%s653] sm:$0xff] %v1145
        $region100: #{forward.3} parent=59 // pred_fallthru
          _
        %s1147 = sld [smem:[#allocation4 + %s51]]
        %p1148 = scmp.lt.s32.totalorder %s1147, 4
        %s1149 = scalar_select %p1148, %s1147, 4
        %p1150 = scmp.lt.s32.totalorder %s50, 1
        %s1151 = scalar_select %p1150, %s50, 1
        %s1152 = smul.addr %s1149, 2
        %s1153 = sadd.s32 %s1151, %s1152
        %s1154 = smul.addr %s1153, 8
        %s1155 = scalar_lea.vmem %s14, %s1154
        // Predicated region
        $region101: #{forward.3} parent=59 // pred_check
          %p1156 = pneg %p334
        $region102: #{forward.3} parent=59 // pred_check_branch
          %1158 = sbr.rel (%p1156) target = $region104
        $region103: #{forward.3} parent=59 // pred_region
          %s1159 = sld [smem:[#allocation4 + %s51]]
        $region104: #{forward.3} parent=59 // pred_fallthru
          _
      $region60: #{forward.3} parent=5 // pred_fallthru
        _
      %p1160 = scmp.le.s32.totalorder 2, %s41
      // Predicated region
      $region105: #{forward.3} parent=5 // pred_check
        %p1161 = pneg %p1160
      $region106: #{forward.3} parent=5 // pred_check_branch
        %1163 = sbr.rel (%p1161) target = $region108
      $region107: #{forward.3} parent=5 // pred_region
        %s1164 = ssub.s32 %s41, 2
        // Predicated region
        $region109: #{forward.3} parent=107 // pred_check
          %p1165 = pneg %p340
        $region110: #{forward.3} parent=107 // pred_check_branch
          %1167 = sbr.rel (%p1165) target = $region112
        $region111: #{forward.3} parent=107 // pred_region
          %s1168 = sld [smem:[#allocation4 + %s53]]
          %p1169 = scmp.lt.s32.totalorder %s1168, 4
          %s1170 = scalar_select %p1169, %s1168, 4
          %p1171 = scmp.lt.s32.totalorder %s52, 1
          %s1172 = scalar_select %p1171, %s52, 1
          %s1173 = smul.addr %s1170, 2
          %s1174 = sadd.s32 %s1172, %s1173
          %s1175 = smul.addr %s1174, 8
          %s1176 = scalar_lea.vmem %s14, %s1175
        $region112: #{forward.3} parent=107 // pred_fallthru
          _
      $region108: #{forward.3} parent=5 // pred_fallthru
        _
    $region6: #{forward.3} parent=1 // loop_footer
      %s45 = sadd.s32 1, %s41
    $region7: #{forward.3} parent=1 // loop_footer_branch
      %40 = sbr.rel target = $region3
    $region8: #{forward.3} parent=1 // loop_exit
      _
    %1177 = vsyncpa [#allocation8], 1
    %s1178 = scalar_lea.sflag [#allocation8], 1
    %1179 = vsyncpa %s1178, 1
    %1180 = vsyncpa [#allocation10], 1
    %1181 = vsyncpa [#allocation13], 1
    %s1182 = scalar_lea.sflag [#allocation13], 1
    %1183 = vsyncpa %s1182, 1
    %1184 = vsyncpa [#allocation16], 1
    %s1185 = scalar_lea.sflag [#allocation16], 1
    %1186 = vsyncpa %s1185, 1
    %1187 = vsyncpa [#allocation19], 1

// kernel: forward.5
$region0: #{forward.5}
  #allocation0 [shape = 'u32[]', space=smem, size = 0x4, offset = 0x4, fixed_abs, tag = 'smem constant byte address 0x4 - core index']
  #allocation1 [shape = 'u32[144,128]{1,0:T(1,128)}', space=vmem, size = 0x12000, scoped, tag = 'internal scratch']
  #allocation2 [shape = 's32[1]{0}', space=sflag, size = 0x4, scoped, tag = 'scoped memory for forward.5']
  #allocation3 [shape = 'u8[512]{0}', space=smem, size = 0x200, scoped, tag = 'prefetched SMEM operand 0']
  #allocation4 [shape = 'u8[512]{0}', space=smem, size = 0x200, scoped, tag = 'prefetched SMEM operand 1']
  #allocation5 [shape = 'u8[512]{0}', space=smem, size = 0x200, scoped, tag = 'prefetched SMEM operand 2']
  #allocation6 [shape = 'u8[512]{0}', space=smem, size = 0x200, scoped, tag = 'prefetched SMEM operand 3']
  %s0 = inlined_call_operand.hbm [shape: s32[6], index: 0, kind: input, shape index: {}]
  %s1 = inlined_call_operand.hbm [shape: s32[6], index: 1, kind: input, shape index: {}]
  %s2 = inlined_call_operand.hbm [shape: s32[6], index: 2, kind: input, shape index: {}]
  %s3 = inlined_call_operand.hbm [shape: s32[6], index: 3, kind: input, shape index: {}]
  %s4 = inlined_call_operand.vmem [shape: bf16[5,16,128], index: 4, kind: input, shape index: {}]
  %s5 = inlined_call_operand.vmem [shape: f32[5,16,128], index: 5, kind: input, shape index: {}]
  %s6 = inlined_call_operand.hbm [shape: f32[6,2,16,128], index: 6, kind: input, shape index: {}]
  %s7 = inlined_call_operand.hbm [shape: bf16[6,128,256], index: 7, kind: input, shape index: {}]
  %s8 = inlined_call_operand.hbm [shape: bf16[6,128,128], index: 8, kind: input, shape index: {}]
  %s9 = inlined_call_operand.hbm [shape: f32[5,1,128], index: 9, kind: input, shape index: {}]
  %s10 = inlined_call_operand.hbm [shape: f32[5,1,128], index: 10, kind: input, shape index: {}]
  %s11 = inlined_call_operand.hbm [shape: f32[5,1,128], index: 11, kind: input, shape index: {}]
  %s12 = inlined_call_operand.hbm [shape: f32[8,128], index: 12, kind: input, shape index: {}]
  %s13 = inlined_call_operand.hbm [shape: f32[64,128], index: 13, kind: input, shape index: {}]
  %s14 = inlined_call_operand.hbm [shape: bf16[5,128,128], index: 14, kind: input, shape index: {}]
  %s15 = inlined_call_operand.hbm [shape: f32[5,1,128], index: 15, kind: input, shape index: {}]
  %s16 = inlined_call_operand.hbm [shape: f32[5,16,128], index: 16, kind: output, shape index: {}]
  %s17 = sld [smem:[#allocation0]]
  $region129: #{forward.5} parent=0
    _
  %s19 = ssub.s32 1, %s17
  %s20 = scalar_select 0, %s19, %s17
  %22 = dma.hbm_to_smem %s0, 16, [#allocation3], [#allocation2]
  %24 = dma.hbm_to_smem %s1, 16, [#allocation4], [#allocation2]
  %26 = dma.hbm_to_smem %s2, 16, [#allocation5], [#allocation2]
  %28 = dma.hbm_to_smem %s3, 16, [#allocation6], [#allocation2]
  %29 = dma.done [#allocation2], 64
  %30 = sfence
  $region1: #{forward.5} parent=0
    #allocation7 [shape = 'u8[16384]{0}', space=vmem, size = 0x4000, scoped, tag = 'input window, operand 6']
    #allocation8 [shape = 's32[2]{0}', space=sflag, size = 0x8, scoped, tag = 'scoped memory for forward.5']
    #allocation9 [shape = 's32[2]{0}', space=sflag, size = 0x8, scoped, tag = 'scoped memory for forward.5']
    #allocation10 [shape = 'u8[393216]{0}', space=vmem, size = 0x60000, scoped, tag = 'input window, operand 7, single buffered']
    #allocation11 [shape = 's32[1]{0}', space=sflag, size = 0x4, scoped, tag = 'scoped memory for forward.5']
    #allocation12 [shape = 'u8[196608]{0}', space=vmem, size = 0x30000, scoped, tag = 'input window, operand 8, single buffered']
    #allocation13 [shape = 'u8[1024]{0}', space=vmem, size = 0x400, scoped, tag = 'input window, operand 9']
    #allocation14 [shape = 's32[2]{0}', space=sflag, size = 0x8, scoped, tag = 'scoped memory for forward.5']
    #allocation15 [shape = 'u8[1024]{0}', space=vmem, size = 0x400, scoped, tag = 'input window, operand 10']
    #allocation16 [shape = 'u8[1024]{0}', space=vmem, size = 0x400, scoped, tag = 'input window, operand 11']
    #allocation17 [shape = 's32[2]{0}', space=sflag, size = 0x8, scoped, tag = 'scoped memory for forward.5']
    #allocation18 [shape = 'u8[4096]{0}', space=vmem, size = 0x1000, scoped, tag = 'input window, operand 12, single buffered']
    #allocation19 [shape = 'u8[32768]{0}', space=vmem, size = 0x8000, scoped, tag = 'input window, operand 13, single buffered']
    #allocation20 [shape = 's32[1]{0}', space=sflag, size = 0x4, scoped, tag = 'scoped memory for forward.5']
    #allocation21 [shape = 'u8[65536]{0}', space=vmem, size = 0x10000, scoped, tag = 'input window, operand 14']
    #allocation22 [shape = 'u8[1024]{0}', space=vmem, size = 0x400, scoped, tag = 'input window, operand 15']
    #allocation23 [shape = 'u8[8192]{0}', space=vmem, size = 0x2000, scoped, tag = 'output window, operand 0']
    %31 = vsyncpa [#allocation8], 0
    %s32 = scalar_lea.sflag [#allocation8], 1
    %33 = vsyncpa %s32, 0
    %34 = vsyncpa [#allocation11], 0
    %35 = vsyncpa [#allocation14], 0
    %s36 = scalar_lea.sflag [#allocation14], 1
    %37 = vsyncpa %s36, 0
    %38 = vsyncpa [#allocation17], 0
    %s39 = scalar_lea.sflag [#allocation17], 1
    %40 = vsyncpa %s39, 0
    %41 = vsyncpa [#allocation20], 0
    %42 = vsyncpa [#allocation9], 0
    %s43 = scalar_lea.sflag [#allocation9], 1
    %44 = vsyncpa %s43, 0
    loop: start=0, step=1, limit=14
    $region2: #{forward.5} parent=1 // loop_pre_header
      _
    $region3: #{forward.5} parent=1 // loop_header
      %s46 = sphi 0, %s50
      %p47 = scmp.ge.s32.totalorder %s46, 14
      %s53 = sphi 0, %s65
      %s54 = sphi 0, %s61
      %s55 = sphi 0, %s53
      %s56 = sphi 0, %s54
      %s57 = sphi 0, %s55
      %s58 = sphi 0, %s56
      %s70 = sphi 0, %s72
      %s73 = sphi 0, %s70
      %s74 = sphi 0, %s73
      %s90 = sphi 0, %s74
      %s100 = sphi 0, %s102
      %s103 = sphi 0, %s100
      %s104 = sphi 0, %s103
      %s120 = sphi 0, %s104
      %s128 = sphi 0, %s130
      %s131 = sphi 0, %s128
      %s132 = sphi 0, %s131
      %s148 = sphi 0, %s132
      %s152 = sphi 0, %s152
      %s154 = sphi 0, %s152
      %s155 = sphi 0, %s154
      %s169 = sphi 0, %s155
      %s173 = sphi 0, %s173
      %s175 = sphi 0, %s173
      %s176 = sphi 0, %s175
      %s190 = sphi 0, %s176
      %s198 = sphi 0, %s200
      %s201 = sphi 0, %s198
      %s202 = sphi 0, %s201
      %s218 = sphi 0, %s202
      %s226 = sphi 0, %s228
      %s229 = sphi 0, %s226
      %s230 = sphi 0, %s229
      %s246 = sphi 0, %s230
      %s254 = sphi 0, %s256
      %s257 = sphi 0, %s254
      %s258 = sphi 0, %s257
      %s274 = sphi 0, %s258
      %s278 = sphi 0, %s278
      %s280 = sphi 0, %s278
      %s281 = sphi 0, %s280
      %s295 = sphi 0, %s281
      %s299 = sphi 0, %s299
      %s301 = sphi 0, %s299
      %s302 = sphi 0, %s301
      %s316 = sphi 0, %s302
      %s324 = sphi 0, %s326
      %s327 = sphi 0, %s324
      %s328 = sphi 0, %s327
      %s344 = sphi 0, %s328
      %s352 = sphi 0, %s354
      %s355 = sphi 0, %s352
      %s356 = sphi 0, %s355
      %s372 = sphi 0, %s356
      %s382 = sphi 0, %s384
      %s385 = sphi 0, %s382
      %s386 = sphi 0, %s385
      %s402 = sphi 0, %s386
    $region4: #{forward.5} parent=1 // loop_header_branch
      %49 = sbr.rel (%p47) target = $region8
    $region5: #{forward.5} parent=1 // loop_body
      %s51 = ssub.s32 %s46, 1
      %s52 = ssub.s32 %s46, 2
      %s59 = sadd.s32 1, %s54
      %p60 = scmp.ge.s32.totalorder %s59, 6
      %s61 = scalar_select %p60, 0, %s59
      %s62 = sadd.s32 1, %s53
      %s63 = scalar_select %p60, %s62, %s53
      %p64 = scmp.ge.s32.totalorder %s63, 2
      %s65 = scalar_select %p64, 0, %s63
      %s66 = sld [smem:[#allocation3 + %s54]]
      %s67 = sld [smem:[#allocation3 + %s61]]
      %s68 = ssub.s32 %s66, %s67
      %p69 = scmp.eq.s32.totalorder %s68, 0
      %s71 = sadd.s32 %s70, 1
      %s72 = scalar_select %p69, %s70, %s71
      %p75 = pneg %p69
      %p76 = scmp.eq.s32.totalorder %s46, 11
      %p77 = por %p75, %p76
      %p78 = scmp.ne.s32.totalorder %s70, %s73
      %p79 = scmp.eq.s32.totalorder %s46, 0
      %p80 = por %p78, %p79
      %p81 = scmp.ne.s32.totalorder %s70, %s73
      %p82 = scmp.eq.s32.totalorder %s51, 11
      %p83 = por %p81, %p82
      %p84 = scmp.ne.s32.totalorder %s73, %s74
      %p85 = scmp.eq.s32.totalorder %s51, 0
      %p86 = por %p84, %p85
      %p87 = scmp.ne.s32.totalorder %s73, %s74
      %p88 = scmp.eq.s32.totalorder %s52, 11
      %p89 = por %p87, %p88
      %p91 = scmp.ne.s32.totalorder %s74, %s90
      %p92 = scmp.eq.s32.totalorder %s52, 0
      %p93 = por %p91, %p92
      %s94 = sld [smem:[#allocation4 + %s54]]
      %s95 = sld [smem:[#allocation4 + %s61]]
      %s96 = ssub.s32 %s94, %s95
      %s97 = ssub.s32 %s53, %s65
      %s98 = sor.u32 %s96, %s97
      %p99 = scmp.eq.s32.totalorder %s98, 0
      %s101 = sadd.s32 %s100, 1
      %s102 = scalar_select %p99, %s100, %s101
      %p105 = pneg %p99
      %p106 = scmp.eq.s32.totalorder %s46, 11
      %p107 = por %p105, %p106
      %p108 = scmp.ne.s32.totalorder %s100, %s103
      %p109 = scmp.eq.s32.totalorder %s46, 0
      %p110 = por %p108, %p109
      %p111 = scmp.ne.s32.totalorder %s100, %s103
      %p112 = scmp.eq.s32.totalorder %s51, 11
      %p113 = por %p111, %p112
      %p114 = scmp.ne.s32.totalorder %s103, %s104
      %p115 = scmp.eq.s32.totalorder %s51, 0
      %p116 = por %p114, %p115
      %p117 = scmp.ne.s32.totalorder %s103, %s104
      %p118 = scmp.eq.s32.totalorder %s52, 11
      %p119 = por %p117, %p118
      %p121 = scmp.ne.s32.totalorder %s104, %s120
      %p122 = scmp.eq.s32.totalorder %s52, 0
      %p123 = por %p121, %p122
      %s124 = ssub.s32 %s54, %s61
      %s125 = ssub.s32 %s53, %s65
      %s126 = sor.u32 %s124, %s125
      %p127 = scmp.eq.s32.totalorder %s126, 0
      %s129 = sadd.s32 %s128, 1
      %s130 = scalar_select %p127, %s128, %s129
      %p133 = pneg %p127
      %p134 = scmp.eq.s32.totalorder %s46, 11
      %p135 = por %p133, %p134
      %p136 = scmp.ne.s32.totalorder %s128, %s131
      %p137 = scmp.eq.s32.totalorder %s46, 0
      %p138 = por %p136, %p137
      %p139 = scmp.ne.s32.totalorder %s128, %s131
      %p140 = scmp.eq.s32.totalorder %s51, 11
      %p141 = por %p139, %p140
      %p142 = scmp.ne.s32.totalorder %s131, %s132
      %p143 = scmp.eq.s32.totalorder %s51, 0
      %p144 = por %p142, %p143
      %p145 = scmp.ne.s32.totalorder %s131, %s132
      %p146 = scmp.eq.s32.totalorder %s52, 11
      %p147 = por %p145, %p146
      %p149 = scmp.ne.s32.totalorder %s132, %s148
      %p150 = scmp.eq.s32.totalorder %s52, 0
      %p151 = por %p149, %p150
      %s153 = sadd.s32 %s152, 1
      %p156 = scmp.eq.s32.totalorder %s46, 11
      %p157 = scmp.ne.s32.totalorder %s152, %s154
      %p158 = scmp.eq.s32.totalorder %s46, 0
      %p159 = por %p157, %p158
      %p160 = scmp.ne.s32.totalorder %s152, %s154
      %p161 = scmp.eq.s32.totalorder %s51, 11
      %p162 = por %p160, %p161
      %p163 = scmp.ne.s32.totalorder %s154, %s155
      %p164 = scmp.eq.s32.totalorder %s51, 0
      %p165 = por %p163, %p164
      %p166 = scmp.ne.s32.totalorder %s154, %s155
      %p167 = scmp.eq.s32.totalorder %s52, 11
      %p168 = por %p166, %p167
      %p170 = scmp.ne.s32.totalorder %s155, %s169
      %p171 = scmp.eq.s32.totalorder %s52, 0
      %p172 = por %p170, %p171
      %s174 = sadd.s32 %s173, 1
      %p177 = scmp.eq.s32.totalorder %s46, 11
      %p178 = scmp.ne.s32.totalorder %s173, %s175
      %p179 = scmp.eq.s32.totalorder %s46, 0
      %p180 = por %p178, %p179
      %p181 = scmp.ne.s32.totalorder %s173, %s175
      %p182 = scmp.eq.s32.totalorder %s51, 11
      %p183 = por %p181, %p182
      %p184 = scmp.ne.s32.totalorder %s175, %s176
      %p185 = scmp.eq.s32.totalorder %s51, 0
      %p186 = por %p184, %p185
      %p187 = scmp.ne.s32.totalorder %s175, %s176
      %p188 = scmp.eq.s32.totalorder %s52, 11
      %p189 = por %p187, %p188
      %p191 = scmp.ne.s32.totalorder %s176, %s190
      %p192 = scmp.eq.s32.totalorder %s52, 0
      %p193 = por %p191, %p192
      %s194 = sld [smem:[#allocation4 + %s54]]
      %s195 = sld [smem:[#allocation4 + %s61]]
      %s196 = ssub.s32 %s194, %s195
      %p197 = scmp.eq.s32.totalorder %s196, 0
      %s199 = sadd.s32 %s198, 1
      %s200 = scalar_select %p197, %s198, %s199
      %p203 = pneg %p197
      %p204 = scmp.eq.s32.totalorder %s46, 11
      %p205 = por %p203, %p204
      %p206 = scmp.ne.s32.totalorder %s198, %s201
      %p207 = scmp.eq.s32.totalorder %s46, 0
      %p208 = por %p206, %p207
      %p209 = scmp.ne.s32.totalorder %s198, %s201
      %p210 = scmp.eq.s32.totalorder %s51, 11
      %p211 = por %p209, %p210
      %p212 = scmp.ne.s32.totalorder %s201, %s202
      %p213 = scmp.eq.s32.totalorder %s51, 0
      %p214 = por %p212, %p213
      %p215 = scmp.ne.s32.totalorder %s201, %s202
      %p216 = scmp.eq.s32.totalorder %s52, 11
      %p217 = por %p215, %p216
      %p219 = scmp.ne.s32.totalorder %s202, %s218
      %p220 = scmp.eq.s32.totalorder %s52, 0
      %p221 = por %p219, %p220
      %s222 = sld [smem:[#allocation4 + %s54]]
      %s223 = sld [smem:[#allocation4 + %s61]]
      %s224 = ssub.s32 %s222, %s223
      %p225 = scmp.eq.s32.totalorder %s224, 0
      %s227 = sadd.s32 %s226, 1
      %s228 = scalar_select %p225, %s226, %s227
      %p231 = pneg %p225
      %p232 = scmp.eq.s32.totalorder %s46, 11
      %p233 = por %p231, %p232
      %p234 = scmp.ne.s32.totalorder %s226, %s229
      %p235 = scmp.eq.s32.totalorder %s46, 0
      %p236 = por %p234, %p235
      %p237 = scmp.ne.s32.totalorder %s226, %s229
      %p238 = scmp.eq.s32.totalorder %s51, 11
      %p239 = por %p237, %p238
      %p240 = scmp.ne.s32.totalorder %s229, %s230
      %p241 = scmp.eq.s32.totalorder %s51, 0
      %p242 = por %p240, %p241
      %p243 = scmp.ne.s32.totalorder %s229, %s230
      %p244 = scmp.eq.s32.totalorder %s52, 11
      %p245 = por %p243, %p244
      %p247 = scmp.ne.s32.totalorder %s230, %s246
      %p248 = scmp.eq.s32.totalorder %s52, 0
      %p249 = por %p247, %p248
      %s250 = sld [smem:[#allocation4 + %s54]]
      %s251 = sld [smem:[#allocation4 + %s61]]
      %s252 = ssub.s32 %s250, %s251
      %p253 = scmp.eq.s32.totalorder %s252, 0
      %s255 = sadd.s32 %s254, 1
      %s256 = scalar_select %p253, %s254, %s255
      %p259 = pneg %p253
      %p260 = scmp.eq.s32.totalorder %s46, 11
      %p261 = por %p259, %p260
      %p262 = scmp.ne.s32.totalorder %s254, %s257
      %p263 = scmp.eq.s32.totalorder %s46, 0
      %p264 = por %p262, %p263
      %p265 = scmp.ne.s32.totalorder %s254, %s257
      %p266 = scmp.eq.s32.totalorder %s51, 11
      %p267 = por %p265, %p266
      %p268 = scmp.ne.s32.totalorder %s257, %s258
      %p269 = scmp.eq.s32.totalorder %s51, 0
      %p270 = por %p268, %p269
      %p271 = scmp.ne.s32.totalorder %s257, %s258
      %p272 = scmp.eq.s32.totalorder %s52, 11
      %p273 = por %p271, %p272
      %p275 = scmp.ne.s32.totalorder %s258, %s274
      %p276 = scmp.eq.s32.totalorder %s52, 0
      %p277 = por %p275, %p276
      %s279 = sadd.s32 %s278, 1
      %p282 = scmp.eq.s32.totalorder %s46, 11
      %p283 = scmp.ne.s32.totalorder %s278, %s280
      %p284 = scmp.eq.s32.totalorder %s46, 0
      %p285 = por %p283, %p284
      %p286 = scmp.ne.s32.totalorder %s278, %s280
      %p287 = scmp.eq.s32.totalorder %s51, 11
      %p288 = por %p286, %p287
      %p289 = scmp.ne.s32.totalorder %s280, %s281
      %p290 = scmp.eq.s32.totalorder %s51, 0
      %p291 = por %p289, %p290
      %p292 = scmp.ne.s32.totalorder %s280, %s281
      %p293 = scmp.eq.s32.totalorder %s52, 11
      %p294 = por %p292, %p293
      %p296 = scmp.ne.s32.totalorder %s281, %s295
      %p297 = scmp.eq.s32.totalorder %s52, 0
      %p298 = por %p296, %p297
      %s300 = sadd.s32 %s299, 1
      %p303 = scmp.eq.s32.totalorder %s46, 11
      %p304 = scmp.ne.s32.totalorder %s299, %s301
      %p305 = scmp.eq.s32.totalorder %s46, 0
      %p306 = por %p304, %p305
      %p307 = scmp.ne.s32.totalorder %s299, %s301
      %p308 = scmp.eq.s32.totalorder %s51, 11
      %p309 = por %p307, %p308
      %p310 = scmp.ne.s32.totalorder %s301, %s302
      %p311 = scmp.eq.s32.totalorder %s51, 0
      %p312 = por %p310, %p311
      %p313 = scmp.ne.s32.totalorder %s301, %s302
      %p314 = scmp.eq.s32.totalorder %s52, 11
      %p315 = por %p313, %p314
      %p317 = scmp.ne.s32.totalorder %s302, %s316
      %p318 = scmp.eq.s32.totalorder %s52, 0
      %p319 = por %p317, %p318
      %s320 = sld [smem:[#allocation4 + %s54]]
      %s321 = sld [smem:[#allocation4 + %s61]]
      %s322 = ssub.s32 %s320, %s321
      %p323 = scmp.eq.s32.totalorder %s322, 0
      %s325 = sadd.s32 %s324, 1
      %s326 = scalar_select %p323, %s324, %s325
      %p329 = pneg %p323
      %p330 = scmp.eq.s32.totalorder %s46, 11
      %p331 = por %p329, %p330
      %p332 = scmp.ne.s32.totalorder %s324, %s327
      %p333 = scmp.eq.s32.totalorder %s46, 0
      %p334 = por %p332, %p333
      %p335 = scmp.ne.s32.totalorder %s324, %s327
      %p336 = scmp.eq.s32.totalorder %s51, 11
      %p337 = por %p335, %p336
      %p338 = scmp.ne.s32.totalorder %s327, %s328
      %p339 = scmp.eq.s32.totalorder %s51, 0
      %p340 = por %p338, %p339
      %p341 = scmp.ne.s32.totalorder %s327, %s328
      %p342 = scmp.eq.s32.totalorder %s52, 11
      %p343 = por %p341, %p342
      %p345 = scmp.ne.s32.totalorder %s328, %s344
      %p346 = scmp.eq.s32.totalorder %s52, 0
      %p347 = por %p345, %p346
      %s348 = sld [smem:[#allocation4 + %s54]]
      %s349 = sld [smem:[#allocation4 + %s61]]
      %s350 = ssub.s32 %s348, %s349
      %p351 = scmp.eq.s32.totalorder %s350, 0
      %s353 = sadd.s32 %s352, 1
      %s354 = scalar_select %p351, %s352, %s353
      %p357 = pneg %p351
      %p358 = scmp.eq.s32.totalorder %s46, 11
      %p359 = por %p357, %p358
      %p360 = scmp.ne.s32.totalorder %s352, %s355
      %p361 = scmp.eq.s32.totalorder %s46, 0
      %p362 = por %p360, %p361
      %p363 = scmp.ne.s32.totalorder %s352, %s355
      %p364 = scmp.eq.s32.totalorder %s51, 11
      %p365 = por %p363, %p364
      %p366 = scmp.ne.s32.totalorder %s355, %s356
      %p367 = scmp.eq.s32.totalorder %s51, 0
      %p368 = por %p366, %p367
      %p369 = scmp.ne.s32.totalorder %s355, %s356
      %p370 = scmp.eq.s32.totalorder %s52, 11
      %p371 = por %p369, %p370
      %p373 = scmp.ne.s32.totalorder %s356, %s372
      %p374 = scmp.eq.s32.totalorder %s52, 0
      %p375 = por %p373, %p374
      %s376 = sld [smem:[#allocation4 + %s54]]
      %s377 = sld [smem:[#allocation4 + %s61]]
      %s378 = ssub.s32 %s376, %s377
      %s379 = ssub.s32 %s53, %s65
      %s380 = sor.u32 %s378, %s379
      %p381 = scmp.eq.s32.totalorder %s380, 0
      %s383 = sadd.s32 %s382, 1
      %s384 = scalar_select %p381, %s382, %s383
      %p387 = pneg %p381
      %p388 = scmp.eq.s32.totalorder %s46, 11
      %p389 = por %p387, %p388
      %p390 = scmp.ne.s32.totalorder %s382, %s385
      %p391 = scmp.eq.s32.totalorder %s46, 0
      %p392 = por %p390, %p391
      %p393 = scmp.ne.s32.totalorder %s382, %s385
      %p394 = scmp.eq.s32.totalorder %s51, 11
      %p395 = por %p393, %p394
      %p396 = scmp.ne.s32.totalorder %s385, %s386
      %p397 = scmp.eq.s32.totalorder %s51, 0
      %p398 = por %p396, %p397
      %p399 = scmp.ne.s32.totalorder %s385, %s386
      %p400 = scmp.eq.s32.totalorder %s52, 11
      %p401 = por %p399, %p400
      %p403 = scmp.ne.s32.totalorder %s386, %s402
      %p404 = scmp.eq.s32.totalorder %s52, 0
      %p405 = por %p403, %p404
      %p406 = scmp.le.s32.totalorder 1, %s46
      %p407 = scmp.lt.s32.totalorder %s46, 13
      %p408 = pnand %p406, %p407
      %p409 = pneg %p408
      // Predicated region
      $region9: #{forward.5} parent=5 // pred_check
        _
      $region10: #{forward.5} parent=5 // pred_check_branch
        %411 = sbr.rel (%p408) target = $region12
      $region11: #{forward.5} parent=5 // pred_region
        %s412 = ssub.s32 %s46, 1
        // Predicated region
        $region13: #{forward.5} parent=11 // pred_check
          %p413 = pneg %p165
        $region14: #{forward.5} parent=11 // pred_check_branch
          %415 = sbr.rel (%p413) target = $region16
        $region15: #{forward.5} parent=11 // pred_region
          %s417 = ssub.s32 12288, 12288
          %418 = vsyncadd [#allocation11], %s417
          %s419 = sshll.u32 [#allocation10], 4
          %s420 = int_to_ptr.vmem [resolvable:$true] %s419
          %425 = dma.hbm_to_vmem [thread:$0]  %s7, 12288, %s420, [#allocation11], 128, 128, 8
        $region16: #{forward.5} parent=11 // pred_fallthru
          _
        // Predicated region
        $region17: #{forward.5} parent=11 // pred_check
          %p426 = pneg %p186
        $region18: #{forward.5} parent=11 // pred_check_branch
          %428 = sbr.rel (%p426) target = $region20
        $region19: #{forward.5} parent=11 // pred_region
          %s430 = ssub.s32 6144, 6144
          %431 = vsyncadd [#allocation11], %s430
          %s432 = sshll.u32 [#allocation12], 4
          %s433 = int_to_ptr.vmem [resolvable:$true] %s432
          %438 = dma.hbm_to_vmem [thread:$0]  %s8, 6144, %s433, [#allocation11], 64, 64, 4
        $region20: #{forward.5} parent=11 // pred_fallthru
          _
        // Predicated region
        $region21: #{forward.5} parent=11 // pred_check
          %p439 = pneg %p291
        $region22: #{forward.5} parent=11 // pred_check_branch
          %441 = sbr.rel (%p439) target = $region24
        $region23: #{forward.5} parent=11 // pred_region
          %s443 = ssub.s32 128, 128
          %444 = vsyncadd [#allocation17], %s443
          %s446 = sshll.u32 [#allocation18], 4
          %s447 = int_to_ptr.vmem [resolvable:$true] %s446
          %449 = dma.hbm_to_vmem [thread:$0]  %s12, 128, %s447, [#allocation17]
        $region24: #{forward.5} parent=11 // pred_fallthru
          _
        // Predicated region
        $region25: #{forward.5} parent=11 // pred_check
          %p450 = pneg %p312
        $region26: #{forward.5} parent=11 // pred_check_branch
          %452 = sbr.rel (%p450) target = $region28
        $region27: #{forward.5} parent=11 // pred_region
          %s454 = ssub.s32 1024, 1024
          %455 = vsyncadd [#allocation20], %s454
          %s456 = sshll.u32 [#allocation19], 4
          %s457 = int_to_ptr.vmem [resolvable:$true] %s456
          %462 = dma.hbm_to_vmem [thread:$0]  %s13, 1024, %s457, [#allocation20], 128, 128, 8
        $region28: #{forward.5} parent=11 // pred_fallthru
          _
      $region12: #{forward.5} parent=5 // pred_fallthru
        _
      %p463 = scmp.lt.s32.totalorder %s46, 12
      // Predicated region
      $region29: #{forward.5} parent=5 // pred_check
        %p464 = pneg %p463
      $region30: #{forward.5} parent=5 // pred_check_branch
        %466 = sbr.rel (%p464) target = $region32
      $region31: #{forward.5} parent=5 // pred_region
        // Predicated region
        $region33: #{forward.5} parent=31 // pred_check
          %p467 = pneg %p80
        $region34: #{forward.5} parent=31 // pred_check_branch
          %469 = sbr.rel (%p467) target = $region36
        $region35: #{forward.5} parent=31 // pred_region
          %s470 = sld [smem:[#allocation3 + %s54]]
          %p471 = scmp.lt.s32.totalorder %s470, 4
          %s472 = scalar_select %p471, %s470, 4
          %s473 = smul.addr %s472, 2
          %s474 = smul.addr %s473, 4
          %s475 = scalar_lea.vmem %s4, %s474
          %s476 = sld [smem:[#allocation3 + %s54]]
        $region36: #{forward.5} parent=31 // pred_fallthru
          _
        // Predicated region
        $region37: #{forward.5} parent=31 // pred_check
          %p477 = pneg %p110
        $region38: #{forward.5} parent=31 // pred_check_branch
          %479 = sbr.rel (%p477) target = $region40
        $region39: #{forward.5} parent=31 // pred_region
          %s480 = sld [smem:[#allocation4 + %s54]]
          %p481 = scmp.lt.s32.totalorder %s480, 4
          %s482 = scalar_select %p481, %s480, 4
          %p483 = scmp.lt.s32.totalorder %s53, 1
          %s484 = scalar_select %p483, %s53, 1
          %s485 = smul.addr %s482, 2
          %s486 = sadd.s32 %s484, %s485
          %s487 = smul.addr %s486, 8
          %s488 = scalar_lea.vmem %s5, %s487
          %s489 = sld [smem:[#allocation4 + %s54]]
        $region40: #{forward.5} parent=31 // pred_fallthru
          _
        // Predicated region
        $region41: #{forward.5} parent=31 // pred_check
          %p490 = pneg %p138
        $region42: #{forward.5} parent=31 // pred_check_branch
          %492 = sbr.rel (%p490) target = $region44
        $region43: #{forward.5} parent=31 // pred_region
          %s493 = sand.u32 %s46, 1
          %s494 = scalar_lea.sflag [#allocation8], %s493
          %s495 = sand.u32 %s128, 1
          %s496 = smul.addr %s495, 16
          %s497 = scalar_lea.vmem [#allocation7], %s496
          %s499 = ssub.s32 256, 256
          %500 = vsyncadd %s494, %s499
          %s501 = smul.addr %s53, 2
          %s502 = smul.addr %s54, 4
          %s503 = sadd.s32 %s501, %s502
          %s504 = smul.addr %s503, 128
          %s505 = scalar_lea.hbm %s6, %s504
          %s506 = sshll.u32 %s497, 4
          %s507 = int_to_ptr.vmem [resolvable:$true] %s506
          %512 = dma.hbm_to_vmem [thread:$0]  %s505, 256, %s507, %s494, 128, 128, 8
        $region44: #{forward.5} parent=31 // pred_fallthru
          _
        // Predicated region
        $region45: #{forward.5} parent=31 // pred_check
          %p513 = pneg %p208
        $region46: #{forward.5} parent=31 // pred_check_branch
          %515 = sbr.rel (%p513) target = $region48
        $region47: #{forward.5} parent=31 // pred_region
          %s516 = sand.u32 %s46, 1
          %s517 = scalar_lea.sflag [#allocation14], %s516
          %s518 = sand.u32 %s198, 1
          %s519 = scalar_lea.vmem [#allocation13], %s518
          %s520 = sld [smem:[#allocation4 + %s54]]
          %s522 = ssub.s32 16, 16
          %523 = vsyncadd %s517, %s522
          %s524 = smul.addr %s520, 16
          %s525 = scalar_lea.hbm %s9, %s524
          %s527 = sshll.u32 %s519, 4
          %s528 = int_to_ptr.vmem [resolvable:$true] %s527
          %530 = dma.hbm_to_vmem [thread:$0]  %s525, 16, %s528, %s517
        $region48: #{forward.5} parent=31 // pred_fallthru
          _
        // Predicated region
        $region49: #{forward.5} parent=31 // pred_check
          %p531 = pneg %p236
        $region50: #{forward.5} parent=31 // pred_check_branch
          %533 = sbr.rel (%p531) target = $region52
        $region51: #{forward.5} parent=31 // pred_region
          %s534 = sand.u32 %s46, 1
          %s535 = scalar_lea.sflag [#allocation14], %s534
          %s536 = sand.u32 %s226, 1
          %s537 = scalar_lea.vmem [#allocation15], %s536
          %s538 = sld [smem:[#allocation4 + %s54]]
          %s540 = ssub.s32 16, 16
          %541 = vsyncadd %s535, %s540
          %s542 = smul.addr %s538, 16
          %s543 = scalar_lea.hbm %s10, %s542
          %s545 = sshll.u32 %s537, 4
          %s546 = int_to_ptr.vmem [resolvable:$true] %s545
          %548 = dma.hbm_to_vmem [thread:$0]  %s543, 16, %s546, %s535
        $region52: #{forward.5} parent=31 // pred_fallthru
          _
        // Predicated region
        $region53: #{forward.5} parent=31 // pred_check
          %p549 = pneg %p264
        $region54: #{forward.5} parent=31 // pred_check_branch
          %551 = sbr.rel (%p549) target = $region56
        $region55: #{forward.5} parent=31 // pred_region
          %s552 = sand.u32 %s46, 1
          %s553 = scalar_lea.sflag [#allocation17], %s552
          %s554 = sand.u32 %s254, 1
          %s555 = scalar_lea.vmem [#allocation16], %s554
          %s556 = sld [smem:[#allocation4 + %s54]]
          %s558 = ssub.s32 16, 16
          %559 = vsyncadd %s553, %s558
          %s560 = smul.addr %s556, 16
          %s561 = scalar_lea.hbm %s11, %s560
          %s563 = sshll.u32 %s555, 4
          %s564 = int_to_ptr.vmem [resolvable:$true] %s563
          %566 = dma.hbm_to_vmem [thread:$0]  %s561, 16, %s564, %s553
        $region56: #{forward.5} parent=31 // pred_fallthru
          _
        // Predicated region
        $region57: #{forward.5} parent=31 // pred_check
          %p567 = pneg %p334
        $region58: #{forward.5} parent=31 // pred_check_branch
          %569 = sbr.rel (%p567) target = $region60
        $region59: #{forward.5} parent=31 // pred_region
          %s570 = sand.u32 %s46, 1
          %s571 = scalar_lea.sflag [#allocation8], %s570
          %s572 = sand.u32 %s324, 1
          %s573 = smul.addr %s572, 64
          %s574 = scalar_lea.vmem [#allocation21], %s573
          %s575 = sld [smem:[#allocation4 + %s54]]
          %s577 = ssub.s32 1024, 1024
          %578 = vsyncadd %s571, %s577
          %s579 = smul.addr %s575, 16
          %s580 = smul.addr %s579, 64
          %s581 = scalar_lea.hbm %s14, %s580
          %s582 = sshll.u32 %s574, 4
          %s583 = int_to_ptr.vmem [resolvable:$true] %s582
          %588 = dma.hbm_to_vmem [thread:$0]  %s581, 1024, %s583, %s571, 64, 64, 4
        $region60: #{forward.5} parent=31 // pred_fallthru
          _
        // Predicated region
        $region61: #{forward.5} parent=31 // pred_check
          %p589 = pneg %p362
        $region62: #{forward.5} parent=31 // pred_check_branch
          %591 = sbr.rel (%p589) target = $region64
        $region63: #{forward.5} parent=31 // pred_region
          %s592 = sand.u32 %s46, 1
          %s593 = scalar_lea.sflag [#allocation14], %s592
          %s594 = sand.u32 %s352, 1
          %s595 = scalar_lea.vmem [#allocation22], %s594
          %s596 = sld [smem:[#allocation4 + %s54]]
          %s598 = ssub.s32 16, 16
          %599 = vsyncadd %s593, %s598
          %s600 = smul.addr %s596, 16
          %s601 = scalar_lea.hbm %s15, %s600
          %s603 = sshll.u32 %s595, 4
          %s604 = int_to_ptr.vmem [resolvable:$true] %s603
          %606 = dma.hbm_to_vmem [thread:$0]  %s601, 16, %s604, %s593
        $region64: #{forward.5} parent=31 // pred_fallthru
          _
      $region32: #{forward.5} parent=5 // pred_fallthru
        _
      %p607 = scmp.le.s32.totalorder 1, %s46
      %p608 = scmp.lt.s32.totalorder %s46, 13
      %p609 = pnand %p607, %p608
      %p610 = pneg %p609
      // Predicated region
      $region65: #{forward.5} parent=5 // pred_check
        _
      $region66: #{forward.5} parent=5 // pred_check_branch
        %612 = sbr.rel (%p609) target = $region68
      $region67: #{forward.5} parent=5 // pred_region
        %s613 = ssub.s32 %s46, 1
        %s614 = sand.u32 %s51, 1
        %s615 = scalar_lea.sflag [#allocation8], %s614
        %s616 = sand.u32 %s131, 1
        %s617 = smul.addr %s616, 16
        %s618 = scalar_lea.vmem [#allocation7], %s617
        // Predicated region
        $region69: #{forward.5} parent=67 // pred_check
          %p619 = pneg %p144
        $region70: #{forward.5} parent=67 // pred_check_branch
          %621 = sbr.rel (%p619) target = $region72
        $region71: #{forward.5} parent=67 // pred_region
          %622 = dma.done %s615, 256
        $region72: #{forward.5} parent=67 // pred_fallthru
          _
        // Predicated region
        $region73: #{forward.5} parent=67 // pred_check
          %p623 = pneg %p165
        $region74: #{forward.5} parent=67 // pred_check_branch
          %625 = sbr.rel (%p623) target = $region76
        $region75: #{forward.5} parent=67 // pred_region
          %626 = dma.done [#allocation11], 12288
        $region76: #{forward.5} parent=67 // pred_fallthru
          _
        // Predicated region
        $region77: #{forward.5} parent=67 // pred_check
          %p627 = pneg %p186
        $region78: #{forward.5} parent=67 // pred_check_branch
          %629 = sbr.rel (%p627) target = $region80
        $region79: #{forward.5} parent=67 // pred_region
          %630 = dma.done [#allocation11], 6144
        $region80: #{forward.5} parent=67 // pred_fallthru
          _
        %s631 = sand.u32 %s51, 1
        %s632 = scalar_lea.sflag [#allocation14], %s631
        %s633 = sand.u32 %s201, 1
        %s634 = scalar_lea.vmem [#allocation13], %s633
        // Predicated region
        $region81: #{forward.5} parent=67 // pred_check
          %p635 = pneg %p214
        $region82: #{forward.5} parent=67 // pred_check_branch
          %637 = sbr.rel (%p635) target = $region84
        $region83: #{forward.5} parent=67 // pred_region
          %638 = dma.done %s632, 16
        $region84: #{forward.5} parent=67 // pred_fallthru
          _
        %s639 = sand.u32 %s51, 1
        %s640 = scalar_lea.sflag [#allocation14], %s639
        %s641 = sand.u32 %s229, 1
        %s642 = scalar_lea.vmem [#allocation15], %s641
        // Predicated region
        $region85: #{forward.5} parent=67 // pred_check
          %p643 = pneg %p242
        $region86: #{forward.5} parent=67 // pred_check_branch
          %645 = sbr.rel (%p643) target = $region88
        $region87: #{forward.5} parent=67 // pred_region
          %646 = dma.done %s640, 16
        $region88: #{forward.5} parent=67 // pred_fallthru
          _
        %s647 = sand.u32 %s51, 1
        %s648 = scalar_lea.sflag [#allocation17], %s647
        %s649 = sand.u32 %s257, 1
        %s650 = scalar_lea.vmem [#allocation16], %s649
        // Predicated region
        $region89: #{forward.5} parent=67 // pred_check
          %p651 = pneg %p270
        $region90: #{forward.5} parent=67 // pred_check_branch
          %653 = sbr.rel (%p651) target = $region92
        $region91: #{forward.5} parent=67 // pred_region
          %654 = dma.done %s648, 16
        $region92: #{forward.5} parent=67 // pred_fallthru
          _
        // Predicated region
        $region93: #{forward.5} parent=67 // pred_check
          %p655 = pneg %p291
        $region94: #{forward.5} parent=67 // pred_check_branch
          %657 = sbr.rel (%p655) target = $region96
        $region95: #{forward.5} parent=67 // pred_region
          %658 = dma.done [#allocation17], 128
        $region96: #{forward.5} parent=67 // pred_fallthru
          _
        // Predicated region
        $region97: #{forward.5} parent=67 // pred_check
          %p659 = pneg %p312
        $region98: #{forward.5} parent=67 // pred_check_branch
          %661 = sbr.rel (%p659) target = $region100
        $region99: #{forward.5} parent=67 // pred_region
          %662 = dma.done [#allocation20], 1024
        $region100: #{forward.5} parent=67 // pred_fallthru
          _
        %s663 = sand.u32 %s51, 1
        %s664 = scalar_lea.sflag [#allocation8], %s663
        %s665 = sand.u32 %s327, 1
        %s666 = smul.addr %s665, 64
        %s667 = scalar_lea.vmem [#allocation21], %s666
        // Predicated region
        $region101: #{forward.5} parent=67 // pred_check
          %p668 = pneg %p340
        $region102: #{forward.5} parent=67 // pred_check_branch
          %670 = sbr.rel (%p668) target = $region104
        $region103: #{forward.5} parent=67 // pred_region
          %671 = dma.done %s664, 1024
        $region104: #{forward.5} parent=67 // pred_fallthru
          _
        %s672 = sand.u32 %s51, 1
        %s673 = scalar_lea.sflag [#allocation14], %s672
        %s674 = sand.u32 %s355, 1
        %s675 = scalar_lea.vmem [#allocation22], %s674
        // Predicated region
        $region105: #{forward.5} parent=67 // pred_check
          %p676 = pneg %p368
        $region106: #{forward.5} parent=67 // pred_check_branch
          %678 = sbr.rel (%p676) target = $region108
        $region107: #{forward.5} parent=67 // pred_region
          %679 = dma.done %s673, 16
        $region108: #{forward.5} parent=67 // pred_fallthru
          _
        %s680 = sld [smem:[#allocation3 + %s56]]
        %p681 = scmp.lt.s32.totalorder %s680, 4
        %s682 = scalar_select %p681, %s680, 4
        %s683 = smul.addr %s682, 2
        %s684 = smul.addr %s683, 4
        %s685 = scalar_lea.vmem %s4, %s684
        %p686 = pneg %p86
        %p687 = pneg %p83
        %s688 = sld [smem:[#allocation4 + %s56]]
        %p689 = scmp.lt.s32.totalorder %s688, 4
        %s690 = scalar_select %p689, %s688, 4
        %p691 = scmp.lt.s32.totalorder %s55, 1
        %s692 = scalar_select %p691, %s55, 1
        %s693 = smul.addr %s690, 2
        %s694 = sadd.s32 %s692, %s693
        %s695 = smul.addr %s694, 8
        %s696 = scalar_lea.vmem %s5, %s695
        %p697 = pneg %p116
        %p698 = pneg %p113
        %s699 = sand.u32 %s51, 1
        %s700 = scalar_lea.sflag [#allocation8], %s699
        %s701 = sand.u32 %s131, 1
        %s702 = smul.addr %s701, 16
        %s703 = scalar_lea.vmem [#allocation7], %s702
        %p704 = pneg %p144
        %p705 = pneg %p141
        %p706 = pneg %p165
        %p707 = pneg %p162
        %p708 = pneg %p186
        %p709 = pneg %p183
        %s710 = sand.u32 %s51, 1
        %s711 = scalar_lea.sflag [#allocation14], %s710
        %s712 = sand.u32 %s201, 1
        %s713 = scalar_lea.vmem [#allocation13], %s712
        %p714 = pneg %p214
        %p715 = pneg %p211
        %s716 = sand.u32 %s51, 1
        %s717 = scalar_lea.sflag [#allocation14], %s716
        %s718 = sand.u32 %s229, 1
        %s719 = scalar_lea.vmem [#allocation15], %s718
        %p720 = pneg %p242
        %p721 = pneg %p239
        %s722 = sand.u32 %s51, 1
        %s723 = scalar_lea.sflag [#allocation17], %s722
        %s724 = sand.u32 %s257, 1
        %s725 = scalar_lea.vmem [#allocation16], %s724
        %p726 = pneg %p270
        %p727 = pneg %p267
        %p728 = pneg %p291
        %p729 = pneg %p288
        %p730 = pneg %p312
        %p731 = pneg %p309
        %s732 = sand.u32 %s51, 1
        %s733 = scalar_lea.sflag [#allocation8], %s732
        %s734 = sand.u32 %s327, 1
        %s735 = smul.addr %s734, 64
        %s736 = scalar_lea.vmem [#allocation21], %s735
        %p737 = pneg %p340
        %p738 = pneg %p337
        %s739 = sand.u32 %s51, 1
        %s740 = scalar_lea.sflag [#allocation14], %s739
        %s741 = sand.u32 %s355, 1
        %s742 = scalar_lea.vmem [#allocation22], %s741
        %p743 = pneg %p368
        %p744 = pneg %p365
        %p745 = pneg %p398
        %p746 = pneg %p395
        %s747 = sand.u32 %s385, 1
        %s748 = scalar_lea.sflag [#allocation9], %s747
        %s749 = sand.u32 %s385, 1
        %s750 = smul.addr %s749, 8
        %s751 = scalar_lea.vmem [#allocation23], %s750
        %s752 = sld [smem:[#allocation3 + %s56]]
        %p753 = scmp.lt.s32.totalorder %s752, 4
        %s754 = scalar_select %p753, %s752, 4
        %s755 = smul.addr %s754, 2
        %s756 = smul.addr %s755, 4
        %s757 = scalar_lea.vmem %s4, %s756
        %s758 = sld [smem:[#allocation3 + %s56]]
        %s759 = sld [smem:[#allocation4 + %s56]]
        %p760 = scmp.lt.s32.totalorder %s759, 4
        %s761 = scalar_select %p760, %s759, 4
        %p762 = scmp.lt.s32.totalorder %s55, 1
        %s763 = scalar_select %p762, %s55, 1
        %s764 = smul.addr %s761, 2
        %s765 = sadd.s32 %s763, %s764
        %s766 = smul.addr %s765, 8
        %s767 = scalar_lea.vmem %s5, %s766
        %s768 = sld [smem:[#allocation4 + %s56]]
        %s769 = sld [smem:[#allocation4 + %s56]]
        %s770 = sld [smem:[#allocation4 + %s56]]
        %s771 = sld [smem:[#allocation4 + %s56]]
        %s772 = sld [smem:[#allocation4 + %s56]]
        %s773 = sld [smem:[#allocation4 + %s56]]
        %s774 = sld [smem:[#allocation4 + %s56]]
        %s776 = sld [smem:[#allocation5 + %s56]]
        %p777 = scmp.eq.s32.totalorder %s776, 1
        // Predicated region
        $region109: #{forward.5} parent=67 // pred_check
          %p778 = pneg %p777
        $region110: #{forward.5} parent=67 // pred_check_branch
          %780 = sbr.rel (%p778) target = $region112
        $region111: #{forward.5} parent=67 // pred_region
          %781 = vst [vmem:[%s751] sm:$0xff] 0.0
        $region112: #{forward.5} parent=67 // pred_fallthru
          _
        %v782 = vld [vmem:[%s757] sm:$0xf]
        %v783 = vld [vmem:[%s757 + $0x4] sm:$0xf]
        %v784 = vld [vmem:[%s767] sm:$0xff]
        %s785 = smul.u32 %s56, 32
        %s786 = smul.addr %s785, 4
        %s787 = scalar_lea.vmem [#allocation10], %s786
        %v788 = vld [vmem:[%s787] sm:$0xff]
        %v789 = vld [vmem:[%s787 + $0x8] sm:$0xff]
        %v790 = vld [vmem:[%s787 + $0x10] sm:$0xff]
        %v791 = vld [vmem:[%s787 + $0x18] sm:$0xff]
        %v792 = vld [vmem:[%s787 + $0x20] sm:$0xff]
        %v793 = vld [vmem:[%s787 + $0x28] sm:$0xff]
        %v794 = vld [vmem:[%s787 + $0x30] sm:$0xff]
        %v795 = vld [vmem:[%s787 + $0x38] sm:$0xff]
        %v796 = vld [vmem:[%s787 + $0x40] sm:$0xff]
        %v797 = vld [vmem:[%s787 + $0x48] sm:$0xff]
        %v798 = vld [vmem:[%s787 + $0x50] sm:$0xff]
        %v799 = vld [vmem:[%s787 + $0x58] sm:$0xff]
        %v800 = vld [vmem:[%s787 + $0x60] sm:$0xff]
        %v801 = vld [vmem:[%s787 + $0x68] sm:$0xff]
        %v802 = vld [vmem:[%s787 + $0x70] sm:$0xff]
        %v803 = vld [vmem:[%s787 + $0x78] sm:$0xff]
        %v806 = vunpack.c.l.b16 %v782
        %v807 = vunpack.c.l.b16 %v783
        %v808 = vpack.c.b16 %v807, %v806
        %v826 = vunpack.c.l.b16 %v788
        %v827 = vunpack.c.h.b16 %v788
        %v828 = vunpack.c.l.b16 %v789
        %v829 = vunpack.c.h.b16 %v789
        %v830 = vunpack.c.l.b16 %v790
        %v831 = vunpack.c.h.b16 %v790
        %v832 = vunpack.c.l.b16 %v791
        %v833 = vunpack.c.h.b16 %v791
        %v834 = vunpack.c.l.b16 %v792
        %v835 = vunpack.c.h.b16 %v792
        %v836 = vunpack.c.l.b16 %v793
        %v837 = vunpack.c.h.b16 %v793
        %v838 = vunpack.c.l.b16 %v794
        %v839 = vunpack.c.h.b16 %v794
        %v840 = vunpack.c.l.b16 %v795
        %v841 = vunpack.c.h.b16 %v795
        %v842 = vunpack.c.l.b16 %v796
        %v843 = vunpack.c.h.b16 %v796
        %v844 = vunpack.c.l.b16 %v797
        %v845 = vunpack.c.h.b16 %v797
        %v846 = vunpack.c.l.b16 %v798
        %v847 = vunpack.c.h.b16 %v798
        %v848 = vunpack.c.l.b16 %v799
        %v849 = vunpack.c.h.b16 %v799
        %v850 = vunpack.c.l.b16 %v800
        %v851 = vunpack.c.h.b16 %v800
        %v852 = vunpack.c.l.b16 %v801
        %v853 = vunpack.c.h.b16 %v801
        %v854 = vunpack.c.l.b16 %v802
        %v855 = vunpack.c.h.b16 %v802
        %v856 = vunpack.c.l.b16 %v803
        %v857 = vunpack.c.h.b16 %v803
        %v858 = vpack.c.b16 %v828, %v826
        %v859 = vpack.c.b16 %v829, %v827
        %v860 = vpack.c.b16 %v832, %v830
        %v861 = vpack.c.b16 %v833, %v831
        %v862 = vpack.c.b16 %v836, %v834
        %v863 = vpack.c.b16 %v837, %v835
        %v864 = vpack.c.b16 %v840, %v838
        %v865 = vpack.c.b16 %v841, %v839
        %v866 = vpack.c.b16 %v844, %v842
        %v867 = vpack.c.b16 %v845, %v843
        %v868 = vpack.c.b16 %v848, %v846
        %v869 = vpack.c.b16 %v849, %v847
        %v870 = vpack.c.b16 %v852, %v850
        %v871 = vpack.c.b16 %v853, %v851
        %v872 = vpack.c.b16 %v856, %v854
        %v873 = vpack.c.b16 %v857, %v855
        %890 = vmatprep.subr.bf16.mxu0 %v859
        %891 = vmatpush1.bf16.msra.mxu0 %v858
        %892 = vmatprep.subr.bf16.mxu0 %v861
        %893 = vmatpush1.bf16.msra.mxu0 %v860
        %894 = vmatprep.subr.bf16.mxu0 %v863
        %895 = vmatpush1.bf16.msra.mxu0 %v862
        %896 = vmatprep.subr.bf16.mxu0 %v865
        %897 = vmatpush1.bf16.msra.mxu0 %v864
        %898 = vmatprep.subr.bf16.mxu0 %v867
        %899 = vmatpush1.bf16.msra.mxu0 %v866
        %900 = vmatprep.subr.bf16.mxu0 %v869
        %901 = vmatpush1.bf16.msra.mxu0 %v868
        %902 = vmatprep.subr.bf16.mxu0 %v871
        %903 = vmatpush1.bf16.msra.mxu0 %v870
        %904 = vmatprep.subr.bf16.mxu0 %v873
        %905 = vmatpush1.bf16.msra.mxu0 %v872
        %906 = vmatprep.subr.bf16.mxu0 0
        %907 = vmatpush1.bf16.msra.mxu0 0
        %908 = vmatprep.subr.bf16.mxu0 0
        %909 = vmatpush1.bf16.msra.mxu0 0
        %910 = vmatprep.subr.bf16.mxu0 0
        %911 = vmatpush1.bf16.msra.mxu0 0
        %912 = vmatprep.subr.bf16.mxu0 0
        %913 = vmatpush1.bf16.msra.mxu0 0
        %914 = vmatprep.subr.bf16.mxu0 0
        %915 = vmatpush1.bf16.msra.mxu0 0
        %916 = vmatprep.subr.bf16.mxu0 0
        %917 = vmatpush1.bf16.msra.mxu0 0
        %918 = vmatprep.subr.bf16.mxu0 0
        %919 = vmatpush1.bf16.msra.mxu0 0
        %920 = vmatprep.subr.bf16.mxu0 0
        %921 = vmatpush1.bf16.msra.mxu0 0
        %922 = vmatprep.mubr.bf16.mxu0 0
        %923 = vmatmul.mubr.bf16.gmra.mrb[0].mxu0 %v808
        %v924 = vpop.f32.mrb[0].mxu0
        %v925 = vadd.f32 0.0, %v924
        %v926 = vpop.f32.mrb[0].mxu0
        %v927 = vadd.f32 0.0, %v926
        %v928 = vpop.f32.mrb[0].mxu0
        %v929 = vadd.f32 0.0, %v928
        %v930 = vpop.f32.mrb[0].mxu0
        %v931 = vadd.f32 0.0, %v930
        %932 = vdwg.mxu0
        %v933 = vpack.c.bf16 %v784, %v784
        %s934 = smul.u32 %s56, 16
        %s935 = smul.addr %s934, 4
        %s936 = scalar_lea.vmem [#allocation12], %s935
        %v937 = vld [vmem:[%s936] sm:$0xf]
        %v938 = vld [vmem:[%s936 + $0x4] sm:$0xf]
        %v939 = vld [vmem:[%s936 + $0x8] sm:$0xf]
        %v940 = vld [vmem:[%s936 + $0xc] sm:$0xf]
        %v941 = vld [vmem:[%s936 + $0x10] sm:$0xf]
        %v942 = vld [vmem:[%s936 + $0x14] sm:$0xf]
        %v943 = vld [vmem:[%s936 + $0x18] sm:$0xf]
        %v944 = vld [vmem:[%s936 + $0x1c] sm:$0xf]
        %v945 = vld [vmem:[%s936 + $0x20] sm:$0xf]
        %v946 = vld [vmem:[%s936 + $0x24] sm:$0xf]
        %v947 = vld [vmem:[%s936 + $0x28] sm:$0xf]
        %v948 = vld [vmem:[%s936 + $0x2c] sm:$0xf]
        %v949 = vld [vmem:[%s936 + $0x30] sm:$0xf]
        %v950 = vld [vmem:[%s936 + $0x34] sm:$0xf]
        %v951 = vld [vmem:[%s936 + $0x38] sm:$0xf]
        %v952 = vld [vmem:[%s936 + $0x3c] sm:$0xf]
        %v969 = vunpack.c.l.b16 %v937
        %v970 = vunpack.c.l.b16 %v938
        %v971 = vunpack.c.l.b16 %v939
        %v972 = vunpack.c.l.b16 %v940
        %v973 = vunpack.c.l.b16 %v941
        %v974 = vunpack.c.l.b16 %v942
        %v975 = vunpack.c.l.b16 %v943
        %v976 = vunpack.c.l.b16 %v944
        %v977 = vunpack.c.l.b16 %v945
        %v978 = vunpack.c.l.b16 %v946
        %v979 = vunpack.c.l.b16 %v947
        %v980 = vunpack.c.l.b16 %v948
        %v981 = vunpack.c.l.b16 %v949
        %v982 = vunpack.c.l.b16 %v950
        %v983 = vunpack.c.l.b16 %v951
        %v984 = vunpack.c.l.b16 %v952
        %v985 = vpack.c.b16 %v970, %v969
        %v986 = vpack.c.b16 %v972, %v971
        %v987 = vpack.c.b16 %v974, %v973
        %v988 = vpack.c.b16 %v976, %v975
        %v989 = vpack.c.b16 %v978, %v977
        %v990 = vpack.c.b16 %v980, %v979
        %v991 = vpack.c.b16 %v982, %v981
        %v992 = vpack.c.b16 %v984, %v983
        %1001 = vmatprep.subr.bf16.mxu0 0
        %1002 = vmatpush1.bf16.msra.mxu0 %v985
        %1003 = vmatprep.subr.bf16.mxu0 0
        %1004 = vmatpush1.bf16.msra.mxu0 %v986
        %1005 = vmatprep.subr.bf16.mxu0 0
        %1006 = vmatpush1.bf16.msra.mxu0 %v987
        %1007 = vmatprep.subr.bf16.mxu0 0
        %1008 = vmatpush1.bf16.msra.mxu0 %v988
        %1009 = vmatprep.subr.bf16.mxu0 0
        %1010 = vmatpush1.bf16.msra.mxu0 %v989
        %1011 = vmatprep.subr.bf16.mxu0 0
        %1012 = vmatpush1.bf16.msra.mxu0 %v990
        %1013 = vmatprep.subr.bf16.mxu0 0
        %1014 = vmatpush1.bf16.msra.mxu0 %v991
        %1015 = vmatprep.subr.bf16.mxu0 0
        %1016 = vmatpush1.bf16.msra.mxu0 %v992
        %1017 = vmatprep.subr.bf16.mxu0 0
        %1018 = vmatpush1.bf16.msra.mxu0 0
        %1019 = vmatprep.subr.bf16.mxu0 0
        %1020 = vmatpush1.bf16.msra.mxu0 0
        %1021 = vmatprep.subr.bf16.mxu0 0
        %1022 = vmatpush1.bf16.msra.mxu0 0
        %1023 = vmatprep.subr.bf16.mxu0 0
        %1024 = vmatpush1.bf16.msra.mxu0 0
        %1025 = vmatprep.subr.bf16.mxu0 0
        %1026 = vmatpush1.bf16.msra.mxu0 0
        %1027 = vmatprep.subr.bf16.mxu0 0
        %1028 = vmatpush1.bf16.msra.mxu0 0
        %1029 = vmatprep.subr.bf16.mxu0 0
        %1030 = vmatpush1.bf16.msra.mxu0 0
        %1031 = vmatprep.subr.bf16.mxu0 0
        %1032 = vmatpush1.bf16.msra.mxu0 0
        %1033 = vmatprep.mubr.bf16.mxu0 0
        %1034 = vmatmul.mubr.bf16.gmra.mrb[0].mxu0 %v933
        %v1035 = vpop.f32.mrb[0].mxu0
        %v1036 = vadd.f32 0.0, %v1035
        %v1037 = vpop.f32.mrb[0].mxu0
        %v1038 = vpop.f32.mrb[0].mxu0
        %v1039 = vpop.f32.mrb[0].mxu0
        %1040 = vdwg.mxu0
        %v1041 = vld [vmem:[#allocation18] sm:$0xff]
        %v1042 = vmul.f32 %v1036, %v1041
        %v1043 = vrot.slane %v1042, 4
        %v1044 = vadd.f32 %v1042, %v1043
        %v1045 = vrot.slane %v1044, 2
        %v1046 = vadd.f32 %v1044, %v1045
        %v1047 = vrot.slane %v1046, 1
        %v1048 = vadd.f32 %v1046, %v1047
        %v1049 = vadd.f32 %v927, %v1048
        %v1050 = vadd.f32 %v931, %v1048
        %vm1051 = vcmp.gt.f32.partialorder %v1049, 0.0
        %vm1052 = vcmp.gt.f32.partialorder %v1050, 0.0
        %v1053 = vmul.f32 %v1049, 0.2
        %v1054 = vmul.f32 %v1050, 0.2
        %v1055 = vsel %vm1051, %v1049, %v1053
        %v1056 = vsel %vm1052, %v1050, %v1054
        %v1057 = vld [vmem:[%s618] sm:$0xff]
        %v1058 = vld [vmem:[%s618 + $0x8] sm:$0xff]
        %v1059 = vsub.f32 %v1057, 1.0
        %v1060 = vsub.f32 %v1058, 1.0
        %v1061 = vmul.f32 %v1059, 1e+30
        %v1062 = vmul.f32 %v1060, 1e+30
        %v1063 = vadd.f32 %v1055, %v1061
        %v1064 = vadd.f32 %v1056, %v1062
        %v1065 = vmax.f32 %v1063, %v1064
        %v1066 = vrot.slane %v1065, 4
        %v1067 = vmax.f32 %v1065, %v1066
        %v1068 = vrot.slane %v1067, 2
        %v1069 = vmax.f32 %v1067, %v1068
        %v1070 = vrot.slane %v1069, 1
        %v1071 = vmax.f32 %v1069, %v1070
        %v1072 = vsub.f32 %v1063, %v1071
        %v1073 = vsub.f32 %v1064, %v1071
        %v1074 = vmul.f32 %v1072, 1.442695
        %v1075 = vpow.pop %v1074
        %v1076 = vmul.f32 %v1073, 1.442695
        %v1077 = vpow.pop %v1076
        %v1078 = vmul.f32 %v1075, %v1057
        %v1079 = vmul.f32 %v1077, %v1058
        %v1080 = vadd.f32 %v1078, %v1079
        %v1081 = vrot.slane %v1080, 4
        %v1082 = vadd.f32 %v1080, %v1081
        %v1083 = vrot.slane %v1082, 2
        %v1084 = vadd.f32 %v1082, %v1083
        %v1085 = vrot.slane %v1084, 1
        %v1086 = vadd.f32 %v1084, %v1085
        %vm1087 = vcmp.gt.f32.partialorder %v1086, 0.0
        %v1088 = vsel %vm1087, %v1086, 1.0
        %v1089 = vrcp.pop %v1088
        %v1090 = vmul.f32 %v1078, %v1089
        %v1091 = vmul.f32 %v1079, %v1089
        %v1092 = vpack.c.bf16 %v1091, %v1090
        %v1093 = vpack.c.bf16 %v929, %v925
        %1094 = vxpose.xlu0.c.b16.start [1/8] %v1092, 128
        %1095 = vxpose.xlu0.c.b16.cont [2/8] 0, 128
        %1096 = vxpose.xlu0.c.b16.cont [3/8] 0, 128
        %1097 = vxpose.xlu0.c.b16.cont [4/8] 0, 128
        %1098 = vxpose.xlu0.c.b16.cont [5/8] 0, 128
        %1099 = vxpose.xlu0.c.b16.cont [6/8] 0, 128
        %1100 = vxpose.xlu0.c.b16.cont [7/8] 0, 128
        %1101 = vxpose.xlu0.c.b16.end [8/8] 0, 128
        %v1102 = vpop.trf.xlu0
        %v1103 = vpop.trf.xlu0
        %v1104 = vpop.trf.xlu0
        %v1105 = vpop.trf.xlu0
        %v1106 = vpop.trf.xlu0
        %v1107 = vpop.trf.xlu0
        %v1108 = vpop.trf.xlu0
        %v1109 = vpop.trf.xlu0
        %vm1110 = vcmask 130048
        %v1112 = vsel %vm1110, %v1102, 0
        %v1115 = vsel %vm1110, %v1103, 0
        %v1118 = vsel %vm1110, %v1104, 0
        %v1121 = vsel %vm1110, %v1105, 0
        %1123 = vmatprep.subr.bf16.mxu0 0
        %1124 = vmatpush1.bf16.msra.mxu0 %v1093
        %1125 = vmatprep.subr.bf16.mxu0 0
        %1126 = vmatpush1.bf16.msra.mxu0 0
        %1127 = vmatprep.subr.bf16.mxu0 0
        %1128 = vmatpush1.bf16.msra.mxu0 0
        %1129 = vmatprep.subr.bf16.mxu0 0
        %1130 = vmatpush1.bf16.msra.mxu0 0
        %1131 = vmatprep.subr.bf16.mxu0 0
        %1132 = vmatpush1.bf16.msra.mxu0 0
        %1133 = vmatprep.subr.bf16.mxu0 0
        %1134 = vmatpush1.bf16.msra.mxu0 0
        %1135 = vmatprep.subr.bf16.mxu0 0
        %1136 = vmatpush1.bf16.msra.mxu0 0
        %1137 = vmatprep.subr.bf16.mxu0 0
        %1138 = vmatpush1.bf16.msra.mxu0 0
        %1139 = vmatprep.subr.bf16.mxu0 0
        %1140 = vmatpush1.bf16.msra.mxu0 0
        %1141 = vmatprep.subr.bf16.mxu0 0
        %1142 = vmatpush1.bf16.msra.mxu0 0
        %1143 = vmatprep.subr.bf16.mxu0 0
        %1144 = vmatpush1.bf16.msra.mxu0 0
        %1145 = vmatprep.subr.bf16.mxu0 0
        %1146 = vmatpush1.bf16.msra.mxu0 0
        %1147 = vmatprep.subr.bf16.mxu0 0
        %1148 = vmatpush1.bf16.msra.mxu0 0
        %1149 = vmatprep.subr.bf16.mxu0 0
        %1150 = vmatpush1.bf16.msra.mxu0 0
        %1151 = vmatprep.subr.bf16.mxu0 0
        %1152 = vmatpush1.bf16.msra.mxu0 0
        %1153 = vmatprep.subr.bf16.mxu0 0
        %1154 = vmatpush1.bf16.msra.mxu0 0
        %1155 = vmatprep.mubr.bf16.mxu0 0
        %1156 = vmatmul.mubr.bf16.gmra.mrb[0].mxu0 %v1112
        %v1157 = vpop.f32.mrb[0].mxu0
        %v1158 = vadd.f32 0.0, %v1157
        %v1159 = vpop.f32.mrb[0].mxu0
        %v1160 = vpop.f32.mrb[0].mxu0
        %v1161 = vadd.f32 0.0, %v1160
        %v1162 = vpop.f32.mrb[0].mxu0
        %1163 = vmatprep.mubr.bf16.mxu0 0
        %1164 = vmatmul.mubr.bf16.gmra.mrb[0].mxu0 %v1115
        %v1165 = vpop.f32.mrb[0].mxu0
        %v1166 = vadd.f32 0.0, %v1165
        %v1167 = vpop.f32.mrb[0].mxu0
        %v1168 = vpop.f32.mrb[0].mxu0
        %v1169 = vadd.f32 0.0, %v1168
        %v1170 = vpop.f32.mrb[0].mxu0
        %1171 = vmatprep.mubr.bf16.mxu0 0
        %1172 = vmatmul.mubr.bf16.gmra.mrb[0].mxu0 %v1118
        %v1173 = vpop.f32.mrb[0].mxu0
        %v1174 = vadd.f32 0.0, %v1173
        %v1175 = vpop.f32.mrb[0].mxu0
        %v1176 = vpop.f32.mrb[0].mxu0
        %v1177 = vadd.f32 0.0, %v1176
        %v1178 = vpop.f32.mrb[0].mxu0
        %1179 = vmatprep.mubr.bf16.mxu0 0
        %1180 = vmatmul.mubr.bf16.gmra.mrb[0].mxu0 %v1121
        %v1181 = vpop.f32.mrb[0].mxu0
        %v1182 = vadd.f32 0.0, %v1181
        %v1183 = vpop.f32.mrb[0].mxu0
        %v1184 = vpop.f32.mrb[0].mxu0
        %v1185 = vadd.f32 0.0, %v1184
        %v1186 = vpop.f32.mrb[0].mxu0
        %1187 = vdwg.mxu0
        %v1188 = vld [vmem:[#allocation19] sm:$0xff]
        %v1189 = vld [vmem:[#allocation19 + $0x8] sm:$0xff]
        %v1190 = vld [vmem:[#allocation19 + $0x10] sm:$0xff]
        %v1191 = vld [vmem:[#allocation19 + $0x18] sm:$0xff]
        %v1192 = vld [vmem:[#allocation19 + $0x20] sm:$0xff]
        %v1193 = vld [vmem:[#allocation19 + $0x28] sm:$0xff]
        %v1194 = vld [vmem:[#allocation19 + $0x30] sm:$0xff]
        %v1195 = vld [vmem:[#allocation19 + $0x38] sm:$0xff]
        %v1196 = vmul.f32 %v1158, %v1188
        %v1197 = vmul.f32 %v1161, %v1189
        %v1198 = vmul.f32 %v1166, %v1190
        %v1199 = vmul.f32 %v1169, %v1191
        %v1200 = vmul.f32 %v1174, %v1192
        %v1201 = vmul.f32 %v1177, %v1193
        %v1202 = vmul.f32 %v1182, %v1194
        %v1203 = vmul.f32 %v1185, %v1195
        %v1204 = vadd.f32 %v1196, %v1197
        %v1205 = vadd.f32 %v1204, %v1198
        %v1206 = vadd.f32 %v1205, %v1199
        %v1207 = vadd.f32 %v1206, %v1200
        %v1208 = vadd.f32 %v1207, %v1201
        %v1209 = vadd.f32 %v1208, %v1202
        %v1210 = vadd.f32 %v1209, %v1203
        %v1211 = vld [vmem:[%s751] sm:$0xff]
        %v1212 = vadd.f32 %v1211, %v1210
        %1213 = vst [vmem:[%s751] sm:$0xff] %v1212
        %s1214 = sld [smem:[#allocation6 + %s56]]
        %p1215 = scmp.eq.s32.totalorder %s1214, 1
        // Predicated region
        $region113: #{forward.5} parent=67 // pred_check
          %p1216 = pneg %p1215
        $region114: #{forward.5} parent=67 // pred_check_branch
          %1218 = sbr.rel (%p1216) target = $region116
        $region115: #{forward.5} parent=67 // pred_region
          %v1219 = vld [vmem:[%s751] sm:$0xff]
          %v1220 = vld [vmem:[%s634] sm:$0x1]
          %v1222 = vlaneseq
          %v1223 = vshrl.u32 %v1222, 7
          %v1224 = vsub.s32 0, %v1223
          %v1225 = vrot.slane %v1220, %v1224
          %v1227 = vadd.f32 %v1219, %v1225
          %v1228 = vadd.f32 %v1227, %v784
          %1229 = vadd.xlane.f32.xlu0 %v1228
          %v1230 = vpop.xlane.xlu0 %1229
          %v1231 = vrcp.pop 128.0
          %v1232 = vmul.f32 %v1230, %v1231
          %v1233 = vsub.f32 %v1228, %v1232
          %v1234 = vmul.f32 %v1233, %v1233
          %1235 = vadd.xlane.f32.xlu0 %v1234
          %v1236 = vpop.xlane.xlu0 %1235
          %v1237 = vmul.f32 %v1236, %v1231
          %v1238 = vadd.f32 %v1237, 1e-05
          %v1239 = vrsqrt.pop %v1238
          %v1240 = vmul.f32 %v1233, %v1239
          %v1241 = vld [vmem:[%s642] sm:$0x1]
          %v1243 = vlaneseq
          %v1244 = vshrl.u32 %v1243, 7
          %v1245 = vsub.s32 0, %v1244
          %v1246 = vrot.slane %v1241, %v1245
          %v1248 = vmul.f32 %v1240, %v1246
          %v1249 = vld [vmem:[%s650] sm:$0x1]
          %v1251 = vlaneseq
          %v1252 = vshrl.u32 %v1251, 7
          %v1253 = vsub.s32 0, %v1252
          %v1254 = vrot.slane %v1249, %v1253
          %v1256 = vadd.f32 %v1248, %v1254
          %v1257 = vmul.f32 %v1256, 0.5
          %v1258 = vmul.f32 %v1256, 0.044715
          %v1259 = vmul.f32 %v1258, %v1256
          %v1260 = vmul.f32 %v1259, %v1256
          %v1261 = vadd.f32 %v1256, %v1260
          %v1262 = vmul.f32 %v1261, 0.7978846
          %v1263 = vtanh.pop %v1262
          %v1264 = vadd.f32 %v1263, 1.0
          %v1265 = vmul.f32 %v1257, %v1264
          %v1266 = vpack.c.bf16 %v1265, %v1265
          %v1267 = vld [vmem:[%s667] sm:$0xf]
          %v1268 = vld [vmem:[%s667 + $0x4] sm:$0xf]
          %v1269 = vld [vmem:[%s667 + $0x8] sm:$0xf]
          %v1270 = vld [vmem:[%s667 + $0xc] sm:$0xf]
          %v1271 = vld [vmem:[%s667 + $0x10] sm:$0xf]
          %v1272 = vld [vmem:[%s667 + $0x14] sm:$0xf]
          %v1273 = vld [vmem:[%s667 + $0x18] sm:$0xf]
          %v1274 = vld [vmem:[%s667 + $0x1c] sm:$0xf]
          %v1275 = vld [vmem:[%s667 + $0x20] sm:$0xf]
          %v1276 = vld [vmem:[%s667 + $0x24] sm:$0xf]
          %v1277 = vld [vmem:[%s667 + $0x28] sm:$0xf]
          %v1278 = vld [vmem:[%s667 + $0x2c] sm:$0xf]
          %v1279 = vld [vmem:[%s667 + $0x30] sm:$0xf]
          %v1280 = vld [vmem:[%s667 + $0x34] sm:$0xf]
          %v1281 = vld [vmem:[%s667 + $0x38] sm:$0xf]
          %v1282 = vld [vmem:[%s667 + $0x3c] sm:$0xf]
          %v1283 = vld [vmem:[%s675] sm:$0x1]
          %v1285 = vlaneseq
          %v1286 = vshrl.u32 %v1285, 7
          %v1287 = vsub.s32 0, %v1286
          %v1288 = vrot.slane %v1283, %v1287
          %v1306 = vunpack.c.l.b16 %v1267
          %v1307 = vunpack.c.l.b16 %v1268
          %v1308 = vunpack.c.l.b16 %v1269
          %v1309 = vunpack.c.l.b16 %v1270
          %v1310 = vunpack.c.l.b16 %v1271
          %v1311 = vunpack.c.l.b16 %v1272
          %v1312 = vunpack.c.l.b16 %v1273
          %v1313 = vunpack.c.l.b16 %v1274
          %v1314 = vunpack.c.l.b16 %v1275
          %v1315 = vunpack.c.l.b16 %v1276
          %v1316 = vunpack.c.l.b16 %v1277
          %v1317 = vunpack.c.l.b16 %v1278
          %v1318 = vunpack.c.l.b16 %v1279
          %v1319 = vunpack.c.l.b16 %v1280
          %v1320 = vunpack.c.l.b16 %v1281
          %v1321 = vunpack.c.l.b16 %v1282
          %v1322 = vpack.c.b16 %v1307, %v1306
          %v1323 = vpack.c.b16 %v1309, %v1308
          %v1324 = vpack.c.b16 %v1311, %v1310
          %v1325 = vpack.c.b16 %v1313, %v1312
          %v1326 = vpack.c.b16 %v1315, %v1314
          %v1327 = vpack.c.b16 %v1317, %v1316
          %v1328 = vpack.c.b16 %v1319, %v1318
          %v1329 = vpack.c.b16 %v1321, %v1320
          %1338 = vmatprep.subr.bf16.mxu0 0
          %1339 = vmatpush1.bf16.msra.mxu0 %v1322
          %1340 = vmatprep.subr.bf16.mxu0 0
          %1341 = vmatpush1.bf16.msra.mxu0 %v1323
          %1342 = vmatprep.subr.bf16.mxu0 0
          %1343 = vmatpush1.bf16.msra.mxu0 %v1324
          %1344 = vmatprep.subr.bf16.mxu0 0
          %1345 = vmatpush1.bf16.msra.mxu0 %v1325
          %1346 = vmatprep.subr.bf16.mxu0 0
          %1347 = vmatpush1.bf16.msra.mxu0 %v1326
          %1348 = vmatprep.subr.bf16.mxu0 0
          %1349 = vmatpush1.bf16.msra.mxu0 %v1327
          %1350 = vmatprep.subr.bf16.mxu0 0
          %1351 = vmatpush1.bf16.msra.mxu0 %v1328
          %1352 = vmatprep.subr.bf16.mxu0 0
          %1353 = vmatpush1.bf16.msra.mxu0 %v1329
          %1354 = vmatprep.subr.bf16.mxu0 0
          %1355 = vmatpush1.bf16.msra.mxu0 0
          %1356 = vmatprep.subr.bf16.mxu0 0
          %1357 = vmatpush1.bf16.msra.mxu0 0
          %1358 = vmatprep.subr.bf16.mxu0 0
          %1359 = vmatpush1.bf16.msra.mxu0 0
          %1360 = vmatprep.subr.bf16.mxu0 0
          %1361 = vmatpush1.bf16.msra.mxu0 0
          %1362 = vmatprep.subr.bf16.mxu0 0
          %1363 = vmatpush1.bf16.msra.mxu0 0
          %1364 = vmatprep.subr.bf16.mxu0 0
          %1365 = vmatpush1.bf16.msra.mxu0 0
          %1366 = vmatprep.subr.bf16.mxu0 0
          %1367 = vmatpush1.bf16.msra.mxu0 0
          %1368 = vmatprep.subr.bf16.mxu0 0
          %1369 = vmatpush1.bf16.msra.mxu0 0
          %1370 = vmatprep.mubr.bf16.mxu0 0
          %1371 = vmatmul.mubr.bf16.gmra.mrb[0].mxu0 %v1266
          %v1372 = vpop.f32.mrb[0].mxu0
          %v1373 = vadd.f32 %v1288, %v1372
          %v1374 = vpop.f32.mrb[0].mxu0
          %v1375 = vpop.f32.mrb[0].mxu0
          %v1376 = vpop.f32.mrb[0].mxu0
          %1377 = vdwg.mxu0
          %1378 = vst [vmem:[%s751] sm:$0xff] %v1373
        $region116: #{forward.5} parent=67 // pred_fallthru
          _
        %s1379 = sand.u32 %s385, 1
        %s1380 = scalar_lea.sflag [#allocation9], %s1379
        %s1381 = sand.u32 %s385, 1
        %s1382 = smul.addr %s1381, 8
        %s1383 = scalar_lea.vmem [#allocation23], %s1382
        // Predicated region
        $region117: #{forward.5} parent=67 // pred_check
          %p1384 = pneg %p395
        $region118: #{forward.5} parent=67 // pred_check_branch
          %1386 = sbr.rel (%p1384) target = $region120
        $region119: #{forward.5} parent=67 // pred_region
          %s1387 = sld [smem:[#allocation4 + %s56]]
          %s1389 = ssub.s32 128, 128
          %1390 = vsyncadd %s1380, %s1389
          %s1391 = smul.addr %s1387, 2
          %s1392 = sadd.s32 %s55, %s1391
          %s1393 = smul.addr %s1392, 128
          %s1394 = scalar_lea.hbm %s16, %s1393
          %s1396 = sshll.u32 %s1383, 4
          %s1397 = int_to_ptr.vmem [resolvable:$true] %s1396
          %1399 = dma.vmem_to_hbm [thread:$0]  %s1397, 128, %s1394, %s1380
        $region120: #{forward.5} parent=67 // pred_fallthru
          _
      $region68: #{forward.5} parent=5 // pred_fallthru
        _
      %p1400 = scmp.le.s32.totalorder 2, %s46
      // Predicated region
      $region121: #{forward.5} parent=5 // pred_check
        %p1401 = pneg %p1400
      $region122: #{forward.5} parent=5 // pred_check_branch
        %1403 = sbr.rel (%p1401) target = $region124
      $region123: #{forward.5} parent=5 // pred_region
        %s1404 = ssub.s32 %s46, 2
        // Predicated region
        $region125: #{forward.5} parent=123 // pred_check
          %p1405 = pneg %p401
        $region126: #{forward.5} parent=123 // pred_check_branch
          %1407 = sbr.rel (%p1405) target = $region128
        $region127: #{forward.5} parent=123 // pred_region
          %s1408 = sand.u32 %s386, 1
          %s1409 = scalar_lea.sflag [#allocation9], %s1408
          %s1410 = sand.u32 %s386, 1
          %s1411 = smul.addr %s1410, 8
          %s1412 = scalar_lea.vmem [#allocation23], %s1411
          %1413 = dma.done %s1409, 128
        $region128: #{forward.5} parent=123 // pred_fallthru
          _
      $region124: #{forward.5} parent=5 // pred_fallthru
        _
    $region6: #{forward.5} parent=1 // loop_footer
      %s50 = sadd.s32 1, %s46
    $region7: #{forward.5} parent=1 // loop_footer_branch
      %45 = sbr.rel target = $region3
    $region8: #{forward.5} parent=1 // loop_exit
      _
    %1414 = vsyncpa [#allocation8], 1
    %s1415 = scalar_lea.sflag [#allocation8], 1
    %1416 = vsyncpa %s1415, 1
    %1417 = vsyncpa [#allocation11], 1
    %1418 = vsyncpa [#allocation14], 1
    %s1419 = scalar_lea.sflag [#allocation14], 1
    %1420 = vsyncpa %s1419, 1
    %1421 = vsyncpa [#allocation17], 1
    %s1422 = scalar_lea.sflag [#allocation17], 1
    %1423 = vsyncpa %s1422, 1
    %1424 = vsyncpa [#allocation20], 1
    %1425 = vsyncpa [#allocation9], 1
    %s1426 = scalar_lea.sflag [#allocation9], 1
    %1427 = vsyncpa %s1426, 1

</llo_original>
